<compile_context>
chip_gen: v7x
topology: tpu7x:2x2x1
jax: 0.10.0
libtpu: 0.0.40
codegen_flags: <defaults>
</compile_context>

<pallas_src>
import functools
import numpy as np

import jax
import jax.numpy as jnp
from jax.experimental import pallas as pl
from jax.experimental.pallas import tpu as pltpu


def _round_up(x, m):
    return ((x + m - 1) // m) * m


def _resident_gather_kernel(num_pieces, vocab_pad, tok_ref, invz_ref, table_ref, o_ref):
    """Pool subword pieces by gathering rows from the VMEM-resident folded table.

    The gather runs on the (otherwise idle) MXU: counts[i, v] = number of pieces of
    word i with token id v, so counts @ table == sum over valid pieces of
    (emb @ W + b).  The pad_index row of the table is zero, so pad pieces add 0.
    """
    tm = o_ref.shape[0]
    tok = tok_ref[...]                                              # (tm, F) int32
    vocab_ids = jax.lax.broadcasted_iota(jnp.int32, (tm, vocab_pad), 1)
    counts = (tok[:, 0:1] == vocab_ids).astype(jnp.float32)
    for f in range(1, num_pieces):                                  # small unrolled loop
        counts = counts + (tok[:, f:f + 1] == vocab_ids).astype(jnp.float32)
    table = table_ref[...]                                          # resident (V_pad, E_pad)
    precision = jax.lax.Precision.HIGHEST if table.dtype == jnp.float32 else None
    acc = jnp.dot(counts.astype(table.dtype), table,
                  precision=precision, preferred_element_type=jnp.float32)
    # invz = 1/num_valid_pieces (0 for all-pad rows) is precomputed in f32 in XLA.
    o_ref[...] = (acc * invz_ref[...]).astype(o_ref.dtype)


def _stream_pool_kernel(num_pieces, g_ref, invz_ref, o_ref):
    """Large-vocab fallback: sum pre-gathered (bias-folded, pad-row-zeroed) rows."""
    acc = g_ref[0].astype(jnp.float32)
    for f in range(1, num_pieces):
        acc = acc + g_ref[f].astype(jnp.float32)
    o_ref[...] = (acc * invz_ref[...]).astype(o_ref.dtype)


@functools.partial(
    jax.jit,
    static_argnames=("pad_index", "embed_size", "tm", "out_dtype",
                     "force_streaming", "slice_output"))
def pretrained_embedding_forward(words, proj_table, *, pad_index, embed_size,
                                 tm=1024, out_dtype=jnp.float32,
                                 force_streaming=False, slice_output=True):
    B, S, F = words.shape
    V_pad, E_pad = proj_table.shape

    # ---- ragged repacking (torch pad_sequence/split semantics) applied to the
    # cheap int32 token tensor, so kernel rows land directly in compacted slots.
    word_valid = jnp.any(words != pad_index, axis=-1)                        # [B, S]
    perm_s = jnp.argsort(jnp.logical_not(word_valid), axis=1, stable=True)   # words -> front
    words_c = jnp.take_along_axis(words, perm_s[..., None], axis=1)
    sent_valid = jnp.any(word_valid, axis=-1)                                # [B]
    perm_b = jnp.argsort(jnp.logical_not(sent_valid), stable=True)           # sentences -> front
    words_c = jnp.take(words_c, perm_b, axis=0)

    # ---- flatten rows and pad to a multiple of the row tile.
    N = B * S
    tm = _round_up(tm, 8)
    tm_eff = max(8, min(tm, _round_up(N, 8)))
    n_tiles = pl.cdiv(N, tm_eff)
    N_pad = n_tiles * tm_eff
    tok = words_c.reshape(N, F).astype(jnp.int32)
    if N_pad != N:
        tok = jnp.pad(tok, ((0, N_pad - N), (0, 0)), constant_values=pad_index)

    # Precompute 1/piece_count (0 for all-pad words) in f32 -> kernel epilogue is
    # a single multiply (no in-kernel mask / count / reciprocal / where).
    cnt = jnp.sum((tok != pad_index).astype(jnp.float32), axis=-1, keepdims=True)
    invz = jnp.where(cnt > 0.0, 1.0 / jnp.maximum(cnt, 1.0), 0.0)            # (N_pad, 1)

    cparams = pltpu.CompilerParams(
        dimension_semantics=("parallel",),        # megacore / v7x 2-TC sharding
        vmem_limit_bytes=32 * 1024 * 1024,        # blocks sized well below (also v7x-safe)
    )

    # Resident-table gate: table + (tm, V_pad) piece-count working set must stay
    # small (v7x has only 64 MiB physical / 32 MiB scoped VMEM).  Large vocab
    # falls back to the XLA-gather streaming kernel.
    use_resident = (not force_streaming) and (V_pad <= 512)

    if use_resident:
        out = pl.pallas_call(
            functools.partial(_resident_gather_kernel, F, V_pad),
            out_shape=jax.ShapeDtypeStruct((N_pad, E_pad), out_dtype),
            grid_spec=pltpu.PrefetchScalarGridSpec(
                num_scalar_prefetch=0,
                grid=(n_tiles,),
                in_specs=[
                    pl.BlockSpec((tm_eff, F), lambda i: (i, 0)),         # token ids
                    pl.BlockSpec((tm_eff, 1), lambda i: (i, 0)),         # 1/count
                    pl.BlockSpec((V_pad, E_pad), lambda i: (0, 0)),      # resident table
                ],
                out_specs=pl.BlockSpec((tm_eff, E_pad), lambda i: (i, 0)),
            ),
            compiler_params=cparams,
        )(tok, invz, proj_table)
    else:
        # Fallback: gather pre-projected rows in XLA (one HBM round trip for the
        # (F, N, E_pad) stream), kernel only sums + scales.
        g = jnp.take(proj_table, tok.T, axis=0)                          # (F, N_pad, E_pad)
        out = pl.pallas_call(
            functools.partial(_stream_pool_kernel, F),
            out_shape=jax.ShapeDtypeStruct((N_pad, E_pad), out_dtype),
            grid_spec=pltpu.PrefetchScalarGridSpec(
                num_scalar_prefetch=0,
                grid=(n_tiles,),
                in_specs=[
                    pl.BlockSpec((F, tm_eff, E_pad), lambda i: (0, i, 0)),
                    pl.BlockSpec((tm_eff, 1), lambda i: (i, 0)),
                ],
                out_specs=pl.BlockSpec((tm_eff, E_pad), lambda i: (i, 0)),
            ),
            compiler_params=cparams,
        )(g, invz)

    # Avoid extra output passes where possible: when N divides evenly the reshape
    # is metadata-only; consumers that tolerate E_pad lanes can pass
    # slice_output=False to skip the final embed-dim slice entirely.
    if N_pad != N:
        out = out[:N]
    out = out.reshape(B, S, E_pad)
    if slice_output:
        out = out[..., :embed_size]
    return out


class PretrainedEmbeddingPallas:
    """Stand-in for PretrainedEmbedding: table-lookup 'transformer' + FFN head."""

    def __init__(self, vocab_size, hidden_size, embed_size, pad_index, key):
        assert 0 <= pad_index < vocab_size
        k_emb, k_w, k_b = jax.random.split(key, 3)
        # deterministic stand-in for the pretrained transformer's hidden states
        self.emb_table = 0.1 * jax.random.normal(k_emb, (vocab_size, hidden_size), jnp.float32)
        # FFN parameters (Linear: hidden_size -> embed_size)
        self.w = 0.1 * jax.random.normal(k_w, (hidden_size, embed_size), jnp.float32)
        self.b = 0.1 * jax.random.normal(k_b, (embed_size,), jnp.float32)
        self.pad_index = pad_index
        self.embed_size = embed_size

        # Fold the FFN + bias into the table once (mean and Linear commute); this is
        # the right call whenever E_pad <= H_pad (true here).  Pad embed axis to a
        # lane-dense multiple of 128 and vocab to a multiple of 128 for the MXU.
        e_pad = _round_up(embed_size, 128)
        v_pad = _round_up(vocab_size, 128)
        proj = jnp.dot(self.emb_table, self.w,
                       precision=jax.lax.Precision.HIGHEST,
                       preferred_element_type=jnp.float32) + self.b[None, :]
        # Reserve/zero the pad_index row: gathered pad pieces then contribute exactly
        # zero (no per-piece masking in the kernel).  Keep this invariant if the
        # table is ever updated.
        proj = proj.at[pad_index].set(0.0)
        self.proj_table = jnp.pad(proj, ((0, v_pad - vocab_size), (0, e_pad - embed_size)))

    def __call__(self, words, stream_dtype=jnp.bfloat16, out_dtype=jnp.float32,
                 tm=1024, force_streaming=False, slice_output=True):
        # bf16 table stream halves VMEM/HBM traffic; pooling accumulates in f32.
        return pretrained_embedding_forward(
            words, self.proj_table.astype(stream_dtype),
            pad_index=self.pad_index, embed_size=self.embed_size, tm=tm,
            out_dtype=out_dtype, force_streaming=force_streaming,
            slice_output=slice_output)


def reference_forward(words, emb_table, w, b, pad_index):
    """Pure numpy re-implementation of the torch forward semantics (f32)."""
    words = np.asarray(words)
    emb = np.asarray(emb_table)
    w = np.asarray(w)
    bb = np.asarray(b).reshape(-1)
    B, S, F = words.shape
    E = w.shape[1]
    out = np.zeros((B, S, E), np.float32)
    sentences = []
    for bi in range(B):
        row = []
        for si in range(S):
            toks = words[bi, si]
            valid = toks != pad_index
            if valid.sum() == 0:
                continue
            pooled = emb[toks[valid]].mean(0)
            row.append(pooled @ w + bb)
        if len(row) > 0:
            sentences.append(row)
    for i, row in enumerate(sentences):
        for j, v in enumerate(row):
            out[i, j] = v
    return out


if __name__ == "__main__":
    B, S, F, H, E, V, PAD = 4, 128, 8, 64, 48, 96, 0

    key = jax.random.PRNGKey(0)
    k_tok, k_plen, k_keep, k_params = jax.random.split(key, 4)

    # Deterministic ragged token tensor: variable pieces per word, randomly dropped
    # (all-pad) interior words, and one completely empty sentence.
    words = jax.random.randint(k_tok, (B, S, F), 1, V, dtype=jnp.int32)
    piece_len = jax.random.randint(k_plen, (B, S), 1, F + 1)
    piece_mask = jnp.arange(F)[None, None, :] < piece_len[..., None]
    word_keep = jax.random.bernoulli(k_keep, 0.8, (B, S))
    sent_len = jnp.array([S, S // 2, 0, S - 5])          # sentence 2 is empty
    word_keep = word_keep & (jnp.arange(S)[None, :] < sent_len[:, None])
    words = jnp.where(piece_mask & word_keep[..., None], words, PAD)

    module = PretrainedEmbeddingPallas(V, H, E, PAD, k_params)

    # Primary path: VMEM-resident table, bf16 table stream, bf16 output.
    embed_resident = jax.block_until_ready(module(words, out_dtype=jnp.bfloat16))
    # Large-vocab fallback path: XLA gather + streaming pool kernel (f32, 4 tiles).
    embed_stream = jax.block_until_ready(
        module(words, stream_dtype=jnp.float32, force_streaming=True, tm=128))

    ref = reference_forward(words, module.emb_table, module.w, module.b, PAD)
    np.testing.assert_allclose(np.asarray(embed_stream), ref, rtol=1e-5, atol=1e-5)
    np.testing.assert_allclose(np.asarray(jnp.asarray(embed_resident, jnp.float32)),
                               ref, rtol=2e-2, atol=5e-3)

    print("KERNEL_OK")
</pallas_src>

<mosaic_0001>
module attributes {stable_mosaic.version = 11 : i64} {
  func.func @_resident_gather_kernel(%arg0: i32, %arg1: memref<512x8xi32, #tpu.memory_space<vmem>>, %arg2: memref<512x1xf32, #tpu.memory_space<vmem>>, %arg3: memref<128x128xbf16, #tpu.memory_space<vmem>>, %arg4: memref<512x128xbf16, #tpu.memory_space<vmem>>) attributes {dimension_semantics = [#tpu.dimension_semantics<parallel>], iteration_bounds = array<i64: 1>, scalar_prefetch = 0 : i64, scratch_operands = 0 : i64, tpu.core_type = #tpu.core_type<tc>, window_params = [{transform_indices = @transform_0, window_bounds = array<i64: 512, 8>}, {transform_indices = @transform_1, window_bounds = array<i64: 512, 1>}, {pipeline_mode = #tpu.pipeline_mode<synchronous>, transform_indices = @transform_2, window_bounds = array<i64: 128, 128>}, {transform_indices = @transform_3, window_bounds = array<i64: 512, 128>}]} {
    %c0 = arith.constant 0 : index
    %c0_0 = arith.constant 0 : index
    %0 = vector.load %arg1[%c0, %c0_0] : memref<512x8xi32, #tpu.memory_space<vmem>>, vector<512x8xi32>
    %1 = tpu.iota {dimensions = array<i32: 1>} : vector<512x128xi32>
    %2 = vector.extract_strided_slice %0 {offsets = [0, 0], sizes = [512, 1], strides = [1, 1]} : vector<512x8xi32> to vector<512x1xi32>
    %3 = vector.broadcast %2 : vector<512x1xi32> to vector<512x128xi32>
    %4 = arith.cmpi eq, %3, %1 : vector<512x128xi32>
    %5 = arith.extui %4 : vector<512x128xi1> to vector<512x128xi32>
    %6 = arith.sitofp %5 : vector<512x128xi32> to vector<512x128xf32>
    %7 = vector.extract_strided_slice %0 {offsets = [0, 1], sizes = [512, 1], strides = [1, 1]} : vector<512x8xi32> to vector<512x1xi32>
    %8 = vector.broadcast %7 : vector<512x1xi32> to vector<512x128xi32>
    %9 = arith.cmpi eq, %8, %1 : vector<512x128xi32>
    %10 = arith.extui %9 : vector<512x128xi1> to vector<512x128xi32>
    %11 = arith.sitofp %10 : vector<512x128xi32> to vector<512x128xf32>
    %12 = arith.addf %6, %11 : vector<512x128xf32>
    %13 = vector.extract_strided_slice %0 {offsets = [0, 2], sizes = [512, 1], strides = [1, 1]} : vector<512x8xi32> to vector<512x1xi32>
    %14 = vector.broadcast %13 : vector<512x1xi32> to vector<512x128xi32>
    %15 = arith.cmpi eq, %14, %1 : vector<512x128xi32>
    %16 = arith.extui %15 : vector<512x128xi1> to vector<512x128xi32>
    %17 = arith.sitofp %16 : vector<512x128xi32> to vector<512x128xf32>
    %18 = arith.addf %12, %17 : vector<512x128xf32>
    %19 = vector.extract_strided_slice %0 {offsets = [0, 3], sizes = [512, 1], strides = [1, 1]} : vector<512x8xi32> to vector<512x1xi32>
    %20 = vector.broadcast %19 : vector<512x1xi32> to vector<512x128xi32>
    %21 = arith.cmpi eq, %20, %1 : vector<512x128xi32>
    %22 = arith.extui %21 : vector<512x128xi1> to vector<512x128xi32>
    %23 = arith.sitofp %22 : vector<512x128xi32> to vector<512x128xf32>
    %24 = arith.addf %18, %23 : vector<512x128xf32>
    %25 = vector.extract_strided_slice %0 {offsets = [0, 4], sizes = [512, 1], strides = [1, 1]} : vector<512x8xi32> to vector<512x1xi32>
    %26 = vector.broadcast %25 : vector<512x1xi32> to vector<512x128xi32>
    %27 = arith.cmpi eq, %26, %1 : vector<512x128xi32>
    %28 = arith.extui %27 : vector<512x128xi1> to vector<512x128xi32>
    %29 = arith.sitofp %28 : vector<512x128xi32> to vector<512x128xf32>
    %30 = arith.addf %24, %29 : vector<512x128xf32>
    %31 = vector.extract_strided_slice %0 {offsets = [0, 5], sizes = [512, 1], strides = [1, 1]} : vector<512x8xi32> to vector<512x1xi32>
    %32 = vector.broadcast %31 : vector<512x1xi32> to vector<512x128xi32>
    %33 = arith.cmpi eq, %32, %1 : vector<512x128xi32>
    %34 = arith.extui %33 : vector<512x128xi1> to vector<512x128xi32>
    %35 = arith.sitofp %34 : vector<512x128xi32> to vector<512x128xf32>
    %36 = arith.addf %30, %35 : vector<512x128xf32>
    %37 = vector.extract_strided_slice %0 {offsets = [0, 6], sizes = [512, 1], strides = [1, 1]} : vector<512x8xi32> to vector<512x1xi32>
    %38 = vector.broadcast %37 : vector<512x1xi32> to vector<512x128xi32>
    %39 = arith.cmpi eq, %38, %1 : vector<512x128xi32>
    %40 = arith.extui %39 : vector<512x128xi1> to vector<512x128xi32>
    %41 = arith.sitofp %40 : vector<512x128xi32> to vector<512x128xf32>
    %42 = arith.addf %36, %41 : vector<512x128xf32>
    %43 = vector.extract_strided_slice %0 {offsets = [0, 7], sizes = [512, 1], strides = [1, 1]} : vector<512x8xi32> to vector<512x1xi32>
    %44 = vector.broadcast %43 : vector<512x1xi32> to vector<512x128xi32>
    %45 = arith.cmpi eq, %44, %1 : vector<512x128xi32>
    %46 = arith.extui %45 : vector<512x128xi1> to vector<512x128xi32>
    %47 = arith.sitofp %46 : vector<512x128xi32> to vector<512x128xf32>
    %48 = arith.addf %42, %47 : vector<512x128xf32>
    %c0_1 = arith.constant 0 : index
    %c0_2 = arith.constant 0 : index
    %49 = vector.load %arg3[%c0_1, %c0_2] : memref<128x128xbf16, #tpu.memory_space<vmem>>, vector<128x128xbf16>
    %50 = arith.truncf %48 : vector<512x128xf32> to vector<512x128xbf16>
    %cst = arith.constant dense<0.000000e+00> : vector<512x128xf32>
    %51 = tpu.matmul %50, %49, %cst {dimension_numbers = #tpu.dot_dimension_numbers<[1], [0], [0], [1], [0, 0, 1, 1], [], []>} : vector<512x128xbf16>, vector<128x128xbf16>, vector<512x128xf32> -> vector<512x128xf32>
    %c0_3 = arith.constant 0 : index
    %c0_4 = arith.constant 0 : index
    %52 = vector.load %arg2[%c0_3, %c0_4] : memref<512x1xf32, #tpu.memory_space<vmem>>, vector<512x1xf32>
    %53 = vector.broadcast %52 : vector<512x1xf32> to vector<512x128xf32>
    %54 = arith.mulf %51, %53 : vector<512x128xf32>
    %55 = arith.truncf %54 : vector<512x128xf32> to vector<512x128xbf16>
    %c0_5 = arith.constant 0 : index
    %c0_6 = arith.constant 0 : index
    %56 = vector.load %arg4[%c0_5, %c0_6] : memref<512x128xbf16, #tpu.memory_space<vmem>>, vector<512x128xbf16>
    tpu.vector_store %arg4[%c0_5, %c0_6], %55 {strides = array<i32>} : memref<512x128xbf16, #tpu.memory_space<vmem>>, vector<512x128xbf16>,
    return
  }
  func.func @transform_0(%arg0: i32) -> (i32, i32) {
    %c0_i32 = arith.constant 0 : i32
    %c0_i32_0 = arith.constant 0 : i32
    return %arg0, %c0_i32 : i32, i32
  }
  func.func @transform_1(%arg0: i32) -> (i32, i32) {
    %c0_i32 = arith.constant 0 : i32
    %c0_i32_0 = arith.constant 0 : i32
    return %arg0, %c0_i32 : i32, i32
  }
  func.func @transform_2(%arg0: i32) -> (i32, i32) {
    %c0_i32 = arith.constant 0 : i32
    %c0_i32_0 = arith.constant 0 : i32
    %c0_i32_1 = arith.constant 0 : i32
    return %c0_i32, %c0_i32_0 : i32, i32
  }
  func.func @transform_3(%arg0: i32) -> (i32, i32) {
    %c0_i32 = arith.constant 0 : i32
    %c0_i32_0 = arith.constant 0 : i32
    return %arg0, %c0_i32 : i32, i32
  }
}

</mosaic_0001>

<llo_original>
// kernel: pretrained_embedding_forward.1
$region0: #{pretrained_embedding_forward.1}
  #allocation0 [shape = 'u32[]', space=smem, size = 0x4, offset = 0x4, fixed_abs, tag = 'smem constant byte address 0x4 - core index']
  #allocation1 [shape = 'u32[144,128]{1,0:T(1,128)}', space=vmem, size = 0x12000, scoped, tag = 'internal scratch']
  %s0 = inlined_call_operand.vmem [shape: s32[512,8], index: 0, kind: input, shape index: {}]
  %s1 = inlined_call_operand.vmem [shape: f32[512,1], index: 1, kind: input, shape index: {}]
  %s2 = inlined_call_operand.vmem [shape: bf16[128,128], index: 2, kind: input, shape index: {}]
  %s3 = inlined_call_operand.vmem [shape: bf16[512,128], index: 3, kind: output, shape index: {}]
  %s4 = sld [smem:[#allocation0]]
  $region22: #{pretrained_embedding_forward.1} parent=0
    _
  %s6 = ssub.s32 1, %s4
  %s7 = scalar_select 0, %s6, %s4
  // Predicated region
  $region2: #{pretrained_embedding_forward.1} parent=0 // pred_check
    _
  $region3: #{pretrained_embedding_forward.1} parent=0 // pred_check_branch
    %9 = sbr.rel (0) target = $region5
  $region4: #{pretrained_embedding_forward.1} parent=0 // pred_region
    _
  $region5: #{pretrained_embedding_forward.1} parent=0 // pred_fallthru
    _
  // Predicated region
  $region6: #{pretrained_embedding_forward.1} parent=0 // pred_check
    _
  $region7: #{pretrained_embedding_forward.1} parent=0 // pred_check_branch
    %11 = sbr.rel (0) target = $region9
  $region8: #{pretrained_embedding_forward.1} parent=0 // pred_region
    _
  $region9: #{pretrained_embedding_forward.1} parent=0 // pred_fallthru
    _
  // Predicated region
  $region10: #{pretrained_embedding_forward.1} parent=0 // pred_check
    _
  $region11: #{pretrained_embedding_forward.1} parent=0 // pred_check_branch
    %13 = sbr.rel (0) target = $region13
  $region12: #{pretrained_embedding_forward.1} parent=0 // pred_region
    _
  $region13: #{pretrained_embedding_forward.1} parent=0 // pred_fallthru
    _
  %v15 = vld [vmem:[%s0] sm:$0xff]
  %v16 = vld [vmem:[%s0 + $0x8] sm:$0xff]
  %v17 = vld [vmem:[%s0 + $0x10] sm:$0xff]
  %v18 = vld [vmem:[%s0 + $0x18] sm:$0xff]
  %v19 = vld [vmem:[%s0 + $0x20] sm:$0xff]
  %v20 = vld [vmem:[%s0 + $0x28] sm:$0xff]
  %v21 = vld [vmem:[%s0 + $0x30] sm:$0xff]
  %v22 = vld [vmem:[%s0 + $0x38] sm:$0xff]
  %v23 = vld [vmem:[%s0 + $0x40] sm:$0xff]
  %v24 = vld [vmem:[%s0 + $0x48] sm:$0xff]
  %v25 = vld [vmem:[%s0 + $0x50] sm:$0xff]
  %v26 = vld [vmem:[%s0 + $0x58] sm:$0xff]
  %v27 = vld [vmem:[%s0 + $0x60] sm:$0xff]
  %v28 = vld [vmem:[%s0 + $0x68] sm:$0xff]
  %v29 = vld [vmem:[%s0 + $0x70] sm:$0xff]
  %v30 = vld [vmem:[%s0 + $0x78] sm:$0xff]
  %v31 = vld [vmem:[%s0 + $0x80] sm:$0xff]
  %v32 = vld [vmem:[%s0 + $0x88] sm:$0xff]
  %v33 = vld [vmem:[%s0 + $0x90] sm:$0xff]
  %v34 = vld [vmem:[%s0 + $0x98] sm:$0xff]
  %v35 = vld [vmem:[%s0 + $0xa0] sm:$0xff]
  %v36 = vld [vmem:[%s0 + $0xa8] sm:$0xff]
  %v37 = vld [vmem:[%s0 + $0xb0] sm:$0xff]
  %v38 = vld [vmem:[%s0 + $0xb8] sm:$0xff]
  %v39 = vld [vmem:[%s0 + $0xc0] sm:$0xff]
  %v40 = vld [vmem:[%s0 + $0xc8] sm:$0xff]
  %v41 = vld [vmem:[%s0 + $0xd0] sm:$0xff]
  %v42 = vld [vmem:[%s0 + $0xd8] sm:$0xff]
  %v43 = vld [vmem:[%s0 + $0xe0] sm:$0xff]
  %v44 = vld [vmem:[%s0 + $0xe8] sm:$0xff]
  %v45 = vld [vmem:[%s0 + $0xf0] sm:$0xff]
  %v46 = vld [vmem:[%s0 + $0xf8] sm:$0xff]
  %v47 = vld [vmem:[%s0 + $0x100] sm:$0xff]
  %v48 = vld [vmem:[%s0 + $0x108] sm:$0xff]
  %v49 = vld [vmem:[%s0 + $0x110] sm:$0xff]
  %v50 = vld [vmem:[%s0 + $0x118] sm:$0xff]
  %v51 = vld [vmem:[%s0 + $0x120] sm:$0xff]
  %v52 = vld [vmem:[%s0 + $0x128] sm:$0xff]
  %v53 = vld [vmem:[%s0 + $0x130] sm:$0xff]
  %v54 = vld [vmem:[%s0 + $0x138] sm:$0xff]
  %v55 = vld [vmem:[%s0 + $0x140] sm:$0xff]
  %v56 = vld [vmem:[%s0 + $0x148] sm:$0xff]
  %v57 = vld [vmem:[%s0 + $0x150] sm:$0xff]
  %v58 = vld [vmem:[%s0 + $0x158] sm:$0xff]
  %v59 = vld [vmem:[%s0 + $0x160] sm:$0xff]
  %v60 = vld [vmem:[%s0 + $0x168] sm:$0xff]
  %v61 = vld [vmem:[%s0 + $0x170] sm:$0xff]
  %v62 = vld [vmem:[%s0 + $0x178] sm:$0xff]
  %v63 = vld [vmem:[%s0 + $0x180] sm:$0xff]
  %v64 = vld [vmem:[%s0 + $0x188] sm:$0xff]
  %v65 = vld [vmem:[%s0 + $0x190] sm:$0xff]
  %v66 = vld [vmem:[%s0 + $0x198] sm:$0xff]
  %v67 = vld [vmem:[%s0 + $0x1a0] sm:$0xff]
  %v68 = vld [vmem:[%s0 + $0x1a8] sm:$0xff]
  %v69 = vld [vmem:[%s0 + $0x1b0] sm:$0xff]
  %v70 = vld [vmem:[%s0 + $0x1b8] sm:$0xff]
  %v71 = vld [vmem:[%s0 + $0x1c0] sm:$0xff]
  %v72 = vld [vmem:[%s0 + $0x1c8] sm:$0xff]
  %v73 = vld [vmem:[%s0 + $0x1d0] sm:$0xff]
  %v74 = vld [vmem:[%s0 + $0x1d8] sm:$0xff]
  %v75 = vld [vmem:[%s0 + $0x1e0] sm:$0xff]
  %v76 = vld [vmem:[%s0 + $0x1e8] sm:$0xff]
  %v77 = vld [vmem:[%s0 + $0x1f0] sm:$0xff]
  %v78 = vld [vmem:[%s0 + $0x1f8] sm:$0xff]
  %v79 = vlaneseq
  %v80 = vand.u32 %v79, 127
  %81 = vset.pattern.permute.xlu0 0
  %82 = vperm.xlu0 %81, %v15
  %v83 = vpop.permute.xlu0 %82
  %84 = vset.pattern.permute.xlu0 0
  %85 = vperm.xlu0 %84, %v16
  %v86 = vpop.permute.xlu0 %85
  %87 = vset.pattern.permute.xlu0 0
  %88 = vperm.xlu0 %87, %v17
  %v89 = vpop.permute.xlu0 %88
  %90 = vset.pattern.permute.xlu0 0
  %91 = vperm.xlu0 %90, %v18
  %v92 = vpop.permute.xlu0 %91
  %93 = vset.pattern.permute.xlu0 0
  %94 = vperm.xlu0 %93, %v19
  %v95 = vpop.permute.xlu0 %94
  %96 = vset.pattern.permute.xlu0 0
  %97 = vperm.xlu0 %96, %v20
  %v98 = vpop.permute.xlu0 %97
  %99 = vset.pattern.permute.xlu0 0
  %100 = vperm.xlu0 %99, %v21
  %v101 = vpop.permute.xlu0 %100
  %102 = vset.pattern.permute.xlu0 0
  %103 = vperm.xlu0 %102, %v22
  %v104 = vpop.permute.xlu0 %103
  %105 = vset.pattern.permute.xlu0 0
  %106 = vperm.xlu0 %105, %v23
  %v107 = vpop.permute.xlu0 %106
  %108 = vset.pattern.permute.xlu0 0
  %109 = vperm.xlu0 %108, %v24
  %v110 = vpop.permute.xlu0 %109
  %111 = vset.pattern.permute.xlu0 0
  %112 = vperm.xlu0 %111, %v25
  %v113 = vpop.permute.xlu0 %112
  %114 = vset.pattern.permute.xlu0 0
  %115 = vperm.xlu0 %114, %v26
  %v116 = vpop.permute.xlu0 %115
  %117 = vset.pattern.permute.xlu0 0
  %118 = vperm.xlu0 %117, %v27
  %v119 = vpop.permute.xlu0 %118
  %120 = vset.pattern.permute.xlu0 0
  %121 = vperm.xlu0 %120, %v28
  %v122 = vpop.permute.xlu0 %121
  %123 = vset.pattern.permute.xlu0 0
  %124 = vperm.xlu0 %123, %v29
  %v125 = vpop.permute.xlu0 %124
  %126 = vset.pattern.permute.xlu0 0
  %127 = vperm.xlu0 %126, %v30
  %v128 = vpop.permute.xlu0 %127
  %129 = vset.pattern.permute.xlu0 0
  %130 = vperm.xlu0 %129, %v31
  %v131 = vpop.permute.xlu0 %130
  %132 = vset.pattern.permute.xlu0 0
  %133 = vperm.xlu0 %132, %v32
  %v134 = vpop.permute.xlu0 %133
  %135 = vset.pattern.permute.xlu0 0
  %136 = vperm.xlu0 %135, %v33
  %v137 = vpop.permute.xlu0 %136
  %138 = vset.pattern.permute.xlu0 0
  %139 = vperm.xlu0 %138, %v34
  %v140 = vpop.permute.xlu0 %139
  %141 = vset.pattern.permute.xlu0 0
  %142 = vperm.xlu0 %141, %v35
  %v143 = vpop.permute.xlu0 %142
  %144 = vset.pattern.permute.xlu0 0
  %145 = vperm.xlu0 %144, %v36
  %v146 = vpop.permute.xlu0 %145
  %147 = vset.pattern.permute.xlu0 0
  %148 = vperm.xlu0 %147, %v37
  %v149 = vpop.permute.xlu0 %148
  %150 = vset.pattern.permute.xlu0 0
  %151 = vperm.xlu0 %150, %v38
  %v152 = vpop.permute.xlu0 %151
  %153 = vset.pattern.permute.xlu0 0
  %154 = vperm.xlu0 %153, %v39
  %v155 = vpop.permute.xlu0 %154
  %156 = vset.pattern.permute.xlu0 0
  %157 = vperm.xlu0 %156, %v40
  %v158 = vpop.permute.xlu0 %157
  %159 = vset.pattern.permute.xlu0 0
  %160 = vperm.xlu0 %159, %v41
  %v161 = vpop.permute.xlu0 %160
  %162 = vset.pattern.permute.xlu0 0
  %163 = vperm.xlu0 %162, %v42
  %v164 = vpop.permute.xlu0 %163
  %165 = vset.pattern.permute.xlu0 0
  %166 = vperm.xlu0 %165, %v43
  %v167 = vpop.permute.xlu0 %166
  %168 = vset.pattern.permute.xlu0 0
  %169 = vperm.xlu0 %168, %v44
  %v170 = vpop.permute.xlu0 %169
  %171 = vset.pattern.permute.xlu0 0
  %172 = vperm.xlu0 %171, %v45
  %v173 = vpop.permute.xlu0 %172
  %174 = vset.pattern.permute.xlu0 0
  %175 = vperm.xlu0 %174, %v46
  %v176 = vpop.permute.xlu0 %175
  %177 = vset.pattern.permute.xlu0 0
  %178 = vperm.xlu0 %177, %v47
  %v179 = vpop.permute.xlu0 %178
  %180 = vset.pattern.permute.xlu0 0
  %181 = vperm.xlu0 %180, %v48
  %v182 = vpop.permute.xlu0 %181
  %183 = vset.pattern.permute.xlu0 0
  %184 = vperm.xlu0 %183, %v49
  %v185 = vpop.permute.xlu0 %184
  %186 = vset.pattern.permute.xlu0 0
  %187 = vperm.xlu0 %186, %v50
  %v188 = vpop.permute.xlu0 %187
  %189 = vset.pattern.permute.xlu0 0
  %190 = vperm.xlu0 %189, %v51
  %v191 = vpop.permute.xlu0 %190
  %192 = vset.pattern.permute.xlu0 0
  %193 = vperm.xlu0 %192, %v52
  %v194 = vpop.permute.xlu0 %193
  %195 = vset.pattern.permute.xlu0 0
  %196 = vperm.xlu0 %195, %v53
  %v197 = vpop.permute.xlu0 %196
  %198 = vset.pattern.permute.xlu0 0
  %199 = vperm.xlu0 %198, %v54
  %v200 = vpop.permute.xlu0 %199
  %201 = vset.pattern.permute.xlu0 0
  %202 = vperm.xlu0 %201, %v55
  %v203 = vpop.permute.xlu0 %202
  %204 = vset.pattern.permute.xlu0 0
  %205 = vperm.xlu0 %204, %v56
  %v206 = vpop.permute.xlu0 %205
  %207 = vset.pattern.permute.xlu0 0
  %208 = vperm.xlu0 %207, %v57
  %v209 = vpop.permute.xlu0 %208
  %210 = vset.pattern.permute.xlu0 0
  %211 = vperm.xlu0 %210, %v58
  %v212 = vpop.permute.xlu0 %211
  %213 = vset.pattern.permute.xlu0 0
  %214 = vperm.xlu0 %213, %v59
  %v215 = vpop.permute.xlu0 %214
  %216 = vset.pattern.permute.xlu0 0
  %217 = vperm.xlu0 %216, %v60
  %v218 = vpop.permute.xlu0 %217
  %219 = vset.pattern.permute.xlu0 0
  %220 = vperm.xlu0 %219, %v61
  %v221 = vpop.permute.xlu0 %220
  %222 = vset.pattern.permute.xlu0 0
  %223 = vperm.xlu0 %222, %v62
  %v224 = vpop.permute.xlu0 %223
  %225 = vset.pattern.permute.xlu0 0
  %226 = vperm.xlu0 %225, %v63
  %v227 = vpop.permute.xlu0 %226
  %228 = vset.pattern.permute.xlu0 0
  %229 = vperm.xlu0 %228, %v64
  %v230 = vpop.permute.xlu0 %229
  %231 = vset.pattern.permute.xlu0 0
  %232 = vperm.xlu0 %231, %v65
  %v233 = vpop.permute.xlu0 %232
  %234 = vset.pattern.permute.xlu0 0
  %235 = vperm.xlu0 %234, %v66
  %v236 = vpop.permute.xlu0 %235
  %237 = vset.pattern.permute.xlu0 0
  %238 = vperm.xlu0 %237, %v67
  %v239 = vpop.permute.xlu0 %238
  %240 = vset.pattern.permute.xlu0 0
  %241 = vperm.xlu0 %240, %v68
  %v242 = vpop.permute.xlu0 %241
  %243 = vset.pattern.permute.xlu0 0
  %244 = vperm.xlu0 %243, %v69
  %v245 = vpop.permute.xlu0 %244
  %246 = vset.pattern.permute.xlu0 0
  %247 = vperm.xlu0 %246, %v70
  %v248 = vpop.permute.xlu0 %247
  %249 = vset.pattern.permute.xlu0 0
  %250 = vperm.xlu0 %249, %v71
  %v251 = vpop.permute.xlu0 %250
  %252 = vset.pattern.permute.xlu0 0
  %253 = vperm.xlu0 %252, %v72
  %v254 = vpop.permute.xlu0 %253
  %255 = vset.pattern.permute.xlu0 0
  %256 = vperm.xlu0 %255, %v73
  %v257 = vpop.permute.xlu0 %256
  %258 = vset.pattern.permute.xlu0 0
  %259 = vperm.xlu0 %258, %v74
  %v260 = vpop.permute.xlu0 %259
  %261 = vset.pattern.permute.xlu0 0
  %262 = vperm.xlu0 %261, %v75
  %v263 = vpop.permute.xlu0 %262
  %264 = vset.pattern.permute.xlu0 0
  %265 = vperm.xlu0 %264, %v76
  %v266 = vpop.permute.xlu0 %265
  %267 = vset.pattern.permute.xlu0 0
  %268 = vperm.xlu0 %267, %v77
  %v269 = vpop.permute.xlu0 %268
  %270 = vset.pattern.permute.xlu0 0
  %271 = vperm.xlu0 %270, %v78
  %v272 = vpop.permute.xlu0 %271
  %vm273 = vcmp.eq.s32.totalorder %v83, %v80
  %vm274 = vcmp.eq.s32.totalorder %v86, %v80
  %vm275 = vcmp.eq.s32.totalorder %v89, %v80
  %vm276 = vcmp.eq.s32.totalorder %v92, %v80
  %vm277 = vcmp.eq.s32.totalorder %v95, %v80
  %vm278 = vcmp.eq.s32.totalorder %v98, %v80
  %vm279 = vcmp.eq.s32.totalorder %v101, %v80
  %vm280 = vcmp.eq.s32.totalorder %v104, %v80
  %vm281 = vcmp.eq.s32.totalorder %v107, %v80
  %vm282 = vcmp.eq.s32.totalorder %v110, %v80
  %vm283 = vcmp.eq.s32.totalorder %v113, %v80
  %vm284 = vcmp.eq.s32.totalorder %v116, %v80
  %vm285 = vcmp.eq.s32.totalorder %v119, %v80
  %vm286 = vcmp.eq.s32.totalorder %v122, %v80
  %vm287 = vcmp.eq.s32.totalorder %v125, %v80
  %vm288 = vcmp.eq.s32.totalorder %v128, %v80
  %vm289 = vcmp.eq.s32.totalorder %v131, %v80
  %vm290 = vcmp.eq.s32.totalorder %v134, %v80
  %vm291 = vcmp.eq.s32.totalorder %v137, %v80
  %vm292 = vcmp.eq.s32.totalorder %v140, %v80
  %vm293 = vcmp.eq.s32.totalorder %v143, %v80
  %vm294 = vcmp.eq.s32.totalorder %v146, %v80
  %vm295 = vcmp.eq.s32.totalorder %v149, %v80
  %vm296 = vcmp.eq.s32.totalorder %v152, %v80
  %vm297 = vcmp.eq.s32.totalorder %v155, %v80
  %vm298 = vcmp.eq.s32.totalorder %v158, %v80
  %vm299 = vcmp.eq.s32.totalorder %v161, %v80
  %vm300 = vcmp.eq.s32.totalorder %v164, %v80
  %vm301 = vcmp.eq.s32.totalorder %v167, %v80
  %vm302 = vcmp.eq.s32.totalorder %v170, %v80
  %vm303 = vcmp.eq.s32.totalorder %v173, %v80
  %vm304 = vcmp.eq.s32.totalorder %v176, %v80
  %vm305 = vcmp.eq.s32.totalorder %v179, %v80
  %vm306 = vcmp.eq.s32.totalorder %v182, %v80
  %vm307 = vcmp.eq.s32.totalorder %v185, %v80
  %vm308 = vcmp.eq.s32.totalorder %v188, %v80
  %vm309 = vcmp.eq.s32.totalorder %v191, %v80
  %vm310 = vcmp.eq.s32.totalorder %v194, %v80
  %vm311 = vcmp.eq.s32.totalorder %v197, %v80
  %vm312 = vcmp.eq.s32.totalorder %v200, %v80
  %vm313 = vcmp.eq.s32.totalorder %v203, %v80
  %vm314 = vcmp.eq.s32.totalorder %v206, %v80
  %vm315 = vcmp.eq.s32.totalorder %v209, %v80
  %vm316 = vcmp.eq.s32.totalorder %v212, %v80
  %vm317 = vcmp.eq.s32.totalorder %v215, %v80
  %vm318 = vcmp.eq.s32.totalorder %v218, %v80
  %vm319 = vcmp.eq.s32.totalorder %v221, %v80
  %vm320 = vcmp.eq.s32.totalorder %v224, %v80
  %vm321 = vcmp.eq.s32.totalorder %v227, %v80
  %vm322 = vcmp.eq.s32.totalorder %v230, %v80
  %vm323 = vcmp.eq.s32.totalorder %v233, %v80
  %vm324 = vcmp.eq.s32.totalorder %v236, %v80
  %vm325 = vcmp.eq.s32.totalorder %v239, %v80
  %vm326 = vcmp.eq.s32.totalorder %v242, %v80
  %vm327 = vcmp.eq.s32.totalorder %v245, %v80
  %vm328 = vcmp.eq.s32.totalorder %v248, %v80
  %vm329 = vcmp.eq.s32.totalorder %v251, %v80
  %vm330 = vcmp.eq.s32.totalorder %v254, %v80
  %vm331 = vcmp.eq.s32.totalorder %v257, %v80
  %vm332 = vcmp.eq.s32.totalorder %v260, %v80
  %vm333 = vcmp.eq.s32.totalorder %v263, %v80
  %vm334 = vcmp.eq.s32.totalorder %v266, %v80
  %vm335 = vcmp.eq.s32.totalorder %v269, %v80
  %vm336 = vcmp.eq.s32.totalorder %v272, %v80
  %v337 = vsel %vm273, 1, 0
  %v338 = vsel %vm274, 1, 0
  %v339 = vsel %vm275, 1, 0
  %v340 = vsel %vm276, 1, 0
  %v341 = vsel %vm277, 1, 0
  %v342 = vsel %vm278, 1, 0
  %v343 = vsel %vm279, 1, 0
  %v344 = vsel %vm280, 1, 0
  %v345 = vsel %vm281, 1, 0
  %v346 = vsel %vm282, 1, 0
  %v347 = vsel %vm283, 1, 0
  %v348 = vsel %vm284, 1, 0
  %v349 = vsel %vm285, 1, 0
  %v350 = vsel %vm286, 1, 0
  %v351 = vsel %vm287, 1, 0
  %v352 = vsel %vm288, 1, 0
  %v353 = vsel %vm289, 1, 0
  %v354 = vsel %vm290, 1, 0
  %v355 = vsel %vm291, 1, 0
  %v356 = vsel %vm292, 1, 0
  %v357 = vsel %vm293, 1, 0
  %v358 = vsel %vm294, 1, 0
  %v359 = vsel %vm295, 1, 0
  %v360 = vsel %vm296, 1, 0
  %v361 = vsel %vm297, 1, 0
  %v362 = vsel %vm298, 1, 0
  %v363 = vsel %vm299, 1, 0
  %v364 = vsel %vm300, 1, 0
  %v365 = vsel %vm301, 1, 0
  %v366 = vsel %vm302, 1, 0
  %v367 = vsel %vm303, 1, 0
  %v368 = vsel %vm304, 1, 0
  %v369 = vsel %vm305, 1, 0
  %v370 = vsel %vm306, 1, 0
  %v371 = vsel %vm307, 1, 0
  %v372 = vsel %vm308, 1, 0
  %v373 = vsel %vm309, 1, 0
  %v374 = vsel %vm310, 1, 0
  %v375 = vsel %vm311, 1, 0
  %v376 = vsel %vm312, 1, 0
  %v377 = vsel %vm313, 1, 0
  %v378 = vsel %vm314, 1, 0
  %v379 = vsel %vm315, 1, 0
  %v380 = vsel %vm316, 1, 0
  %v381 = vsel %vm317, 1, 0
  %v382 = vsel %vm318, 1, 0
  %v383 = vsel %vm319, 1, 0
  %v384 = vsel %vm320, 1, 0
  %v385 = vsel %vm321, 1, 0
  %v386 = vsel %vm322, 1, 0
  %v387 = vsel %vm323, 1, 0
  %v388 = vsel %vm324, 1, 0
  %v389 = vsel %vm325, 1, 0
  %v390 = vsel %vm326, 1, 0
  %v391 = vsel %vm327, 1, 0
  %v392 = vsel %vm328, 1, 0
  %v393 = vsel %vm329, 1, 0
  %v394 = vsel %vm330, 1, 0
  %v395 = vsel %vm331, 1, 0
  %v396 = vsel %vm332, 1, 0
  %v397 = vsel %vm333, 1, 0
  %v398 = vsel %vm334, 1, 0
  %v399 = vsel %vm335, 1, 0
  %v400 = vsel %vm336, 1, 0
  %v401 = vcvt.s32.f32 %v337
  %v402 = vcvt.s32.f32 %v338
  %v403 = vcvt.s32.f32 %v339
  %v404 = vcvt.s32.f32 %v340
  %v405 = vcvt.s32.f32 %v341
  %v406 = vcvt.s32.f32 %v342
  %v407 = vcvt.s32.f32 %v343
  %v408 = vcvt.s32.f32 %v344
  %v409 = vcvt.s32.f32 %v345
  %v410 = vcvt.s32.f32 %v346
  %v411 = vcvt.s32.f32 %v347
  %v412 = vcvt.s32.f32 %v348
  %v413 = vcvt.s32.f32 %v349
  %v414 = vcvt.s32.f32 %v350
  %v415 = vcvt.s32.f32 %v351
  %v416 = vcvt.s32.f32 %v352
  %v417 = vcvt.s32.f32 %v353
  %v418 = vcvt.s32.f32 %v354
  %v419 = vcvt.s32.f32 %v355
  %v420 = vcvt.s32.f32 %v356
  %v421 = vcvt.s32.f32 %v357
  %v422 = vcvt.s32.f32 %v358
  %v423 = vcvt.s32.f32 %v359
  %v424 = vcvt.s32.f32 %v360
  %v425 = vcvt.s32.f32 %v361
  %v426 = vcvt.s32.f32 %v362
  %v427 = vcvt.s32.f32 %v363
  %v428 = vcvt.s32.f32 %v364
  %v429 = vcvt.s32.f32 %v365
  %v430 = vcvt.s32.f32 %v366
  %v431 = vcvt.s32.f32 %v367
  %v432 = vcvt.s32.f32 %v368
  %v433 = vcvt.s32.f32 %v369
  %v434 = vcvt.s32.f32 %v370
  %v435 = vcvt.s32.f32 %v371
  %v436 = vcvt.s32.f32 %v372
  %v437 = vcvt.s32.f32 %v373
  %v438 = vcvt.s32.f32 %v374
  %v439 = vcvt.s32.f32 %v375
  %v440 = vcvt.s32.f32 %v376
  %v441 = vcvt.s32.f32 %v377
  %v442 = vcvt.s32.f32 %v378
  %v443 = vcvt.s32.f32 %v379
  %v444 = vcvt.s32.f32 %v380
  %v445 = vcvt.s32.f32 %v381
  %v446 = vcvt.s32.f32 %v382
  %v447 = vcvt.s32.f32 %v383
  %v448 = vcvt.s32.f32 %v384
  %v449 = vcvt.s32.f32 %v385
  %v450 = vcvt.s32.f32 %v386
  %v451 = vcvt.s32.f32 %v387
  %v452 = vcvt.s32.f32 %v388
  %v453 = vcvt.s32.f32 %v389
  %v454 = vcvt.s32.f32 %v390
  %v455 = vcvt.s32.f32 %v391
  %v456 = vcvt.s32.f32 %v392
  %v457 = vcvt.s32.f32 %v393
  %v458 = vcvt.s32.f32 %v394
  %v459 = vcvt.s32.f32 %v395
  %v460 = vcvt.s32.f32 %v396
  %v461 = vcvt.s32.f32 %v397
  %v462 = vcvt.s32.f32 %v398
  %v463 = vcvt.s32.f32 %v399
  %v464 = vcvt.s32.f32 %v400
  %465 = vset.pattern.permute.xlu0 1
  %466 = vperm.xlu0 %465, %v15
  %v467 = vpop.permute.xlu0 %466
  %468 = vset.pattern.permute.xlu0 1
  %469 = vperm.xlu0 %468, %v16
  %v470 = vpop.permute.xlu0 %469
  %471 = vset.pattern.permute.xlu0 1
  %472 = vperm.xlu0 %471, %v17
  %v473 = vpop.permute.xlu0 %472
  %474 = vset.pattern.permute.xlu0 1
  %475 = vperm.xlu0 %474, %v18
  %v476 = vpop.permute.xlu0 %475
  %477 = vset.pattern.permute.xlu0 1
  %478 = vperm.xlu0 %477, %v19
  %v479 = vpop.permute.xlu0 %478
  %480 = vset.pattern.permute.xlu0 1
  %481 = vperm.xlu0 %480, %v20
  %v482 = vpop.permute.xlu0 %481
  %483 = vset.pattern.permute.xlu0 1
  %484 = vperm.xlu0 %483, %v21
  %v485 = vpop.permute.xlu0 %484
  %486 = vset.pattern.permute.xlu0 1
  %487 = vperm.xlu0 %486, %v22
  %v488 = vpop.permute.xlu0 %487
  %489 = vset.pattern.permute.xlu0 1
  %490 = vperm.xlu0 %489, %v23
  %v491 = vpop.permute.xlu0 %490
  %492 = vset.pattern.permute.xlu0 1
  %493 = vperm.xlu0 %492, %v24
  %v494 = vpop.permute.xlu0 %493
  %495 = vset.pattern.permute.xlu0 1
  %496 = vperm.xlu0 %495, %v25
  %v497 = vpop.permute.xlu0 %496
  %498 = vset.pattern.permute.xlu0 1
  %499 = vperm.xlu0 %498, %v26
  %v500 = vpop.permute.xlu0 %499
  %501 = vset.pattern.permute.xlu0 1
  %502 = vperm.xlu0 %501, %v27
  %v503 = vpop.permute.xlu0 %502
  %504 = vset.pattern.permute.xlu0 1
  %505 = vperm.xlu0 %504, %v28
  %v506 = vpop.permute.xlu0 %505
  %507 = vset.pattern.permute.xlu0 1
  %508 = vperm.xlu0 %507, %v29
  %v509 = vpop.permute.xlu0 %508
  %510 = vset.pattern.permute.xlu0 1
  %511 = vperm.xlu0 %510, %v30
  %v512 = vpop.permute.xlu0 %511
  %513 = vset.pattern.permute.xlu0 1
  %514 = vperm.xlu0 %513, %v31
  %v515 = vpop.permute.xlu0 %514
  %516 = vset.pattern.permute.xlu0 1
  %517 = vperm.xlu0 %516, %v32
  %v518 = vpop.permute.xlu0 %517
  %519 = vset.pattern.permute.xlu0 1
  %520 = vperm.xlu0 %519, %v33
  %v521 = vpop.permute.xlu0 %520
  %522 = vset.pattern.permute.xlu0 1
  %523 = vperm.xlu0 %522, %v34
  %v524 = vpop.permute.xlu0 %523
  %525 = vset.pattern.permute.xlu0 1
  %526 = vperm.xlu0 %525, %v35
  %v527 = vpop.permute.xlu0 %526
  %528 = vset.pattern.permute.xlu0 1
  %529 = vperm.xlu0 %528, %v36
  %v530 = vpop.permute.xlu0 %529
  %531 = vset.pattern.permute.xlu0 1
  %532 = vperm.xlu0 %531, %v37
  %v533 = vpop.permute.xlu0 %532
  %534 = vset.pattern.permute.xlu0 1
  %535 = vperm.xlu0 %534, %v38
  %v536 = vpop.permute.xlu0 %535
  %537 = vset.pattern.permute.xlu0 1
  %538 = vperm.xlu0 %537, %v39
  %v539 = vpop.permute.xlu0 %538
  %540 = vset.pattern.permute.xlu0 1
  %541 = vperm.xlu0 %540, %v40
  %v542 = vpop.permute.xlu0 %541
  %543 = vset.pattern.permute.xlu0 1
  %544 = vperm.xlu0 %543, %v41
  %v545 = vpop.permute.xlu0 %544
  %546 = vset.pattern.permute.xlu0 1
  %547 = vperm.xlu0 %546, %v42
  %v548 = vpop.permute.xlu0 %547
  %549 = vset.pattern.permute.xlu0 1
  %550 = vperm.xlu0 %549, %v43
  %v551 = vpop.permute.xlu0 %550
  %552 = vset.pattern.permute.xlu0 1
  %553 = vperm.xlu0 %552, %v44
  %v554 = vpop.permute.xlu0 %553
  %555 = vset.pattern.permute.xlu0 1
  %556 = vperm.xlu0 %555, %v45
  %v557 = vpop.permute.xlu0 %556
  %558 = vset.pattern.permute.xlu0 1
  %559 = vperm.xlu0 %558, %v46
  %v560 = vpop.permute.xlu0 %559
  %561 = vset.pattern.permute.xlu0 1
  %562 = vperm.xlu0 %561, %v47
  %v563 = vpop.permute.xlu0 %562
  %564 = vset.pattern.permute.xlu0 1
  %565 = vperm.xlu0 %564, %v48
  %v566 = vpop.permute.xlu0 %565
  %567 = vset.pattern.permute.xlu0 1
  %568 = vperm.xlu0 %567, %v49
  %v569 = vpop.permute.xlu0 %568
  %570 = vset.pattern.permute.xlu0 1
  %571 = vperm.xlu0 %570, %v50
  %v572 = vpop.permute.xlu0 %571
  %573 = vset.pattern.permute.xlu0 1
  %574 = vperm.xlu0 %573, %v51
  %v575 = vpop.permute.xlu0 %574
  %576 = vset.pattern.permute.xlu0 1
  %577 = vperm.xlu0 %576, %v52
  %v578 = vpop.permute.xlu0 %577
  %579 = vset.pattern.permute.xlu0 1
  %580 = vperm.xlu0 %579, %v53
  %v581 = vpop.permute.xlu0 %580
  %582 = vset.pattern.permute.xlu0 1
  %583 = vperm.xlu0 %582, %v54
  %v584 = vpop.permute.xlu0 %583
  %585 = vset.pattern.permute.xlu0 1
  %586 = vperm.xlu0 %585, %v55
  %v587 = vpop.permute.xlu0 %586
  %588 = vset.pattern.permute.xlu0 1
  %589 = vperm.xlu0 %588, %v56
  %v590 = vpop.permute.xlu0 %589
  %591 = vset.pattern.permute.xlu0 1
  %592 = vperm.xlu0 %591, %v57
  %v593 = vpop.permute.xlu0 %592
  %594 = vset.pattern.permute.xlu0 1
  %595 = vperm.xlu0 %594, %v58
  %v596 = vpop.permute.xlu0 %595
  %597 = vset.pattern.permute.xlu0 1
  %598 = vperm.xlu0 %597, %v59
  %v599 = vpop.permute.xlu0 %598
  %600 = vset.pattern.permute.xlu0 1
  %601 = vperm.xlu0 %600, %v60
  %v602 = vpop.permute.xlu0 %601
  %603 = vset.pattern.permute.xlu0 1
  %604 = vperm.xlu0 %603, %v61
  %v605 = vpop.permute.xlu0 %604
  %606 = vset.pattern.permute.xlu0 1
  %607 = vperm.xlu0 %606, %v62
  %v608 = vpop.permute.xlu0 %607
  %609 = vset.pattern.permute.xlu0 1
  %610 = vperm.xlu0 %609, %v63
  %v611 = vpop.permute.xlu0 %610
  %612 = vset.pattern.permute.xlu0 1
  %613 = vperm.xlu0 %612, %v64
  %v614 = vpop.permute.xlu0 %613
  %615 = vset.pattern.permute.xlu0 1
  %616 = vperm.xlu0 %615, %v65
  %v617 = vpop.permute.xlu0 %616
  %618 = vset.pattern.permute.xlu0 1
  %619 = vperm.xlu0 %618, %v66
  %v620 = vpop.permute.xlu0 %619
  %621 = vset.pattern.permute.xlu0 1
  %622 = vperm.xlu0 %621, %v67
  %v623 = vpop.permute.xlu0 %622
  %624 = vset.pattern.permute.xlu0 1
  %625 = vperm.xlu0 %624, %v68
  %v626 = vpop.permute.xlu0 %625
  %627 = vset.pattern.permute.xlu0 1
  %628 = vperm.xlu0 %627, %v69
  %v629 = vpop.permute.xlu0 %628
  %630 = vset.pattern.permute.xlu0 1
  %631 = vperm.xlu0 %630, %v70
  %v632 = vpop.permute.xlu0 %631
  %633 = vset.pattern.permute.xlu0 1
  %634 = vperm.xlu0 %633, %v71
  %v635 = vpop.permute.xlu0 %634
  %636 = vset.pattern.permute.xlu0 1
  %637 = vperm.xlu0 %636, %v72
  %v638 = vpop.permute.xlu0 %637
  %639 = vset.pattern.permute.xlu0 1
  %640 = vperm.xlu0 %639, %v73
  %v641 = vpop.permute.xlu0 %640
  %642 = vset.pattern.permute.xlu0 1
  %643 = vperm.xlu0 %642, %v74
  %v644 = vpop.permute.xlu0 %643
  %645 = vset.pattern.permute.xlu0 1
  %646 = vperm.xlu0 %645, %v75
  %v647 = vpop.permute.xlu0 %646
  %648 = vset.pattern.permute.xlu0 1
  %649 = vperm.xlu0 %648, %v76
  %v650 = vpop.permute.xlu0 %649
  %651 = vset.pattern.permute.xlu0 1
  %652 = vperm.xlu0 %651, %v77
  %v653 = vpop.permute.xlu0 %652
  %654 = vset.pattern.permute.xlu0 1
  %655 = vperm.xlu0 %654, %v78
  %v656 = vpop.permute.xlu0 %655
  %vm657 = vcmp.eq.s32.totalorder %v467, %v80
  %vm658 = vcmp.eq.s32.totalorder %v470, %v80
  %vm659 = vcmp.eq.s32.totalorder %v473, %v80
  %vm660 = vcmp.eq.s32.totalorder %v476, %v80
  %vm661 = vcmp.eq.s32.totalorder %v479, %v80
  %vm662 = vcmp.eq.s32.totalorder %v482, %v80
  %vm663 = vcmp.eq.s32.totalorder %v485, %v80
  %vm664 = vcmp.eq.s32.totalorder %v488, %v80
  %vm665 = vcmp.eq.s32.totalorder %v491, %v80
  %vm666 = vcmp.eq.s32.totalorder %v494, %v80
  %vm667 = vcmp.eq.s32.totalorder %v497, %v80
  %vm668 = vcmp.eq.s32.totalorder %v500, %v80
  %vm669 = vcmp.eq.s32.totalorder %v503, %v80
  %vm670 = vcmp.eq.s32.totalorder %v506, %v80
  %vm671 = vcmp.eq.s32.totalorder %v509, %v80
  %vm672 = vcmp.eq.s32.totalorder %v512, %v80
  %vm673 = vcmp.eq.s32.totalorder %v515, %v80
  %vm674 = vcmp.eq.s32.totalorder %v518, %v80
  %vm675 = vcmp.eq.s32.totalorder %v521, %v80
  %vm676 = vcmp.eq.s32.totalorder %v524, %v80
  %vm677 = vcmp.eq.s32.totalorder %v527, %v80
  %vm678 = vcmp.eq.s32.totalorder %v530, %v80
  %vm679 = vcmp.eq.s32.totalorder %v533, %v80
  %vm680 = vcmp.eq.s32.totalorder %v536, %v80
  %vm681 = vcmp.eq.s32.totalorder %v539, %v80
  %vm682 = vcmp.eq.s32.totalorder %v542, %v80
  %vm683 = vcmp.eq.s32.totalorder %v545, %v80
  %vm684 = vcmp.eq.s32.totalorder %v548, %v80
  %vm685 = vcmp.eq.s32.totalorder %v551, %v80
  %vm686 = vcmp.eq.s32.totalorder %v554, %v80
  %vm687 = vcmp.eq.s32.totalorder %v557, %v80
  %vm688 = vcmp.eq.s32.totalorder %v560, %v80
  %vm689 = vcmp.eq.s32.totalorder %v563, %v80
  %vm690 = vcmp.eq.s32.totalorder %v566, %v80
  %vm691 = vcmp.eq.s32.totalorder %v569, %v80
  %vm692 = vcmp.eq.s32.totalorder %v572, %v80
  %vm693 = vcmp.eq.s32.totalorder %v575, %v80
  %vm694 = vcmp.eq.s32.totalorder %v578, %v80
  %vm695 = vcmp.eq.s32.totalorder %v581, %v80
  %vm696 = vcmp.eq.s32.totalorder %v584, %v80
  %vm697 = vcmp.eq.s32.totalorder %v587, %v80
  %vm698 = vcmp.eq.s32.totalorder %v590, %v80
  %vm699 = vcmp.eq.s32.totalorder %v593, %v80
  %vm700 = vcmp.eq.s32.totalorder %v596, %v80
  %vm701 = vcmp.eq.s32.totalorder %v599, %v80
  %vm702 = vcmp.eq.s32.totalorder %v602, %v80
  %vm703 = vcmp.eq.s32.totalorder %v605, %v80
  %vm704 = vcmp.eq.s32.totalorder %v608, %v80
  %vm705 = vcmp.eq.s32.totalorder %v611, %v80
  %vm706 = vcmp.eq.s32.totalorder %v614, %v80
  %vm707 = vcmp.eq.s32.totalorder %v617, %v80
  %vm708 = vcmp.eq.s32.totalorder %v620, %v80
  %vm709 = vcmp.eq.s32.totalorder %v623, %v80
  %vm710 = vcmp.eq.s32.totalorder %v626, %v80
  %vm711 = vcmp.eq.s32.totalorder %v629, %v80
  %vm712 = vcmp.eq.s32.totalorder %v632, %v80
  %vm713 = vcmp.eq.s32.totalorder %v635, %v80
  %vm714 = vcmp.eq.s32.totalorder %v638, %v80
  %vm715 = vcmp.eq.s32.totalorder %v641, %v80
  %vm716 = vcmp.eq.s32.totalorder %v644, %v80
  %vm717 = vcmp.eq.s32.totalorder %v647, %v80
  %vm718 = vcmp.eq.s32.totalorder %v650, %v80
  %vm719 = vcmp.eq.s32.totalorder %v653, %v80
  %vm720 = vcmp.eq.s32.totalorder %v656, %v80
  %v721 = vsel %vm657, 1, 0
  %v722 = vsel %vm658, 1, 0
  %v723 = vsel %vm659, 1, 0
  %v724 = vsel %vm660, 1, 0
  %v725 = vsel %vm661, 1, 0
  %v726 = vsel %vm662, 1, 0
  %v727 = vsel %vm663, 1, 0
  %v728 = vsel %vm664, 1, 0
  %v729 = vsel %vm665, 1, 0
  %v730 = vsel %vm666, 1, 0
  %v731 = vsel %vm667, 1, 0
  %v732 = vsel %vm668, 1, 0
  %v733 = vsel %vm669, 1, 0
  %v734 = vsel %vm670, 1, 0
  %v735 = vsel %vm671, 1, 0
  %v736 = vsel %vm672, 1, 0
  %v737 = vsel %vm673, 1, 0
  %v738 = vsel %vm674, 1, 0
  %v739 = vsel %vm675, 1, 0
  %v740 = vsel %vm676, 1, 0
  %v741 = vsel %vm677, 1, 0
  %v742 = vsel %vm678, 1, 0
  %v743 = vsel %vm679, 1, 0
  %v744 = vsel %vm680, 1, 0
  %v745 = vsel %vm681, 1, 0
  %v746 = vsel %vm682, 1, 0
  %v747 = vsel %vm683, 1, 0
  %v748 = vsel %vm684, 1, 0
  %v749 = vsel %vm685, 1, 0
  %v750 = vsel %vm686, 1, 0
  %v751 = vsel %vm687, 1, 0
  %v752 = vsel %vm688, 1, 0
  %v753 = vsel %vm689, 1, 0
  %v754 = vsel %vm690, 1, 0
  %v755 = vsel %vm691, 1, 0
  %v756 = vsel %vm692, 1, 0
  %v757 = vsel %vm693, 1, 0
  %v758 = vsel %vm694, 1, 0
  %v759 = vsel %vm695, 1, 0
  %v760 = vsel %vm696, 1, 0
  %v761 = vsel %vm697, 1, 0
  %v762 = vsel %vm698, 1, 0
  %v763 = vsel %vm699, 1, 0
  %v764 = vsel %vm700, 1, 0
  %v765 = vsel %vm701, 1, 0
  %v766 = vsel %vm702, 1, 0
  %v767 = vsel %vm703, 1, 0
  %v768 = vsel %vm704, 1, 0
  %v769 = vsel %vm705, 1, 0
  %v770 = vsel %vm706, 1, 0
  %v771 = vsel %vm707, 1, 0
  %v772 = vsel %vm708, 1, 0
  %v773 = vsel %vm709, 1, 0
  %v774 = vsel %vm710, 1, 0
  %v775 = vsel %vm711, 1, 0
  %v776 = vsel %vm712, 1, 0
  %v777 = vsel %vm713, 1, 0
  %v778 = vsel %vm714, 1, 0
  %v779 = vsel %vm715, 1, 0
  %v780 = vsel %vm716, 1, 0
  %v781 = vsel %vm717, 1, 0
  %v782 = vsel %vm718, 1, 0
  %v783 = vsel %vm719, 1, 0
  %v784 = vsel %vm720, 1, 0
  %v785 = vcvt.s32.f32 %v721
  %v786 = vcvt.s32.f32 %v722
  %v787 = vcvt.s32.f32 %v723
  %v788 = vcvt.s32.f32 %v724
  %v789 = vcvt.s32.f32 %v725
  %v790 = vcvt.s32.f32 %v726
  %v791 = vcvt.s32.f32 %v727
  %v792 = vcvt.s32.f32 %v728
  %v793 = vcvt.s32.f32 %v729
  %v794 = vcvt.s32.f32 %v730
  %v795 = vcvt.s32.f32 %v731
  %v796 = vcvt.s32.f32 %v732
  %v797 = vcvt.s32.f32 %v733
  %v798 = vcvt.s32.f32 %v734
  %v799 = vcvt.s32.f32 %v735
  %v800 = vcvt.s32.f32 %v736
  %v801 = vcvt.s32.f32 %v737
  %v802 = vcvt.s32.f32 %v738
  %v803 = vcvt.s32.f32 %v739
  %v804 = vcvt.s32.f32 %v740
  %v805 = vcvt.s32.f32 %v741
  %v806 = vcvt.s32.f32 %v742
  %v807 = vcvt.s32.f32 %v743
  %v808 = vcvt.s32.f32 %v744
  %v809 = vcvt.s32.f32 %v745
  %v810 = vcvt.s32.f32 %v746
  %v811 = vcvt.s32.f32 %v747
  %v812 = vcvt.s32.f32 %v748
  %v813 = vcvt.s32.f32 %v749
  %v814 = vcvt.s32.f32 %v750
  %v815 = vcvt.s32.f32 %v751
  %v816 = vcvt.s32.f32 %v752
  %v817 = vcvt.s32.f32 %v753
  %v818 = vcvt.s32.f32 %v754
  %v819 = vcvt.s32.f32 %v755
  %v820 = vcvt.s32.f32 %v756
  %v821 = vcvt.s32.f32 %v757
  %v822 = vcvt.s32.f32 %v758
  %v823 = vcvt.s32.f32 %v759
  %v824 = vcvt.s32.f32 %v760
  %v825 = vcvt.s32.f32 %v761
  %v826 = vcvt.s32.f32 %v762
  %v827 = vcvt.s32.f32 %v763
  %v828 = vcvt.s32.f32 %v764
  %v829 = vcvt.s32.f32 %v765
  %v830 = vcvt.s32.f32 %v766
  %v831 = vcvt.s32.f32 %v767
  %v832 = vcvt.s32.f32 %v768
  %v833 = vcvt.s32.f32 %v769
  %v834 = vcvt.s32.f32 %v770
  %v835 = vcvt.s32.f32 %v771
  %v836 = vcvt.s32.f32 %v772
  %v837 = vcvt.s32.f32 %v773
  %v838 = vcvt.s32.f32 %v774
  %v839 = vcvt.s32.f32 %v775
  %v840 = vcvt.s32.f32 %v776
  %v841 = vcvt.s32.f32 %v777
  %v842 = vcvt.s32.f32 %v778
  %v843 = vcvt.s32.f32 %v779
  %v844 = vcvt.s32.f32 %v780
  %v845 = vcvt.s32.f32 %v781
  %v846 = vcvt.s32.f32 %v782
  %v847 = vcvt.s32.f32 %v783
  %v848 = vcvt.s32.f32 %v784
  %v849 = vadd.f32 %v401, %v785
  %v850 = vadd.f32 %v402, %v786
  %v851 = vadd.f32 %v403, %v787
  %v852 = vadd.f32 %v404, %v788
  %v853 = vadd.f32 %v405, %v789
  %v854 = vadd.f32 %v406, %v790
  %v855 = vadd.f32 %v407, %v791
  %v856 = vadd.f32 %v408, %v792
  %v857 = vadd.f32 %v409, %v793
  %v858 = vadd.f32 %v410, %v794
  %v859 = vadd.f32 %v411, %v795
  %v860 = vadd.f32 %v412, %v796
  %v861 = vadd.f32 %v413, %v797
  %v862 = vadd.f32 %v414, %v798
  %v863 = vadd.f32 %v415, %v799
  %v864 = vadd.f32 %v416, %v800
  %v865 = vadd.f32 %v417, %v801
  %v866 = vadd.f32 %v418, %v802
  %v867 = vadd.f32 %v419, %v803
  %v868 = vadd.f32 %v420, %v804
  %v869 = vadd.f32 %v421, %v805
  %v870 = vadd.f32 %v422, %v806
  %v871 = vadd.f32 %v423, %v807
  %v872 = vadd.f32 %v424, %v808
  %v873 = vadd.f32 %v425, %v809
  %v874 = vadd.f32 %v426, %v810
  %v875 = vadd.f32 %v427, %v811
  %v876 = vadd.f32 %v428, %v812
  %v877 = vadd.f32 %v429, %v813
  %v878 = vadd.f32 %v430, %v814
  %v879 = vadd.f32 %v431, %v815
  %v880 = vadd.f32 %v432, %v816
  %v881 = vadd.f32 %v433, %v817
  %v882 = vadd.f32 %v434, %v818
  %v883 = vadd.f32 %v435, %v819
  %v884 = vadd.f32 %v436, %v820
  %v885 = vadd.f32 %v437, %v821
  %v886 = vadd.f32 %v438, %v822
  %v887 = vadd.f32 %v439, %v823
  %v888 = vadd.f32 %v440, %v824
  %v889 = vadd.f32 %v441, %v825
  %v890 = vadd.f32 %v442, %v826
  %v891 = vadd.f32 %v443, %v827
  %v892 = vadd.f32 %v444, %v828
  %v893 = vadd.f32 %v445, %v829
  %v894 = vadd.f32 %v446, %v830
  %v895 = vadd.f32 %v447, %v831
  %v896 = vadd.f32 %v448, %v832
  %v897 = vadd.f32 %v449, %v833
  %v898 = vadd.f32 %v450, %v834
  %v899 = vadd.f32 %v451, %v835
  %v900 = vadd.f32 %v452, %v836
  %v901 = vadd.f32 %v453, %v837
  %v902 = vadd.f32 %v454, %v838
  %v903 = vadd.f32 %v455, %v839
  %v904 = vadd.f32 %v456, %v840
  %v905 = vadd.f32 %v457, %v841
  %v906 = vadd.f32 %v458, %v842
  %v907 = vadd.f32 %v459, %v843
  %v908 = vadd.f32 %v460, %v844
  %v909 = vadd.f32 %v461, %v845
  %v910 = vadd.f32 %v462, %v846
  %v911 = vadd.f32 %v463, %v847
  %v912 = vadd.f32 %v464, %v848
  %913 = vset.pattern.permute.xlu0 2
  %914 = vperm.xlu0 %913, %v15
  %v915 = vpop.permute.xlu0 %914
  %916 = vset.pattern.permute.xlu0 2
  %917 = vperm.xlu0 %916, %v16
  %v918 = vpop.permute.xlu0 %917
  %919 = vset.pattern.permute.xlu0 2
  %920 = vperm.xlu0 %919, %v17
  %v921 = vpop.permute.xlu0 %920
  %922 = vset.pattern.permute.xlu0 2
  %923 = vperm.xlu0 %922, %v18
  %v924 = vpop.permute.xlu0 %923
  %925 = vset.pattern.permute.xlu0 2
  %926 = vperm.xlu0 %925, %v19
  %v927 = vpop.permute.xlu0 %926
  %928 = vset.pattern.permute.xlu0 2
  %929 = vperm.xlu0 %928, %v20
  %v930 = vpop.permute.xlu0 %929
  %931 = vset.pattern.permute.xlu0 2
  %932 = vperm.xlu0 %931, %v21
  %v933 = vpop.permute.xlu0 %932
  %934 = vset.pattern.permute.xlu0 2
  %935 = vperm.xlu0 %934, %v22
  %v936 = vpop.permute.xlu0 %935
  %937 = vset.pattern.permute.xlu0 2
  %938 = vperm.xlu0 %937, %v23
  %v939 = vpop.permute.xlu0 %938
  %940 = vset.pattern.permute.xlu0 2
  %941 = vperm.xlu0 %940, %v24
  %v942 = vpop.permute.xlu0 %941
  %943 = vset.pattern.permute.xlu0 2
  %944 = vperm.xlu0 %943, %v25
  %v945 = vpop.permute.xlu0 %944
  %946 = vset.pattern.permute.xlu0 2
  %947 = vperm.xlu0 %946, %v26
  %v948 = vpop.permute.xlu0 %947
  %949 = vset.pattern.permute.xlu0 2
  %950 = vperm.xlu0 %949, %v27
  %v951 = vpop.permute.xlu0 %950
  %952 = vset.pattern.permute.xlu0 2
  %953 = vperm.xlu0 %952, %v28
  %v954 = vpop.permute.xlu0 %953
  %955 = vset.pattern.permute.xlu0 2
  %956 = vperm.xlu0 %955, %v29
  %v957 = vpop.permute.xlu0 %956
  %958 = vset.pattern.permute.xlu0 2
  %959 = vperm.xlu0 %958, %v30
  %v960 = vpop.permute.xlu0 %959
  %961 = vset.pattern.permute.xlu0 2
  %962 = vperm.xlu0 %961, %v31
  %v963 = vpop.permute.xlu0 %962
  %964 = vset.pattern.permute.xlu0 2
  %965 = vperm.xlu0 %964, %v32
  %v966 = vpop.permute.xlu0 %965
  %967 = vset.pattern.permute.xlu0 2
  %968 = vperm.xlu0 %967, %v33
  %v969 = vpop.permute.xlu0 %968
  %970 = vset.pattern.permute.xlu0 2
  %971 = vperm.xlu0 %970, %v34
  %v972 = vpop.permute.xlu0 %971
  %973 = vset.pattern.permute.xlu0 2
  %974 = vperm.xlu0 %973, %v35
  %v975 = vpop.permute.xlu0 %974
  %976 = vset.pattern.permute.xlu0 2
  %977 = vperm.xlu0 %976, %v36
  %v978 = vpop.permute.xlu0 %977
  %979 = vset.pattern.permute.xlu0 2
  %980 = vperm.xlu0 %979, %v37
  %v981 = vpop.permute.xlu0 %980
  %982 = vset.pattern.permute.xlu0 2
  %983 = vperm.xlu0 %982, %v38
  %v984 = vpop.permute.xlu0 %983
  %985 = vset.pattern.permute.xlu0 2
  %986 = vperm.xlu0 %985, %v39
  %v987 = vpop.permute.xlu0 %986
  %988 = vset.pattern.permute.xlu0 2
  %989 = vperm.xlu0 %988, %v40
  %v990 = vpop.permute.xlu0 %989
  %991 = vset.pattern.permute.xlu0 2
  %992 = vperm.xlu0 %991, %v41
  %v993 = vpop.permute.xlu0 %992
  %994 = vset.pattern.permute.xlu0 2
  %995 = vperm.xlu0 %994, %v42
  %v996 = vpop.permute.xlu0 %995
  %997 = vset.pattern.permute.xlu0 2
  %998 = vperm.xlu0 %997, %v43
  %v999 = vpop.permute.xlu0 %998
  %1000 = vset.pattern.permute.xlu0 2
  %1001 = vperm.xlu0 %1000, %v44
  %v1002 = vpop.permute.xlu0 %1001
  %1003 = vset.pattern.permute.xlu0 2
  %1004 = vperm.xlu0 %1003, %v45
  %v1005 = vpop.permute.xlu0 %1004
  %1006 = vset.pattern.permute.xlu0 2
  %1007 = vperm.xlu0 %1006, %v46
  %v1008 = vpop.permute.xlu0 %1007
  %1009 = vset.pattern.permute.xlu0 2
  %1010 = vperm.xlu0 %1009, %v47
  %v1011 = vpop.permute.xlu0 %1010
  %1012 = vset.pattern.permute.xlu0 2
  %1013 = vperm.xlu0 %1012, %v48
  %v1014 = vpop.permute.xlu0 %1013
  %1015 = vset.pattern.permute.xlu0 2
  %1016 = vperm.xlu0 %1015, %v49
  %v1017 = vpop.permute.xlu0 %1016
  %1018 = vset.pattern.permute.xlu0 2
  %1019 = vperm.xlu0 %1018, %v50
  %v1020 = vpop.permute.xlu0 %1019
  %1021 = vset.pattern.permute.xlu0 2
  %1022 = vperm.xlu0 %1021, %v51
  %v1023 = vpop.permute.xlu0 %1022
  %1024 = vset.pattern.permute.xlu0 2
  %1025 = vperm.xlu0 %1024, %v52
  %v1026 = vpop.permute.xlu0 %1025
  %1027 = vset.pattern.permute.xlu0 2
  %1028 = vperm.xlu0 %1027, %v53
  %v1029 = vpop.permute.xlu0 %1028
  %1030 = vset.pattern.permute.xlu0 2
  %1031 = vperm.xlu0 %1030, %v54
  %v1032 = vpop.permute.xlu0 %1031
  %1033 = vset.pattern.permute.xlu0 2
  %1034 = vperm.xlu0 %1033, %v55
  %v1035 = vpop.permute.xlu0 %1034
  %1036 = vset.pattern.permute.xlu0 2
  %1037 = vperm.xlu0 %1036, %v56
  %v1038 = vpop.permute.xlu0 %1037
  %1039 = vset.pattern.permute.xlu0 2
  %1040 = vperm.xlu0 %1039, %v57
  %v1041 = vpop.permute.xlu0 %1040
  %1042 = vset.pattern.permute.xlu0 2
  %1043 = vperm.xlu0 %1042, %v58
  %v1044 = vpop.permute.xlu0 %1043
  %1045 = vset.pattern.permute.xlu0 2
  %1046 = vperm.xlu0 %1045, %v59
  %v1047 = vpop.permute.xlu0 %1046
  %1048 = vset.pattern.permute.xlu0 2
  %1049 = vperm.xlu0 %1048, %v60
  %v1050 = vpop.permute.xlu0 %1049
  %1051 = vset.pattern.permute.xlu0 2
  %1052 = vperm.xlu0 %1051, %v61
  %v1053 = vpop.permute.xlu0 %1052
  %1054 = vset.pattern.permute.xlu0 2
  %1055 = vperm.xlu0 %1054, %v62
  %v1056 = vpop.permute.xlu0 %1055
  %1057 = vset.pattern.permute.xlu0 2
  %1058 = vperm.xlu0 %1057, %v63
  %v1059 = vpop.permute.xlu0 %1058
  %1060 = vset.pattern.permute.xlu0 2
  %1061 = vperm.xlu0 %1060, %v64
  %v1062 = vpop.permute.xlu0 %1061
  %1063 = vset.pattern.permute.xlu0 2
  %1064 = vperm.xlu0 %1063, %v65
  %v1065 = vpop.permute.xlu0 %1064
  %1066 = vset.pattern.permute.xlu0 2
  %1067 = vperm.xlu0 %1066, %v66
  %v1068 = vpop.permute.xlu0 %1067
  %1069 = vset.pattern.permute.xlu0 2
  %1070 = vperm.xlu0 %1069, %v67
  %v1071 = vpop.permute.xlu0 %1070
  %1072 = vset.pattern.permute.xlu0 2
  %1073 = vperm.xlu0 %1072, %v68
  %v1074 = vpop.permute.xlu0 %1073
  %1075 = vset.pattern.permute.xlu0 2
  %1076 = vperm.xlu0 %1075, %v69
  %v1077 = vpop.permute.xlu0 %1076
  %1078 = vset.pattern.permute.xlu0 2
  %1079 = vperm.xlu0 %1078, %v70
  %v1080 = vpop.permute.xlu0 %1079
  %1081 = vset.pattern.permute.xlu0 2
  %1082 = vperm.xlu0 %1081, %v71
  %v1083 = vpop.permute.xlu0 %1082
  %1084 = vset.pattern.permute.xlu0 2
  %1085 = vperm.xlu0 %1084, %v72
  %v1086 = vpop.permute.xlu0 %1085
  %1087 = vset.pattern.permute.xlu0 2
  %1088 = vperm.xlu0 %1087, %v73
  %v1089 = vpop.permute.xlu0 %1088
  %1090 = vset.pattern.permute.xlu0 2
  %1091 = vperm.xlu0 %1090, %v74
  %v1092 = vpop.permute.xlu0 %1091
  %1093 = vset.pattern.permute.xlu0 2
  %1094 = vperm.xlu0 %1093, %v75
  %v1095 = vpop.permute.xlu0 %1094
  %1096 = vset.pattern.permute.xlu0 2
  %1097 = vperm.xlu0 %1096, %v76
  %v1098 = vpop.permute.xlu0 %1097
  %1099 = vset.pattern.permute.xlu0 2
  %1100 = vperm.xlu0 %1099, %v77
  %v1101 = vpop.permute.xlu0 %1100
  %1102 = vset.pattern.permute.xlu0 2
  %1103 = vperm.xlu0 %1102, %v78
  %v1104 = vpop.permute.xlu0 %1103
  %vm1105 = vcmp.eq.s32.totalorder %v915, %v80
  %vm1106 = vcmp.eq.s32.totalorder %v918, %v80
  %vm1107 = vcmp.eq.s32.totalorder %v921, %v80
  %vm1108 = vcmp.eq.s32.totalorder %v924, %v80
  %vm1109 = vcmp.eq.s32.totalorder %v927, %v80
  %vm1110 = vcmp.eq.s32.totalorder %v930, %v80
  %vm1111 = vcmp.eq.s32.totalorder %v933, %v80
  %vm1112 = vcmp.eq.s32.totalorder %v936, %v80
  %vm1113 = vcmp.eq.s32.totalorder %v939, %v80
  %vm1114 = vcmp.eq.s32.totalorder %v942, %v80
  %vm1115 = vcmp.eq.s32.totalorder %v945, %v80
  %vm1116 = vcmp.eq.s32.totalorder %v948, %v80
  %vm1117 = vcmp.eq.s32.totalorder %v951, %v80
  %vm1118 = vcmp.eq.s32.totalorder %v954, %v80
  %vm1119 = vcmp.eq.s32.totalorder %v957, %v80
  %vm1120 = vcmp.eq.s32.totalorder %v960, %v80
  %vm1121 = vcmp.eq.s32.totalorder %v963, %v80
  %vm1122 = vcmp.eq.s32.totalorder %v966, %v80
  %vm1123 = vcmp.eq.s32.totalorder %v969, %v80
  %vm1124 = vcmp.eq.s32.totalorder %v972, %v80
  %vm1125 = vcmp.eq.s32.totalorder %v975, %v80
  %vm1126 = vcmp.eq.s32.totalorder %v978, %v80
  %vm1127 = vcmp.eq.s32.totalorder %v981, %v80
  %vm1128 = vcmp.eq.s32.totalorder %v984, %v80
  %vm1129 = vcmp.eq.s32.totalorder %v987, %v80
  %vm1130 = vcmp.eq.s32.totalorder %v990, %v80
  %vm1131 = vcmp.eq.s32.totalorder %v993, %v80
  %vm1132 = vcmp.eq.s32.totalorder %v996, %v80
  %vm1133 = vcmp.eq.s32.totalorder %v999, %v80
  %vm1134 = vcmp.eq.s32.totalorder %v1002, %v80
  %vm1135 = vcmp.eq.s32.totalorder %v1005, %v80
  %vm1136 = vcmp.eq.s32.totalorder %v1008, %v80
  %vm1137 = vcmp.eq.s32.totalorder %v1011, %v80
  %vm1138 = vcmp.eq.s32.totalorder %v1014, %v80
  %vm1139 = vcmp.eq.s32.totalorder %v1017, %v80
  %vm1140 = vcmp.eq.s32.totalorder %v1020, %v80
  %vm1141 = vcmp.eq.s32.totalorder %v1023, %v80
  %vm1142 = vcmp.eq.s32.totalorder %v1026, %v80
  %vm1143 = vcmp.eq.s32.totalorder %v1029, %v80
  %vm1144 = vcmp.eq.s32.totalorder %v1032, %v80
  %vm1145 = vcmp.eq.s32.totalorder %v1035, %v80
  %vm1146 = vcmp.eq.s32.totalorder %v1038, %v80
  %vm1147 = vcmp.eq.s32.totalorder %v1041, %v80
  %vm1148 = vcmp.eq.s32.totalorder %v1044, %v80
  %vm1149 = vcmp.eq.s32.totalorder %v1047, %v80
  %vm1150 = vcmp.eq.s32.totalorder %v1050, %v80
  %vm1151 = vcmp.eq.s32.totalorder %v1053, %v80
  %vm1152 = vcmp.eq.s32.totalorder %v1056, %v80
  %vm1153 = vcmp.eq.s32.totalorder %v1059, %v80
  %vm1154 = vcmp.eq.s32.totalorder %v1062, %v80
  %vm1155 = vcmp.eq.s32.totalorder %v1065, %v80
  %vm1156 = vcmp.eq.s32.totalorder %v1068, %v80
  %vm1157 = vcmp.eq.s32.totalorder %v1071, %v80
  %vm1158 = vcmp.eq.s32.totalorder %v1074, %v80
  %vm1159 = vcmp.eq.s32.totalorder %v1077, %v80
  %vm1160 = vcmp.eq.s32.totalorder %v1080, %v80
  %vm1161 = vcmp.eq.s32.totalorder %v1083, %v80
  %vm1162 = vcmp.eq.s32.totalorder %v1086, %v80
  %vm1163 = vcmp.eq.s32.totalorder %v1089, %v80
  %vm1164 = vcmp.eq.s32.totalorder %v1092, %v80
  %vm1165 = vcmp.eq.s32.totalorder %v1095, %v80
  %vm1166 = vcmp.eq.s32.totalorder %v1098, %v80
  %vm1167 = vcmp.eq.s32.totalorder %v1101, %v80
  %vm1168 = vcmp.eq.s32.totalorder %v1104, %v80
  %v1169 = vsel %vm1105, 1, 0
  %v1170 = vsel %vm1106, 1, 0
  %v1171 = vsel %vm1107, 1, 0
  %v1172 = vsel %vm1108, 1, 0
  %v1173 = vsel %vm1109, 1, 0
  %v1174 = vsel %vm1110, 1, 0
  %v1175 = vsel %vm1111, 1, 0
  %v1176 = vsel %vm1112, 1, 0
  %v1177 = vsel %vm1113, 1, 0
  %v1178 = vsel %vm1114, 1, 0
  %v1179 = vsel %vm1115, 1, 0
  %v1180 = vsel %vm1116, 1, 0
  %v1181 = vsel %vm1117, 1, 0
  %v1182 = vsel %vm1118, 1, 0
  %v1183 = vsel %vm1119, 1, 0
  %v1184 = vsel %vm1120, 1, 0
  %v1185 = vsel %vm1121, 1, 0
  %v1186 = vsel %vm1122, 1, 0
  %v1187 = vsel %vm1123, 1, 0
  %v1188 = vsel %vm1124, 1, 0
  %v1189 = vsel %vm1125, 1, 0
  %v1190 = vsel %vm1126, 1, 0
  %v1191 = vsel %vm1127, 1, 0
  %v1192 = vsel %vm1128, 1, 0
  %v1193 = vsel %vm1129, 1, 0
  %v1194 = vsel %vm1130, 1, 0
  %v1195 = vsel %vm1131, 1, 0
  %v1196 = vsel %vm1132, 1, 0
  %v1197 = vsel %vm1133, 1, 0
  %v1198 = vsel %vm1134, 1, 0
  %v1199 = vsel %vm1135, 1, 0
  %v1200 = vsel %vm1136, 1, 0
  %v1201 = vsel %vm1137, 1, 0
  %v1202 = vsel %vm1138, 1, 0
  %v1203 = vsel %vm1139, 1, 0
  %v1204 = vsel %vm1140, 1, 0
  %v1205 = vsel %vm1141, 1, 0
  %v1206 = vsel %vm1142, 1, 0
  %v1207 = vsel %vm1143, 1, 0
  %v1208 = vsel %vm1144, 1, 0
  %v1209 = vsel %vm1145, 1, 0
  %v1210 = vsel %vm1146, 1, 0
  %v1211 = vsel %vm1147, 1, 0
  %v1212 = vsel %vm1148, 1, 0
  %v1213 = vsel %vm1149, 1, 0
  %v1214 = vsel %vm1150, 1, 0
  %v1215 = vsel %vm1151, 1, 0
  %v1216 = vsel %vm1152, 1, 0
  %v1217 = vsel %vm1153, 1, 0
  %v1218 = vsel %vm1154, 1, 0
  %v1219 = vsel %vm1155, 1, 0
  %v1220 = vsel %vm1156, 1, 0
  %v1221 = vsel %vm1157, 1, 0
  %v1222 = vsel %vm1158, 1, 0
  %v1223 = vsel %vm1159, 1, 0
  %v1224 = vsel %vm1160, 1, 0
  %v1225 = vsel %vm1161, 1, 0
  %v1226 = vsel %vm1162, 1, 0
  %v1227 = vsel %vm1163, 1, 0
  %v1228 = vsel %vm1164, 1, 0
  %v1229 = vsel %vm1165, 1, 0
  %v1230 = vsel %vm1166, 1, 0
  %v1231 = vsel %vm1167, 1, 0
  %v1232 = vsel %vm1168, 1, 0
  %v1233 = vcvt.s32.f32 %v1169
  %v1234 = vcvt.s32.f32 %v1170
  %v1235 = vcvt.s32.f32 %v1171
  %v1236 = vcvt.s32.f32 %v1172
  %v1237 = vcvt.s32.f32 %v1173
  %v1238 = vcvt.s32.f32 %v1174
  %v1239 = vcvt.s32.f32 %v1175
  %v1240 = vcvt.s32.f32 %v1176
  %v1241 = vcvt.s32.f32 %v1177
  %v1242 = vcvt.s32.f32 %v1178
  %v1243 = vcvt.s32.f32 %v1179
  %v1244 = vcvt.s32.f32 %v1180
  %v1245 = vcvt.s32.f32 %v1181
  %v1246 = vcvt.s32.f32 %v1182
  %v1247 = vcvt.s32.f32 %v1183
  %v1248 = vcvt.s32.f32 %v1184
  %v1249 = vcvt.s32.f32 %v1185
  %v1250 = vcvt.s32.f32 %v1186
  %v1251 = vcvt.s32.f32 %v1187
  %v1252 = vcvt.s32.f32 %v1188
  %v1253 = vcvt.s32.f32 %v1189
  %v1254 = vcvt.s32.f32 %v1190
  %v1255 = vcvt.s32.f32 %v1191
  %v1256 = vcvt.s32.f32 %v1192
  %v1257 = vcvt.s32.f32 %v1193
  %v1258 = vcvt.s32.f32 %v1194
  %v1259 = vcvt.s32.f32 %v1195
  %v1260 = vcvt.s32.f32 %v1196
  %v1261 = vcvt.s32.f32 %v1197
  %v1262 = vcvt.s32.f32 %v1198
  %v1263 = vcvt.s32.f32 %v1199
  %v1264 = vcvt.s32.f32 %v1200
  %v1265 = vcvt.s32.f32 %v1201
  %v1266 = vcvt.s32.f32 %v1202
  %v1267 = vcvt.s32.f32 %v1203
  %v1268 = vcvt.s32.f32 %v1204
  %v1269 = vcvt.s32.f32 %v1205
  %v1270 = vcvt.s32.f32 %v1206
  %v1271 = vcvt.s32.f32 %v1207
  %v1272 = vcvt.s32.f32 %v1208
  %v1273 = vcvt.s32.f32 %v1209
  %v1274 = vcvt.s32.f32 %v1210
  %v1275 = vcvt.s32.f32 %v1211
  %v1276 = vcvt.s32.f32 %v1212
  %v1277 = vcvt.s32.f32 %v1213
  %v1278 = vcvt.s32.f32 %v1214
  %v1279 = vcvt.s32.f32 %v1215
  %v1280 = vcvt.s32.f32 %v1216
  %v1281 = vcvt.s32.f32 %v1217
  %v1282 = vcvt.s32.f32 %v1218
  %v1283 = vcvt.s32.f32 %v1219
  %v1284 = vcvt.s32.f32 %v1220
  %v1285 = vcvt.s32.f32 %v1221
  %v1286 = vcvt.s32.f32 %v1222
  %v1287 = vcvt.s32.f32 %v1223
  %v1288 = vcvt.s32.f32 %v1224
  %v1289 = vcvt.s32.f32 %v1225
  %v1290 = vcvt.s32.f32 %v1226
  %v1291 = vcvt.s32.f32 %v1227
  %v1292 = vcvt.s32.f32 %v1228
  %v1293 = vcvt.s32.f32 %v1229
  %v1294 = vcvt.s32.f32 %v1230
  %v1295 = vcvt.s32.f32 %v1231
  %v1296 = vcvt.s32.f32 %v1232
  %v1297 = vadd.f32 %v849, %v1233
  %v1298 = vadd.f32 %v850, %v1234
  %v1299 = vadd.f32 %v851, %v1235
  %v1300 = vadd.f32 %v852, %v1236
  %v1301 = vadd.f32 %v853, %v1237
  %v1302 = vadd.f32 %v854, %v1238
  %v1303 = vadd.f32 %v855, %v1239
  %v1304 = vadd.f32 %v856, %v1240
  %v1305 = vadd.f32 %v857, %v1241
  %v1306 = vadd.f32 %v858, %v1242
  %v1307 = vadd.f32 %v859, %v1243
  %v1308 = vadd.f32 %v860, %v1244
  %v1309 = vadd.f32 %v861, %v1245
  %v1310 = vadd.f32 %v862, %v1246
  %v1311 = vadd.f32 %v863, %v1247
  %v1312 = vadd.f32 %v864, %v1248
  %v1313 = vadd.f32 %v865, %v1249
  %v1314 = vadd.f32 %v866, %v1250
  %v1315 = vadd.f32 %v867, %v1251
  %v1316 = vadd.f32 %v868, %v1252
  %v1317 = vadd.f32 %v869, %v1253
  %v1318 = vadd.f32 %v870, %v1254
  %v1319 = vadd.f32 %v871, %v1255
  %v1320 = vadd.f32 %v872, %v1256
  %v1321 = vadd.f32 %v873, %v1257
  %v1322 = vadd.f32 %v874, %v1258
  %v1323 = vadd.f32 %v875, %v1259
  %v1324 = vadd.f32 %v876, %v1260
  %v1325 = vadd.f32 %v877, %v1261
  %v1326 = vadd.f32 %v878, %v1262
  %v1327 = vadd.f32 %v879, %v1263
  %v1328 = vadd.f32 %v880, %v1264
  %v1329 = vadd.f32 %v881, %v1265
  %v1330 = vadd.f32 %v882, %v1266
  %v1331 = vadd.f32 %v883, %v1267
  %v1332 = vadd.f32 %v884, %v1268
  %v1333 = vadd.f32 %v885, %v1269
  %v1334 = vadd.f32 %v886, %v1270
  %v1335 = vadd.f32 %v887, %v1271
  %v1336 = vadd.f32 %v888, %v1272
  %v1337 = vadd.f32 %v889, %v1273
  %v1338 = vadd.f32 %v890, %v1274
  %v1339 = vadd.f32 %v891, %v1275
  %v1340 = vadd.f32 %v892, %v1276
  %v1341 = vadd.f32 %v893, %v1277
  %v1342 = vadd.f32 %v894, %v1278
  %v1343 = vadd.f32 %v895, %v1279
  %v1344 = vadd.f32 %v896, %v1280
  %v1345 = vadd.f32 %v897, %v1281
  %v1346 = vadd.f32 %v898, %v1282
  %v1347 = vadd.f32 %v899, %v1283
  %v1348 = vadd.f32 %v900, %v1284
  %v1349 = vadd.f32 %v901, %v1285
  %v1350 = vadd.f32 %v902, %v1286
  %v1351 = vadd.f32 %v903, %v1287
  %v1352 = vadd.f32 %v904, %v1288
  %v1353 = vadd.f32 %v905, %v1289
  %v1354 = vadd.f32 %v906, %v1290
  %v1355 = vadd.f32 %v907, %v1291
  %v1356 = vadd.f32 %v908, %v1292
  %v1357 = vadd.f32 %v909, %v1293
  %v1358 = vadd.f32 %v910, %v1294
  %v1359 = vadd.f32 %v911, %v1295
  %v1360 = vadd.f32 %v912, %v1296
  %1361 = vset.pattern.permute.xlu0 3
  %1362 = vperm.xlu0 %1361, %v15
  %v1363 = vpop.permute.xlu0 %1362
  %1364 = vset.pattern.permute.xlu0 3
  %1365 = vperm.xlu0 %1364, %v16
  %v1366 = vpop.permute.xlu0 %1365
  %1367 = vset.pattern.permute.xlu0 3
  %1368 = vperm.xlu0 %1367, %v17
  %v1369 = vpop.permute.xlu0 %1368
  %1370 = vset.pattern.permute.xlu0 3
  %1371 = vperm.xlu0 %1370, %v18
  %v1372 = vpop.permute.xlu0 %1371
  %1373 = vset.pattern.permute.xlu0 3
  %1374 = vperm.xlu0 %1373, %v19
  %v1375 = vpop.permute.xlu0 %1374
  %1376 = vset.pattern.permute.xlu0 3
  %1377 = vperm.xlu0 %1376, %v20
  %v1378 = vpop.permute.xlu0 %1377
  %1379 = vset.pattern.permute.xlu0 3
  %1380 = vperm.xlu0 %1379, %v21
  %v1381 = vpop.permute.xlu0 %1380
  %1382 = vset.pattern.permute.xlu0 3
  %1383 = vperm.xlu0 %1382, %v22
  %v1384 = vpop.permute.xlu0 %1383
  %1385 = vset.pattern.permute.xlu0 3
  %1386 = vperm.xlu0 %1385, %v23
  %v1387 = vpop.permute.xlu0 %1386
  %1388 = vset.pattern.permute.xlu0 3
  %1389 = vperm.xlu0 %1388, %v24
  %v1390 = vpop.permute.xlu0 %1389
  %1391 = vset.pattern.permute.xlu0 3
  %1392 = vperm.xlu0 %1391, %v25
  %v1393 = vpop.permute.xlu0 %1392
  %1394 = vset.pattern.permute.xlu0 3
  %1395 = vperm.xlu0 %1394, %v26
  %v1396 = vpop.permute.xlu0 %1395
  %1397 = vset.pattern.permute.xlu0 3
  %1398 = vperm.xlu0 %1397, %v27
  %v1399 = vpop.permute.xlu0 %1398
  %1400 = vset.pattern.permute.xlu0 3
  %1401 = vperm.xlu0 %1400, %v28
  %v1402 = vpop.permute.xlu0 %1401
  %1403 = vset.pattern.permute.xlu0 3
  %1404 = vperm.xlu0 %1403, %v29
  %v1405 = vpop.permute.xlu0 %1404
  %1406 = vset.pattern.permute.xlu0 3
  %1407 = vperm.xlu0 %1406, %v30
  %v1408 = vpop.permute.xlu0 %1407
  %1409 = vset.pattern.permute.xlu0 3
  %1410 = vperm.xlu0 %1409, %v31
  %v1411 = vpop.permute.xlu0 %1410
  %1412 = vset.pattern.permute.xlu0 3
  %1413 = vperm.xlu0 %1412, %v32
  %v1414 = vpop.permute.xlu0 %1413
  %1415 = vset.pattern.permute.xlu0 3
  %1416 = vperm.xlu0 %1415, %v33
  %v1417 = vpop.permute.xlu0 %1416
  %1418 = vset.pattern.permute.xlu0 3
  %1419 = vperm.xlu0 %1418, %v34
  %v1420 = vpop.permute.xlu0 %1419
  %1421 = vset.pattern.permute.xlu0 3
  %1422 = vperm.xlu0 %1421, %v35
  %v1423 = vpop.permute.xlu0 %1422
  %1424 = vset.pattern.permute.xlu0 3
  %1425 = vperm.xlu0 %1424, %v36
  %v1426 = vpop.permute.xlu0 %1425
  %1427 = vset.pattern.permute.xlu0 3
  %1428 = vperm.xlu0 %1427, %v37
  %v1429 = vpop.permute.xlu0 %1428
  %1430 = vset.pattern.permute.xlu0 3
  %1431 = vperm.xlu0 %1430, %v38
  %v1432 = vpop.permute.xlu0 %1431
  %1433 = vset.pattern.permute.xlu0 3
  %1434 = vperm.xlu0 %1433, %v39
  %v1435 = vpop.permute.xlu0 %1434
  %1436 = vset.pattern.permute.xlu0 3
  %1437 = vperm.xlu0 %1436, %v40
  %v1438 = vpop.permute.xlu0 %1437
  %1439 = vset.pattern.permute.xlu0 3
  %1440 = vperm.xlu0 %1439, %v41
  %v1441 = vpop.permute.xlu0 %1440
  %1442 = vset.pattern.permute.xlu0 3
  %1443 = vperm.xlu0 %1442, %v42
  %v1444 = vpop.permute.xlu0 %1443
  %1445 = vset.pattern.permute.xlu0 3
  %1446 = vperm.xlu0 %1445, %v43
  %v1447 = vpop.permute.xlu0 %1446
  %1448 = vset.pattern.permute.xlu0 3
  %1449 = vperm.xlu0 %1448, %v44
  %v1450 = vpop.permute.xlu0 %1449
  %1451 = vset.pattern.permute.xlu0 3
  %1452 = vperm.xlu0 %1451, %v45
  %v1453 = vpop.permute.xlu0 %1452
  %1454 = vset.pattern.permute.xlu0 3
  %1455 = vperm.xlu0 %1454, %v46
  %v1456 = vpop.permute.xlu0 %1455
  %1457 = vset.pattern.permute.xlu0 3
  %1458 = vperm.xlu0 %1457, %v47
  %v1459 = vpop.permute.xlu0 %1458
  %1460 = vset.pattern.permute.xlu0 3
  %1461 = vperm.xlu0 %1460, %v48
  %v1462 = vpop.permute.xlu0 %1461
  %1463 = vset.pattern.permute.xlu0 3
  %1464 = vperm.xlu0 %1463, %v49
  %v1465 = vpop.permute.xlu0 %1464
  %1466 = vset.pattern.permute.xlu0 3
  %1467 = vperm.xlu0 %1466, %v50
  %v1468 = vpop.permute.xlu0 %1467
  %1469 = vset.pattern.permute.xlu0 3
  %1470 = vperm.xlu0 %1469, %v51
  %v1471 = vpop.permute.xlu0 %1470
  %1472 = vset.pattern.permute.xlu0 3
  %1473 = vperm.xlu0 %1472, %v52
  %v1474 = vpop.permute.xlu0 %1473
  %1475 = vset.pattern.permute.xlu0 3
  %1476 = vperm.xlu0 %1475, %v53
  %v1477 = vpop.permute.xlu0 %1476
  %1478 = vset.pattern.permute.xlu0 3
  %1479 = vperm.xlu0 %1478, %v54
  %v1480 = vpop.permute.xlu0 %1479
  %1481 = vset.pattern.permute.xlu0 3
  %1482 = vperm.xlu0 %1481, %v55
  %v1483 = vpop.permute.xlu0 %1482
  %1484 = vset.pattern.permute.xlu0 3
  %1485 = vperm.xlu0 %1484, %v56
  %v1486 = vpop.permute.xlu0 %1485
  %1487 = vset.pattern.permute.xlu0 3
  %1488 = vperm.xlu0 %1487, %v57
  %v1489 = vpop.permute.xlu0 %1488
  %1490 = vset.pattern.permute.xlu0 3
  %1491 = vperm.xlu0 %1490, %v58
  %v1492 = vpop.permute.xlu0 %1491
  %1493 = vset.pattern.permute.xlu0 3
  %1494 = vperm.xlu0 %1493, %v59
  %v1495 = vpop.permute.xlu0 %1494
  %1496 = vset.pattern.permute.xlu0 3
  %1497 = vperm.xlu0 %1496, %v60
  %v1498 = vpop.permute.xlu0 %1497
  %1499 = vset.pattern.permute.xlu0 3
  %1500 = vperm.xlu0 %1499, %v61
  %v1501 = vpop.permute.xlu0 %1500
  %1502 = vset.pattern.permute.xlu0 3
  %1503 = vperm.xlu0 %1502, %v62
  %v1504 = vpop.permute.xlu0 %1503
  %1505 = vset.pattern.permute.xlu0 3
  %1506 = vperm.xlu0 %1505, %v63
  %v1507 = vpop.permute.xlu0 %1506
  %1508 = vset.pattern.permute.xlu0 3
  %1509 = vperm.xlu0 %1508, %v64
  %v1510 = vpop.permute.xlu0 %1509
  %1511 = vset.pattern.permute.xlu0 3
  %1512 = vperm.xlu0 %1511, %v65
  %v1513 = vpop.permute.xlu0 %1512
  %1514 = vset.pattern.permute.xlu0 3
  %1515 = vperm.xlu0 %1514, %v66
  %v1516 = vpop.permute.xlu0 %1515
  %1517 = vset.pattern.permute.xlu0 3
  %1518 = vperm.xlu0 %1517, %v67
  %v1519 = vpop.permute.xlu0 %1518
  %1520 = vset.pattern.permute.xlu0 3
  %1521 = vperm.xlu0 %1520, %v68
  %v1522 = vpop.permute.xlu0 %1521
  %1523 = vset.pattern.permute.xlu0 3
  %1524 = vperm.xlu0 %1523, %v69
  %v1525 = vpop.permute.xlu0 %1524
  %1526 = vset.pattern.permute.xlu0 3
  %1527 = vperm.xlu0 %1526, %v70
  %v1528 = vpop.permute.xlu0 %1527
  %1529 = vset.pattern.permute.xlu0 3
  %1530 = vperm.xlu0 %1529, %v71
  %v1531 = vpop.permute.xlu0 %1530
  %1532 = vset.pattern.permute.xlu0 3
  %1533 = vperm.xlu0 %1532, %v72
  %v1534 = vpop.permute.xlu0 %1533
  %1535 = vset.pattern.permute.xlu0 3
  %1536 = vperm.xlu0 %1535, %v73
  %v1537 = vpop.permute.xlu0 %1536
  %1538 = vset.pattern.permute.xlu0 3
  %1539 = vperm.xlu0 %1538, %v74
  %v1540 = vpop.permute.xlu0 %1539
  %1541 = vset.pattern.permute.xlu0 3
  %1542 = vperm.xlu0 %1541, %v75
  %v1543 = vpop.permute.xlu0 %1542
  %1544 = vset.pattern.permute.xlu0 3
  %1545 = vperm.xlu0 %1544, %v76
  %v1546 = vpop.permute.xlu0 %1545
  %1547 = vset.pattern.permute.xlu0 3
  %1548 = vperm.xlu0 %1547, %v77
  %v1549 = vpop.permute.xlu0 %1548
  %1550 = vset.pattern.permute.xlu0 3
  %1551 = vperm.xlu0 %1550, %v78
  %v1552 = vpop.permute.xlu0 %1551
  %vm1553 = vcmp.eq.s32.totalorder %v1363, %v80
  %vm1554 = vcmp.eq.s32.totalorder %v1366, %v80
  %vm1555 = vcmp.eq.s32.totalorder %v1369, %v80
  %vm1556 = vcmp.eq.s32.totalorder %v1372, %v80
  %vm1557 = vcmp.eq.s32.totalorder %v1375, %v80
  %vm1558 = vcmp.eq.s32.totalorder %v1378, %v80
  %vm1559 = vcmp.eq.s32.totalorder %v1381, %v80
  %vm1560 = vcmp.eq.s32.totalorder %v1384, %v80
  %vm1561 = vcmp.eq.s32.totalorder %v1387, %v80
  %vm1562 = vcmp.eq.s32.totalorder %v1390, %v80
  %vm1563 = vcmp.eq.s32.totalorder %v1393, %v80
  %vm1564 = vcmp.eq.s32.totalorder %v1396, %v80
  %vm1565 = vcmp.eq.s32.totalorder %v1399, %v80
  %vm1566 = vcmp.eq.s32.totalorder %v1402, %v80
  %vm1567 = vcmp.eq.s32.totalorder %v1405, %v80
  %vm1568 = vcmp.eq.s32.totalorder %v1408, %v80
  %vm1569 = vcmp.eq.s32.totalorder %v1411, %v80
  %vm1570 = vcmp.eq.s32.totalorder %v1414, %v80
  %vm1571 = vcmp.eq.s32.totalorder %v1417, %v80
  %vm1572 = vcmp.eq.s32.totalorder %v1420, %v80
  %vm1573 = vcmp.eq.s32.totalorder %v1423, %v80
  %vm1574 = vcmp.eq.s32.totalorder %v1426, %v80
  %vm1575 = vcmp.eq.s32.totalorder %v1429, %v80
  %vm1576 = vcmp.eq.s32.totalorder %v1432, %v80
  %vm1577 = vcmp.eq.s32.totalorder %v1435, %v80
  %vm1578 = vcmp.eq.s32.totalorder %v1438, %v80
  %vm1579 = vcmp.eq.s32.totalorder %v1441, %v80
  %vm1580 = vcmp.eq.s32.totalorder %v1444, %v80
  %vm1581 = vcmp.eq.s32.totalorder %v1447, %v80
  %vm1582 = vcmp.eq.s32.totalorder %v1450, %v80
  %vm1583 = vcmp.eq.s32.totalorder %v1453, %v80
  %vm1584 = vcmp.eq.s32.totalorder %v1456, %v80
  %vm1585 = vcmp.eq.s32.totalorder %v1459, %v80
  %vm1586 = vcmp.eq.s32.totalorder %v1462, %v80
  %vm1587 = vcmp.eq.s32.totalorder %v1465, %v80
  %vm1588 = vcmp.eq.s32.totalorder %v1468, %v80
  %vm1589 = vcmp.eq.s32.totalorder %v1471, %v80
  %vm1590 = vcmp.eq.s32.totalorder %v1474, %v80
  %vm1591 = vcmp.eq.s32.totalorder %v1477, %v80
  %vm1592 = vcmp.eq.s32.totalorder %v1480, %v80
  %vm1593 = vcmp.eq.s32.totalorder %v1483, %v80
  %vm1594 = vcmp.eq.s32.totalorder %v1486, %v80
  %vm1595 = vcmp.eq.s32.totalorder %v1489, %v80
  %vm1596 = vcmp.eq.s32.totalorder %v1492, %v80
  %vm1597 = vcmp.eq.s32.totalorder %v1495, %v80
  %vm1598 = vcmp.eq.s32.totalorder %v1498, %v80
  %vm1599 = vcmp.eq.s32.totalorder %v1501, %v80
  %vm1600 = vcmp.eq.s32.totalorder %v1504, %v80
  %vm1601 = vcmp.eq.s32.totalorder %v1507, %v80
  %vm1602 = vcmp.eq.s32.totalorder %v1510, %v80
  %vm1603 = vcmp.eq.s32.totalorder %v1513, %v80
  %vm1604 = vcmp.eq.s32.totalorder %v1516, %v80
  %vm1605 = vcmp.eq.s32.totalorder %v1519, %v80
  %vm1606 = vcmp.eq.s32.totalorder %v1522, %v80
  %vm1607 = vcmp.eq.s32.totalorder %v1525, %v80
  %vm1608 = vcmp.eq.s32.totalorder %v1528, %v80
  %vm1609 = vcmp.eq.s32.totalorder %v1531, %v80
  %vm1610 = vcmp.eq.s32.totalorder %v1534, %v80
  %vm1611 = vcmp.eq.s32.totalorder %v1537, %v80
  %vm1612 = vcmp.eq.s32.totalorder %v1540, %v80
  %vm1613 = vcmp.eq.s32.totalorder %v1543, %v80
  %vm1614 = vcmp.eq.s32.totalorder %v1546, %v80
  %vm1615 = vcmp.eq.s32.totalorder %v1549, %v80
  %vm1616 = vcmp.eq.s32.totalorder %v1552, %v80
  %v1617 = vsel %vm1553, 1, 0
  %v1618 = vsel %vm1554, 1, 0
  %v1619 = vsel %vm1555, 1, 0
  %v1620 = vsel %vm1556, 1, 0
  %v1621 = vsel %vm1557, 1, 0
  %v1622 = vsel %vm1558, 1, 0
  %v1623 = vsel %vm1559, 1, 0
  %v1624 = vsel %vm1560, 1, 0
  %v1625 = vsel %vm1561, 1, 0
  %v1626 = vsel %vm1562, 1, 0
  %v1627 = vsel %vm1563, 1, 0
  %v1628 = vsel %vm1564, 1, 0
  %v1629 = vsel %vm1565, 1, 0
  %v1630 = vsel %vm1566, 1, 0
  %v1631 = vsel %vm1567, 1, 0
  %v1632 = vsel %vm1568, 1, 0
  %v1633 = vsel %vm1569, 1, 0
  %v1634 = vsel %vm1570, 1, 0
  %v1635 = vsel %vm1571, 1, 0
  %v1636 = vsel %vm1572, 1, 0
  %v1637 = vsel %vm1573, 1, 0
  %v1638 = vsel %vm1574, 1, 0
  %v1639 = vsel %vm1575, 1, 0
  %v1640 = vsel %vm1576, 1, 0
  %v1641 = vsel %vm1577, 1, 0
  %v1642 = vsel %vm1578, 1, 0
  %v1643 = vsel %vm1579, 1, 0
  %v1644 = vsel %vm1580, 1, 0
  %v1645 = vsel %vm1581, 1, 0
  %v1646 = vsel %vm1582, 1, 0
  %v1647 = vsel %vm1583, 1, 0
  %v1648 = vsel %vm1584, 1, 0
  %v1649 = vsel %vm1585, 1, 0
  %v1650 = vsel %vm1586, 1, 0
  %v1651 = vsel %vm1587, 1, 0
  %v1652 = vsel %vm1588, 1, 0
  %v1653 = vsel %vm1589, 1, 0
  %v1654 = vsel %vm1590, 1, 0
  %v1655 = vsel %vm1591, 1, 0
  %v1656 = vsel %vm1592, 1, 0
  %v1657 = vsel %vm1593, 1, 0
  %v1658 = vsel %vm1594, 1, 0
  %v1659 = vsel %vm1595, 1, 0
  %v1660 = vsel %vm1596, 1, 0
  %v1661 = vsel %vm1597, 1, 0
  %v1662 = vsel %vm1598, 1, 0
  %v1663 = vsel %vm1599, 1, 0
  %v1664 = vsel %vm1600, 1, 0
  %v1665 = vsel %vm1601, 1, 0
  %v1666 = vsel %vm1602, 1, 0
  %v1667 = vsel %vm1603, 1, 0
  %v1668 = vsel %vm1604, 1, 0
  %v1669 = vsel %vm1605, 1, 0
  %v1670 = vsel %vm1606, 1, 0
  %v1671 = vsel %vm1607, 1, 0
  %v1672 = vsel %vm1608, 1, 0
  %v1673 = vsel %vm1609, 1, 0
  %v1674 = vsel %vm1610, 1, 0
  %v1675 = vsel %vm1611, 1, 0
  %v1676 = vsel %vm1612, 1, 0
  %v1677 = vsel %vm1613, 1, 0
  %v1678 = vsel %vm1614, 1, 0
  %v1679 = vsel %vm1615, 1, 0
  %v1680 = vsel %vm1616, 1, 0
  %v1681 = vcvt.s32.f32 %v1617
  %v1682 = vcvt.s32.f32 %v1618
  %v1683 = vcvt.s32.f32 %v1619
  %v1684 = vcvt.s32.f32 %v1620
  %v1685 = vcvt.s32.f32 %v1621
  %v1686 = vcvt.s32.f32 %v1622
  %v1687 = vcvt.s32.f32 %v1623
  %v1688 = vcvt.s32.f32 %v1624
  %v1689 = vcvt.s32.f32 %v1625
  %v1690 = vcvt.s32.f32 %v1626
  %v1691 = vcvt.s32.f32 %v1627
  %v1692 = vcvt.s32.f32 %v1628
  %v1693 = vcvt.s32.f32 %v1629
  %v1694 = vcvt.s32.f32 %v1630
  %v1695 = vcvt.s32.f32 %v1631
  %v1696 = vcvt.s32.f32 %v1632
  %v1697 = vcvt.s32.f32 %v1633
  %v1698 = vcvt.s32.f32 %v1634
  %v1699 = vcvt.s32.f32 %v1635
  %v1700 = vcvt.s32.f32 %v1636
  %v1701 = vcvt.s32.f32 %v1637
  %v1702 = vcvt.s32.f32 %v1638
  %v1703 = vcvt.s32.f32 %v1639
  %v1704 = vcvt.s32.f32 %v1640
  %v1705 = vcvt.s32.f32 %v1641
  %v1706 = vcvt.s32.f32 %v1642
  %v1707 = vcvt.s32.f32 %v1643
  %v1708 = vcvt.s32.f32 %v1644
  %v1709 = vcvt.s32.f32 %v1645
  %v1710 = vcvt.s32.f32 %v1646
  %v1711 = vcvt.s32.f32 %v1647
  %v1712 = vcvt.s32.f32 %v1648
  %v1713 = vcvt.s32.f32 %v1649
  %v1714 = vcvt.s32.f32 %v1650
  %v1715 = vcvt.s32.f32 %v1651
  %v1716 = vcvt.s32.f32 %v1652
  %v1717 = vcvt.s32.f32 %v1653
  %v1718 = vcvt.s32.f32 %v1654
  %v1719 = vcvt.s32.f32 %v1655
  %v1720 = vcvt.s32.f32 %v1656
  %v1721 = vcvt.s32.f32 %v1657
  %v1722 = vcvt.s32.f32 %v1658
  %v1723 = vcvt.s32.f32 %v1659
  %v1724 = vcvt.s32.f32 %v1660
  %v1725 = vcvt.s32.f32 %v1661
  %v1726 = vcvt.s32.f32 %v1662
  %v1727 = vcvt.s32.f32 %v1663
  %v1728 = vcvt.s32.f32 %v1664
  %v1729 = vcvt.s32.f32 %v1665
  %v1730 = vcvt.s32.f32 %v1666
  %v1731 = vcvt.s32.f32 %v1667
  %v1732 = vcvt.s32.f32 %v1668
  %v1733 = vcvt.s32.f32 %v1669
  %v1734 = vcvt.s32.f32 %v1670
  %v1735 = vcvt.s32.f32 %v1671
  %v1736 = vcvt.s32.f32 %v1672
  %v1737 = vcvt.s32.f32 %v1673
  %v1738 = vcvt.s32.f32 %v1674
  %v1739 = vcvt.s32.f32 %v1675
  %v1740 = vcvt.s32.f32 %v1676
  %v1741 = vcvt.s32.f32 %v1677
  %v1742 = vcvt.s32.f32 %v1678
  %v1743 = vcvt.s32.f32 %v1679
  %v1744 = vcvt.s32.f32 %v1680
  %v1745 = vadd.f32 %v1297, %v1681
  %v1746 = vadd.f32 %v1298, %v1682
  %v1747 = vadd.f32 %v1299, %v1683
  %v1748 = vadd.f32 %v1300, %v1684
  %v1749 = vadd.f32 %v1301, %v1685
  %v1750 = vadd.f32 %v1302, %v1686
  %v1751 = vadd.f32 %v1303, %v1687
  %v1752 = vadd.f32 %v1304, %v1688
  %v1753 = vadd.f32 %v1305, %v1689
  %v1754 = vadd.f32 %v1306, %v1690
  %v1755 = vadd.f32 %v1307, %v1691
  %v1756 = vadd.f32 %v1308, %v1692
  %v1757 = vadd.f32 %v1309, %v1693
  %v1758 = vadd.f32 %v1310, %v1694
  %v1759 = vadd.f32 %v1311, %v1695
  %v1760 = vadd.f32 %v1312, %v1696
  %v1761 = vadd.f32 %v1313, %v1697
  %v1762 = vadd.f32 %v1314, %v1698
  %v1763 = vadd.f32 %v1315, %v1699
  %v1764 = vadd.f32 %v1316, %v1700
  %v1765 = vadd.f32 %v1317, %v1701
  %v1766 = vadd.f32 %v1318, %v1702
  %v1767 = vadd.f32 %v1319, %v1703
  %v1768 = vadd.f32 %v1320, %v1704
  %v1769 = vadd.f32 %v1321, %v1705
  %v1770 = vadd.f32 %v1322, %v1706
  %v1771 = vadd.f32 %v1323, %v1707
  %v1772 = vadd.f32 %v1324, %v1708
  %v1773 = vadd.f32 %v1325, %v1709
  %v1774 = vadd.f32 %v1326, %v1710
  %v1775 = vadd.f32 %v1327, %v1711
  %v1776 = vadd.f32 %v1328, %v1712
  %v1777 = vadd.f32 %v1329, %v1713
  %v1778 = vadd.f32 %v1330, %v1714
  %v1779 = vadd.f32 %v1331, %v1715
  %v1780 = vadd.f32 %v1332, %v1716
  %v1781 = vadd.f32 %v1333, %v1717
  %v1782 = vadd.f32 %v1334, %v1718
  %v1783 = vadd.f32 %v1335, %v1719
  %v1784 = vadd.f32 %v1336, %v1720
  %v1785 = vadd.f32 %v1337, %v1721
  %v1786 = vadd.f32 %v1338, %v1722
  %v1787 = vadd.f32 %v1339, %v1723
  %v1788 = vadd.f32 %v1340, %v1724
  %v1789 = vadd.f32 %v1341, %v1725
  %v1790 = vadd.f32 %v1342, %v1726
  %v1791 = vadd.f32 %v1343, %v1727
  %v1792 = vadd.f32 %v1344, %v1728
  %v1793 = vadd.f32 %v1345, %v1729
  %v1794 = vadd.f32 %v1346, %v1730
  %v1795 = vadd.f32 %v1347, %v1731
  %v1796 = vadd.f32 %v1348, %v1732
  %v1797 = vadd.f32 %v1349, %v1733
  %v1798 = vadd.f32 %v1350, %v1734
  %v1799 = vadd.f32 %v1351, %v1735
  %v1800 = vadd.f32 %v1352, %v1736
  %v1801 = vadd.f32 %v1353, %v1737
  %v1802 = vadd.f32 %v1354, %v1738
  %v1803 = vadd.f32 %v1355, %v1739
  %v1804 = vadd.f32 %v1356, %v1740
  %v1805 = vadd.f32 %v1357, %v1741
  %v1806 = vadd.f32 %v1358, %v1742
  %v1807 = vadd.f32 %v1359, %v1743
  %v1808 = vadd.f32 %v1360, %v1744
  %1809 = vset.pattern.permute.xlu0 4
  %1810 = vperm.xlu0 %1809, %v15
  %v1811 = vpop.permute.xlu0 %1810
  %1812 = vset.pattern.permute.xlu0 4
  %1813 = vperm.xlu0 %1812, %v16
  %v1814 = vpop.permute.xlu0 %1813
  %1815 = vset.pattern.permute.xlu0 4
  %1816 = vperm.xlu0 %1815, %v17
  %v1817 = vpop.permute.xlu0 %1816
  %1818 = vset.pattern.permute.xlu0 4
  %1819 = vperm.xlu0 %1818, %v18
  %v1820 = vpop.permute.xlu0 %1819
  %1821 = vset.pattern.permute.xlu0 4
  %1822 = vperm.xlu0 %1821, %v19
  %v1823 = vpop.permute.xlu0 %1822
  %1824 = vset.pattern.permute.xlu0 4
  %1825 = vperm.xlu0 %1824, %v20
  %v1826 = vpop.permute.xlu0 %1825
  %1827 = vset.pattern.permute.xlu0 4
  %1828 = vperm.xlu0 %1827, %v21
  %v1829 = vpop.permute.xlu0 %1828
  %1830 = vset.pattern.permute.xlu0 4
  %1831 = vperm.xlu0 %1830, %v22
  %v1832 = vpop.permute.xlu0 %1831
  %1833 = vset.pattern.permute.xlu0 4
  %1834 = vperm.xlu0 %1833, %v23
  %v1835 = vpop.permute.xlu0 %1834
  %1836 = vset.pattern.permute.xlu0 4
  %1837 = vperm.xlu0 %1836, %v24
  %v1838 = vpop.permute.xlu0 %1837
  %1839 = vset.pattern.permute.xlu0 4
  %1840 = vperm.xlu0 %1839, %v25
  %v1841 = vpop.permute.xlu0 %1840
  %1842 = vset.pattern.permute.xlu0 4
  %1843 = vperm.xlu0 %1842, %v26
  %v1844 = vpop.permute.xlu0 %1843
  %1845 = vset.pattern.permute.xlu0 4
  %1846 = vperm.xlu0 %1845, %v27
  %v1847 = vpop.permute.xlu0 %1846
  %1848 = vset.pattern.permute.xlu0 4
  %1849 = vperm.xlu0 %1848, %v28
  %v1850 = vpop.permute.xlu0 %1849
  %1851 = vset.pattern.permute.xlu0 4
  %1852 = vperm.xlu0 %1851, %v29
  %v1853 = vpop.permute.xlu0 %1852
  %1854 = vset.pattern.permute.xlu0 4
  %1855 = vperm.xlu0 %1854, %v30
  %v1856 = vpop.permute.xlu0 %1855
  %1857 = vset.pattern.permute.xlu0 4
  %1858 = vperm.xlu0 %1857, %v31
  %v1859 = vpop.permute.xlu0 %1858
  %1860 = vset.pattern.permute.xlu0 4
  %1861 = vperm.xlu0 %1860, %v32
  %v1862 = vpop.permute.xlu0 %1861
  %1863 = vset.pattern.permute.xlu0 4
  %1864 = vperm.xlu0 %1863, %v33
  %v1865 = vpop.permute.xlu0 %1864
  %1866 = vset.pattern.permute.xlu0 4
  %1867 = vperm.xlu0 %1866, %v34
  %v1868 = vpop.permute.xlu0 %1867
  %1869 = vset.pattern.permute.xlu0 4
  %1870 = vperm.xlu0 %1869, %v35
  %v1871 = vpop.permute.xlu0 %1870
  %1872 = vset.pattern.permute.xlu0 4
  %1873 = vperm.xlu0 %1872, %v36
  %v1874 = vpop.permute.xlu0 %1873
  %1875 = vset.pattern.permute.xlu0 4
  %1876 = vperm.xlu0 %1875, %v37
  %v1877 = vpop.permute.xlu0 %1876
  %1878 = vset.pattern.permute.xlu0 4
  %1879 = vperm.xlu0 %1878, %v38
  %v1880 = vpop.permute.xlu0 %1879
  %1881 = vset.pattern.permute.xlu0 4
  %1882 = vperm.xlu0 %1881, %v39
  %v1883 = vpop.permute.xlu0 %1882
  %1884 = vset.pattern.permute.xlu0 4
  %1885 = vperm.xlu0 %1884, %v40
  %v1886 = vpop.permute.xlu0 %1885
  %1887 = vset.pattern.permute.xlu0 4
  %1888 = vperm.xlu0 %1887, %v41
  %v1889 = vpop.permute.xlu0 %1888
  %1890 = vset.pattern.permute.xlu0 4
  %1891 = vperm.xlu0 %1890, %v42
  %v1892 = vpop.permute.xlu0 %1891
  %1893 = vset.pattern.permute.xlu0 4
  %1894 = vperm.xlu0 %1893, %v43
  %v1895 = vpop.permute.xlu0 %1894
  %1896 = vset.pattern.permute.xlu0 4
  %1897 = vperm.xlu0 %1896, %v44
  %v1898 = vpop.permute.xlu0 %1897
  %1899 = vset.pattern.permute.xlu0 4
  %1900 = vperm.xlu0 %1899, %v45
  %v1901 = vpop.permute.xlu0 %1900
  %1902 = vset.pattern.permute.xlu0 4
  %1903 = vperm.xlu0 %1902, %v46
  %v1904 = vpop.permute.xlu0 %1903
  %1905 = vset.pattern.permute.xlu0 4
  %1906 = vperm.xlu0 %1905, %v47
  %v1907 = vpop.permute.xlu0 %1906
  %1908 = vset.pattern.permute.xlu0 4
  %1909 = vperm.xlu0 %1908, %v48
  %v1910 = vpop.permute.xlu0 %1909
  %1911 = vset.pattern.permute.xlu0 4
  %1912 = vperm.xlu0 %1911, %v49
  %v1913 = vpop.permute.xlu0 %1912
  %1914 = vset.pattern.permute.xlu0 4
  %1915 = vperm.xlu0 %1914, %v50
  %v1916 = vpop.permute.xlu0 %1915
  %1917 = vset.pattern.permute.xlu0 4
  %1918 = vperm.xlu0 %1917, %v51
  %v1919 = vpop.permute.xlu0 %1918
  %1920 = vset.pattern.permute.xlu0 4
  %1921 = vperm.xlu0 %1920, %v52
  %v1922 = vpop.permute.xlu0 %1921
  %1923 = vset.pattern.permute.xlu0 4
  %1924 = vperm.xlu0 %1923, %v53
  %v1925 = vpop.permute.xlu0 %1924
  %1926 = vset.pattern.permute.xlu0 4
  %1927 = vperm.xlu0 %1926, %v54
  %v1928 = vpop.permute.xlu0 %1927
  %1929 = vset.pattern.permute.xlu0 4
  %1930 = vperm.xlu0 %1929, %v55
  %v1931 = vpop.permute.xlu0 %1930
  %1932 = vset.pattern.permute.xlu0 4
  %1933 = vperm.xlu0 %1932, %v56
  %v1934 = vpop.permute.xlu0 %1933
  %1935 = vset.pattern.permute.xlu0 4
  %1936 = vperm.xlu0 %1935, %v57
  %v1937 = vpop.permute.xlu0 %1936
  %1938 = vset.pattern.permute.xlu0 4
  %1939 = vperm.xlu0 %1938, %v58
  %v1940 = vpop.permute.xlu0 %1939
  %1941 = vset.pattern.permute.xlu0 4
  %1942 = vperm.xlu0 %1941, %v59
  %v1943 = vpop.permute.xlu0 %1942
  %1944 = vset.pattern.permute.xlu0 4
  %1945 = vperm.xlu0 %1944, %v60
  %v1946 = vpop.permute.xlu0 %1945
  %1947 = vset.pattern.permute.xlu0 4
  %1948 = vperm.xlu0 %1947, %v61
  %v1949 = vpop.permute.xlu0 %1948
  %1950 = vset.pattern.permute.xlu0 4
  %1951 = vperm.xlu0 %1950, %v62
  %v1952 = vpop.permute.xlu0 %1951
  %1953 = vset.pattern.permute.xlu0 4
  %1954 = vperm.xlu0 %1953, %v63
  %v1955 = vpop.permute.xlu0 %1954
  %1956 = vset.pattern.permute.xlu0 4
  %1957 = vperm.xlu0 %1956, %v64
  %v1958 = vpop.permute.xlu0 %1957
  %1959 = vset.pattern.permute.xlu0 4
  %1960 = vperm.xlu0 %1959, %v65
  %v1961 = vpop.permute.xlu0 %1960
  %1962 = vset.pattern.permute.xlu0 4
  %1963 = vperm.xlu0 %1962, %v66
  %v1964 = vpop.permute.xlu0 %1963
  %1965 = vset.pattern.permute.xlu0 4
  %1966 = vperm.xlu0 %1965, %v67
  %v1967 = vpop.permute.xlu0 %1966
  %1968 = vset.pattern.permute.xlu0 4
  %1969 = vperm.xlu0 %1968, %v68
  %v1970 = vpop.permute.xlu0 %1969
  %1971 = vset.pattern.permute.xlu0 4
  %1972 = vperm.xlu0 %1971, %v69
  %v1973 = vpop.permute.xlu0 %1972
  %1974 = vset.pattern.permute.xlu0 4
  %1975 = vperm.xlu0 %1974, %v70
  %v1976 = vpop.permute.xlu0 %1975
  %1977 = vset.pattern.permute.xlu0 4
  %1978 = vperm.xlu0 %1977, %v71
  %v1979 = vpop.permute.xlu0 %1978
  %1980 = vset.pattern.permute.xlu0 4
  %1981 = vperm.xlu0 %1980, %v72
  %v1982 = vpop.permute.xlu0 %1981
  %1983 = vset.pattern.permute.xlu0 4
  %1984 = vperm.xlu0 %1983, %v73
  %v1985 = vpop.permute.xlu0 %1984
  %1986 = vset.pattern.permute.xlu0 4
  %1987 = vperm.xlu0 %1986, %v74
  %v1988 = vpop.permute.xlu0 %1987
  %1989 = vset.pattern.permute.xlu0 4
  %1990 = vperm.xlu0 %1989, %v75
  %v1991 = vpop.permute.xlu0 %1990
  %1992 = vset.pattern.permute.xlu0 4
  %1993 = vperm.xlu0 %1992, %v76
  %v1994 = vpop.permute.xlu0 %1993
  %1995 = vset.pattern.permute.xlu0 4
  %1996 = vperm.xlu0 %1995, %v77
  %v1997 = vpop.permute.xlu0 %1996
  %1998 = vset.pattern.permute.xlu0 4
  %1999 = vperm.xlu0 %1998, %v78
  %v2000 = vpop.permute.xlu0 %1999
  %vm2001 = vcmp.eq.s32.totalorder %v1811, %v80
  %vm2002 = vcmp.eq.s32.totalorder %v1814, %v80
  %vm2003 = vcmp.eq.s32.totalorder %v1817, %v80
  %vm2004 = vcmp.eq.s32.totalorder %v1820, %v80
  %vm2005 = vcmp.eq.s32.totalorder %v1823, %v80
  %vm2006 = vcmp.eq.s32.totalorder %v1826, %v80
  %vm2007 = vcmp.eq.s32.totalorder %v1829, %v80
  %vm2008 = vcmp.eq.s32.totalorder %v1832, %v80
  %vm2009 = vcmp.eq.s32.totalorder %v1835, %v80
  %vm2010 = vcmp.eq.s32.totalorder %v1838, %v80
  %vm2011 = vcmp.eq.s32.totalorder %v1841, %v80
  %vm2012 = vcmp.eq.s32.totalorder %v1844, %v80
  %vm2013 = vcmp.eq.s32.totalorder %v1847, %v80
  %vm2014 = vcmp.eq.s32.totalorder %v1850, %v80
  %vm2015 = vcmp.eq.s32.totalorder %v1853, %v80
  %vm2016 = vcmp.eq.s32.totalorder %v1856, %v80
  %vm2017 = vcmp.eq.s32.totalorder %v1859, %v80
  %vm2018 = vcmp.eq.s32.totalorder %v1862, %v80
  %vm2019 = vcmp.eq.s32.totalorder %v1865, %v80
  %vm2020 = vcmp.eq.s32.totalorder %v1868, %v80
  %vm2021 = vcmp.eq.s32.totalorder %v1871, %v80
  %vm2022 = vcmp.eq.s32.totalorder %v1874, %v80
  %vm2023 = vcmp.eq.s32.totalorder %v1877, %v80
  %vm2024 = vcmp.eq.s32.totalorder %v1880, %v80
  %vm2025 = vcmp.eq.s32.totalorder %v1883, %v80
  %vm2026 = vcmp.eq.s32.totalorder %v1886, %v80
  %vm2027 = vcmp.eq.s32.totalorder %v1889, %v80
  %vm2028 = vcmp.eq.s32.totalorder %v1892, %v80
  %vm2029 = vcmp.eq.s32.totalorder %v1895, %v80
  %vm2030 = vcmp.eq.s32.totalorder %v1898, %v80
  %vm2031 = vcmp.eq.s32.totalorder %v1901, %v80
  %vm2032 = vcmp.eq.s32.totalorder %v1904, %v80
  %vm2033 = vcmp.eq.s32.totalorder %v1907, %v80
  %vm2034 = vcmp.eq.s32.totalorder %v1910, %v80
  %vm2035 = vcmp.eq.s32.totalorder %v1913, %v80
  %vm2036 = vcmp.eq.s32.totalorder %v1916, %v80
  %vm2037 = vcmp.eq.s32.totalorder %v1919, %v80
  %vm2038 = vcmp.eq.s32.totalorder %v1922, %v80
  %vm2039 = vcmp.eq.s32.totalorder %v1925, %v80
  %vm2040 = vcmp.eq.s32.totalorder %v1928, %v80
  %vm2041 = vcmp.eq.s32.totalorder %v1931, %v80
  %vm2042 = vcmp.eq.s32.totalorder %v1934, %v80
  %vm2043 = vcmp.eq.s32.totalorder %v1937, %v80
  %vm2044 = vcmp.eq.s32.totalorder %v1940, %v80
  %vm2045 = vcmp.eq.s32.totalorder %v1943, %v80
  %vm2046 = vcmp.eq.s32.totalorder %v1946, %v80
  %vm2047 = vcmp.eq.s32.totalorder %v1949, %v80
  %vm2048 = vcmp.eq.s32.totalorder %v1952, %v80
  %vm2049 = vcmp.eq.s32.totalorder %v1955, %v80
  %vm2050 = vcmp.eq.s32.totalorder %v1958, %v80
  %vm2051 = vcmp.eq.s32.totalorder %v1961, %v80
  %vm2052 = vcmp.eq.s32.totalorder %v1964, %v80
  %vm2053 = vcmp.eq.s32.totalorder %v1967, %v80
  %vm2054 = vcmp.eq.s32.totalorder %v1970, %v80
  %vm2055 = vcmp.eq.s32.totalorder %v1973, %v80
  %vm2056 = vcmp.eq.s32.totalorder %v1976, %v80
  %vm2057 = vcmp.eq.s32.totalorder %v1979, %v80
  %vm2058 = vcmp.eq.s32.totalorder %v1982, %v80
  %vm2059 = vcmp.eq.s32.totalorder %v1985, %v80
  %vm2060 = vcmp.eq.s32.totalorder %v1988, %v80
  %vm2061 = vcmp.eq.s32.totalorder %v1991, %v80
  %vm2062 = vcmp.eq.s32.totalorder %v1994, %v80
  %vm2063 = vcmp.eq.s32.totalorder %v1997, %v80
  %vm2064 = vcmp.eq.s32.totalorder %v2000, %v80
  %v2065 = vsel %vm2001, 1, 0
  %v2066 = vsel %vm2002, 1, 0
  %v2067 = vsel %vm2003, 1, 0
  %v2068 = vsel %vm2004, 1, 0
  %v2069 = vsel %vm2005, 1, 0
  %v2070 = vsel %vm2006, 1, 0
  %v2071 = vsel %vm2007, 1, 0
  %v2072 = vsel %vm2008, 1, 0
  %v2073 = vsel %vm2009, 1, 0
  %v2074 = vsel %vm2010, 1, 0
  %v2075 = vsel %vm2011, 1, 0
  %v2076 = vsel %vm2012, 1, 0
  %v2077 = vsel %vm2013, 1, 0
  %v2078 = vsel %vm2014, 1, 0
  %v2079 = vsel %vm2015, 1, 0
  %v2080 = vsel %vm2016, 1, 0
  %v2081 = vsel %vm2017, 1, 0
  %v2082 = vsel %vm2018, 1, 0
  %v2083 = vsel %vm2019, 1, 0
  %v2084 = vsel %vm2020, 1, 0
  %v2085 = vsel %vm2021, 1, 0
  %v2086 = vsel %vm2022, 1, 0
  %v2087 = vsel %vm2023, 1, 0
  %v2088 = vsel %vm2024, 1, 0
  %v2089 = vsel %vm2025, 1, 0
  %v2090 = vsel %vm2026, 1, 0
  %v2091 = vsel %vm2027, 1, 0
  %v2092 = vsel %vm2028, 1, 0
  %v2093 = vsel %vm2029, 1, 0
  %v2094 = vsel %vm2030, 1, 0
  %v2095 = vsel %vm2031, 1, 0
  %v2096 = vsel %vm2032, 1, 0
  %v2097 = vsel %vm2033, 1, 0
  %v2098 = vsel %vm2034, 1, 0
  %v2099 = vsel %vm2035, 1, 0
  %v2100 = vsel %vm2036, 1, 0
  %v2101 = vsel %vm2037, 1, 0
  %v2102 = vsel %vm2038, 1, 0
  %v2103 = vsel %vm2039, 1, 0
  %v2104 = vsel %vm2040, 1, 0
  %v2105 = vsel %vm2041, 1, 0
  %v2106 = vsel %vm2042, 1, 0
  %v2107 = vsel %vm2043, 1, 0
  %v2108 = vsel %vm2044, 1, 0
  %v2109 = vsel %vm2045, 1, 0
  %v2110 = vsel %vm2046, 1, 0
  %v2111 = vsel %vm2047, 1, 0
  %v2112 = vsel %vm2048, 1, 0
  %v2113 = vsel %vm2049, 1, 0
  %v2114 = vsel %vm2050, 1, 0
  %v2115 = vsel %vm2051, 1, 0
  %v2116 = vsel %vm2052, 1, 0
  %v2117 = vsel %vm2053, 1, 0
  %v2118 = vsel %vm2054, 1, 0
  %v2119 = vsel %vm2055, 1, 0
  %v2120 = vsel %vm2056, 1, 0
  %v2121 = vsel %vm2057, 1, 0
  %v2122 = vsel %vm2058, 1, 0
  %v2123 = vsel %vm2059, 1, 0
  %v2124 = vsel %vm2060, 1, 0
  %v2125 = vsel %vm2061, 1, 0
  %v2126 = vsel %vm2062, 1, 0
  %v2127 = vsel %vm2063, 1, 0
  %v2128 = vsel %vm2064, 1, 0
  %v2129 = vcvt.s32.f32 %v2065
  %v2130 = vcvt.s32.f32 %v2066
  %v2131 = vcvt.s32.f32 %v2067
  %v2132 = vcvt.s32.f32 %v2068
  %v2133 = vcvt.s32.f32 %v2069
  %v2134 = vcvt.s32.f32 %v2070
  %v2135 = vcvt.s32.f32 %v2071
  %v2136 = vcvt.s32.f32 %v2072
  %v2137 = vcvt.s32.f32 %v2073
  %v2138 = vcvt.s32.f32 %v2074
  %v2139 = vcvt.s32.f32 %v2075
  %v2140 = vcvt.s32.f32 %v2076
  %v2141 = vcvt.s32.f32 %v2077
  %v2142 = vcvt.s32.f32 %v2078
  %v2143 = vcvt.s32.f32 %v2079
  %v2144 = vcvt.s32.f32 %v2080
  %v2145 = vcvt.s32.f32 %v2081
  %v2146 = vcvt.s32.f32 %v2082
  %v2147 = vcvt.s32.f32 %v2083
  %v2148 = vcvt.s32.f32 %v2084
  %v2149 = vcvt.s32.f32 %v2085
  %v2150 = vcvt.s32.f32 %v2086
  %v2151 = vcvt.s32.f32 %v2087
  %v2152 = vcvt.s32.f32 %v2088
  %v2153 = vcvt.s32.f32 %v2089
  %v2154 = vcvt.s32.f32 %v2090
  %v2155 = vcvt.s32.f32 %v2091
  %v2156 = vcvt.s32.f32 %v2092
  %v2157 = vcvt.s32.f32 %v2093
  %v2158 = vcvt.s32.f32 %v2094
  %v2159 = vcvt.s32.f32 %v2095
  %v2160 = vcvt.s32.f32 %v2096
  %v2161 = vcvt.s32.f32 %v2097
  %v2162 = vcvt.s32.f32 %v2098
  %v2163 = vcvt.s32.f32 %v2099
  %v2164 = vcvt.s32.f32 %v2100
  %v2165 = vcvt.s32.f32 %v2101
  %v2166 = vcvt.s32.f32 %v2102
  %v2167 = vcvt.s32.f32 %v2103
  %v2168 = vcvt.s32.f32 %v2104
  %v2169 = vcvt.s32.f32 %v2105
  %v2170 = vcvt.s32.f32 %v2106
  %v2171 = vcvt.s32.f32 %v2107
  %v2172 = vcvt.s32.f32 %v2108
  %v2173 = vcvt.s32.f32 %v2109
  %v2174 = vcvt.s32.f32 %v2110
  %v2175 = vcvt.s32.f32 %v2111
  %v2176 = vcvt.s32.f32 %v2112
  %v2177 = vcvt.s32.f32 %v2113
  %v2178 = vcvt.s32.f32 %v2114
  %v2179 = vcvt.s32.f32 %v2115
  %v2180 = vcvt.s32.f32 %v2116
  %v2181 = vcvt.s32.f32 %v2117
  %v2182 = vcvt.s32.f32 %v2118
  %v2183 = vcvt.s32.f32 %v2119
  %v2184 = vcvt.s32.f32 %v2120
  %v2185 = vcvt.s32.f32 %v2121
  %v2186 = vcvt.s32.f32 %v2122
  %v2187 = vcvt.s32.f32 %v2123
  %v2188 = vcvt.s32.f32 %v2124
  %v2189 = vcvt.s32.f32 %v2125
  %v2190 = vcvt.s32.f32 %v2126
  %v2191 = vcvt.s32.f32 %v2127
  %v2192 = vcvt.s32.f32 %v2128
  %v2193 = vadd.f32 %v1745, %v2129
  %v2194 = vadd.f32 %v1746, %v2130
  %v2195 = vadd.f32 %v1747, %v2131
  %v2196 = vadd.f32 %v1748, %v2132
  %v2197 = vadd.f32 %v1749, %v2133
  %v2198 = vadd.f32 %v1750, %v2134
  %v2199 = vadd.f32 %v1751, %v2135
  %v2200 = vadd.f32 %v1752, %v2136
  %v2201 = vadd.f32 %v1753, %v2137
  %v2202 = vadd.f32 %v1754, %v2138
  %v2203 = vadd.f32 %v1755, %v2139
  %v2204 = vadd.f32 %v1756, %v2140
  %v2205 = vadd.f32 %v1757, %v2141
  %v2206 = vadd.f32 %v1758, %v2142
  %v2207 = vadd.f32 %v1759, %v2143
  %v2208 = vadd.f32 %v1760, %v2144
  %v2209 = vadd.f32 %v1761, %v2145
  %v2210 = vadd.f32 %v1762, %v2146
  %v2211 = vadd.f32 %v1763, %v2147
  %v2212 = vadd.f32 %v1764, %v2148
  %v2213 = vadd.f32 %v1765, %v2149
  %v2214 = vadd.f32 %v1766, %v2150
  %v2215 = vadd.f32 %v1767, %v2151
  %v2216 = vadd.f32 %v1768, %v2152
  %v2217 = vadd.f32 %v1769, %v2153
  %v2218 = vadd.f32 %v1770, %v2154
  %v2219 = vadd.f32 %v1771, %v2155
  %v2220 = vadd.f32 %v1772, %v2156
  %v2221 = vadd.f32 %v1773, %v2157
  %v2222 = vadd.f32 %v1774, %v2158
  %v2223 = vadd.f32 %v1775, %v2159
  %v2224 = vadd.f32 %v1776, %v2160
  %v2225 = vadd.f32 %v1777, %v2161
  %v2226 = vadd.f32 %v1778, %v2162
  %v2227 = vadd.f32 %v1779, %v2163
  %v2228 = vadd.f32 %v1780, %v2164
  %v2229 = vadd.f32 %v1781, %v2165
  %v2230 = vadd.f32 %v1782, %v2166
  %v2231 = vadd.f32 %v1783, %v2167
  %v2232 = vadd.f32 %v1784, %v2168
  %v2233 = vadd.f32 %v1785, %v2169
  %v2234 = vadd.f32 %v1786, %v2170
  %v2235 = vadd.f32 %v1787, %v2171
  %v2236 = vadd.f32 %v1788, %v2172
  %v2237 = vadd.f32 %v1789, %v2173
  %v2238 = vadd.f32 %v1790, %v2174
  %v2239 = vadd.f32 %v1791, %v2175
  %v2240 = vadd.f32 %v1792, %v2176
  %v2241 = vadd.f32 %v1793, %v2177
  %v2242 = vadd.f32 %v1794, %v2178
  %v2243 = vadd.f32 %v1795, %v2179
  %v2244 = vadd.f32 %v1796, %v2180
  %v2245 = vadd.f32 %v1797, %v2181
  %v2246 = vadd.f32 %v1798, %v2182
  %v2247 = vadd.f32 %v1799, %v2183
  %v2248 = vadd.f32 %v1800, %v2184
  %v2249 = vadd.f32 %v1801, %v2185
  %v2250 = vadd.f32 %v1802, %v2186
  %v2251 = vadd.f32 %v1803, %v2187
  %v2252 = vadd.f32 %v1804, %v2188
  %v2253 = vadd.f32 %v1805, %v2189
  %v2254 = vadd.f32 %v1806, %v2190
  %v2255 = vadd.f32 %v1807, %v2191
  %v2256 = vadd.f32 %v1808, %v2192
  %2257 = vset.pattern.permute.xlu0 5
  %2258 = vperm.xlu0 %2257, %v15
  %v2259 = vpop.permute.xlu0 %2258
  %2260 = vset.pattern.permute.xlu0 5
  %2261 = vperm.xlu0 %2260, %v16
  %v2262 = vpop.permute.xlu0 %2261
  %2263 = vset.pattern.permute.xlu0 5
  %2264 = vperm.xlu0 %2263, %v17
  %v2265 = vpop.permute.xlu0 %2264
  %2266 = vset.pattern.permute.xlu0 5
  %2267 = vperm.xlu0 %2266, %v18
  %v2268 = vpop.permute.xlu0 %2267
  %2269 = vset.pattern.permute.xlu0 5
  %2270 = vperm.xlu0 %2269, %v19
  %v2271 = vpop.permute.xlu0 %2270
  %2272 = vset.pattern.permute.xlu0 5
  %2273 = vperm.xlu0 %2272, %v20
  %v2274 = vpop.permute.xlu0 %2273
  %2275 = vset.pattern.permute.xlu0 5
  %2276 = vperm.xlu0 %2275, %v21
  %v2277 = vpop.permute.xlu0 %2276
  %2278 = vset.pattern.permute.xlu0 5
  %2279 = vperm.xlu0 %2278, %v22
  %v2280 = vpop.permute.xlu0 %2279
  %2281 = vset.pattern.permute.xlu0 5
  %2282 = vperm.xlu0 %2281, %v23
  %v2283 = vpop.permute.xlu0 %2282
  %2284 = vset.pattern.permute.xlu0 5
  %2285 = vperm.xlu0 %2284, %v24
  %v2286 = vpop.permute.xlu0 %2285
  %2287 = vset.pattern.permute.xlu0 5
  %2288 = vperm.xlu0 %2287, %v25
  %v2289 = vpop.permute.xlu0 %2288
  %2290 = vset.pattern.permute.xlu0 5
  %2291 = vperm.xlu0 %2290, %v26
  %v2292 = vpop.permute.xlu0 %2291
  %2293 = vset.pattern.permute.xlu0 5
  %2294 = vperm.xlu0 %2293, %v27
  %v2295 = vpop.permute.xlu0 %2294
  %2296 = vset.pattern.permute.xlu0 5
  %2297 = vperm.xlu0 %2296, %v28
  %v2298 = vpop.permute.xlu0 %2297
  %2299 = vset.pattern.permute.xlu0 5
  %2300 = vperm.xlu0 %2299, %v29
  %v2301 = vpop.permute.xlu0 %2300
  %2302 = vset.pattern.permute.xlu0 5
  %2303 = vperm.xlu0 %2302, %v30
  %v2304 = vpop.permute.xlu0 %2303
  %2305 = vset.pattern.permute.xlu0 5
  %2306 = vperm.xlu0 %2305, %v31
  %v2307 = vpop.permute.xlu0 %2306
  %2308 = vset.pattern.permute.xlu0 5
  %2309 = vperm.xlu0 %2308, %v32
  %v2310 = vpop.permute.xlu0 %2309
  %2311 = vset.pattern.permute.xlu0 5
  %2312 = vperm.xlu0 %2311, %v33
  %v2313 = vpop.permute.xlu0 %2312
  %2314 = vset.pattern.permute.xlu0 5
  %2315 = vperm.xlu0 %2314, %v34
  %v2316 = vpop.permute.xlu0 %2315
  %2317 = vset.pattern.permute.xlu0 5
  %2318 = vperm.xlu0 %2317, %v35
  %v2319 = vpop.permute.xlu0 %2318
  %2320 = vset.pattern.permute.xlu0 5
  %2321 = vperm.xlu0 %2320, %v36
  %v2322 = vpop.permute.xlu0 %2321
  %2323 = vset.pattern.permute.xlu0 5
  %2324 = vperm.xlu0 %2323, %v37
  %v2325 = vpop.permute.xlu0 %2324
  %2326 = vset.pattern.permute.xlu0 5
  %2327 = vperm.xlu0 %2326, %v38
  %v2328 = vpop.permute.xlu0 %2327
  %2329 = vset.pattern.permute.xlu0 5
  %2330 = vperm.xlu0 %2329, %v39
  %v2331 = vpop.permute.xlu0 %2330
  %2332 = vset.pattern.permute.xlu0 5
  %2333 = vperm.xlu0 %2332, %v40
  %v2334 = vpop.permute.xlu0 %2333
  %2335 = vset.pattern.permute.xlu0 5
  %2336 = vperm.xlu0 %2335, %v41
  %v2337 = vpop.permute.xlu0 %2336
  %2338 = vset.pattern.permute.xlu0 5
  %2339 = vperm.xlu0 %2338, %v42
  %v2340 = vpop.permute.xlu0 %2339
  %2341 = vset.pattern.permute.xlu0 5
  %2342 = vperm.xlu0 %2341, %v43
  %v2343 = vpop.permute.xlu0 %2342
  %2344 = vset.pattern.permute.xlu0 5
  %2345 = vperm.xlu0 %2344, %v44
  %v2346 = vpop.permute.xlu0 %2345
  %2347 = vset.pattern.permute.xlu0 5
  %2348 = vperm.xlu0 %2347, %v45
  %v2349 = vpop.permute.xlu0 %2348
  %2350 = vset.pattern.permute.xlu0 5
  %2351 = vperm.xlu0 %2350, %v46
  %v2352 = vpop.permute.xlu0 %2351
  %2353 = vset.pattern.permute.xlu0 5
  %2354 = vperm.xlu0 %2353, %v47
  %v2355 = vpop.permute.xlu0 %2354
  %2356 = vset.pattern.permute.xlu0 5
  %2357 = vperm.xlu0 %2356, %v48
  %v2358 = vpop.permute.xlu0 %2357
  %2359 = vset.pattern.permute.xlu0 5
  %2360 = vperm.xlu0 %2359, %v49
  %v2361 = vpop.permute.xlu0 %2360
  %2362 = vset.pattern.permute.xlu0 5
  %2363 = vperm.xlu0 %2362, %v50
  %v2364 = vpop.permute.xlu0 %2363
  %2365 = vset.pattern.permute.xlu0 5
  %2366 = vperm.xlu0 %2365, %v51
  %v2367 = vpop.permute.xlu0 %2366
  %2368 = vset.pattern.permute.xlu0 5
  %2369 = vperm.xlu0 %2368, %v52
  %v2370 = vpop.permute.xlu0 %2369
  %2371 = vset.pattern.permute.xlu0 5
  %2372 = vperm.xlu0 %2371, %v53
  %v2373 = vpop.permute.xlu0 %2372
  %2374 = vset.pattern.permute.xlu0 5
  %2375 = vperm.xlu0 %2374, %v54
  %v2376 = vpop.permute.xlu0 %2375
  %2377 = vset.pattern.permute.xlu0 5
  %2378 = vperm.xlu0 %2377, %v55
  %v2379 = vpop.permute.xlu0 %2378
  %2380 = vset.pattern.permute.xlu0 5
  %2381 = vperm.xlu0 %2380, %v56
  %v2382 = vpop.permute.xlu0 %2381
  %2383 = vset.pattern.permute.xlu0 5
  %2384 = vperm.xlu0 %2383, %v57
  %v2385 = vpop.permute.xlu0 %2384
  %2386 = vset.pattern.permute.xlu0 5
  %2387 = vperm.xlu0 %2386, %v58
  %v2388 = vpop.permute.xlu0 %2387
  %2389 = vset.pattern.permute.xlu0 5
  %2390 = vperm.xlu0 %2389, %v59
  %v2391 = vpop.permute.xlu0 %2390
  %2392 = vset.pattern.permute.xlu0 5
  %2393 = vperm.xlu0 %2392, %v60
  %v2394 = vpop.permute.xlu0 %2393
  %2395 = vset.pattern.permute.xlu0 5
  %2396 = vperm.xlu0 %2395, %v61
  %v2397 = vpop.permute.xlu0 %2396
  %2398 = vset.pattern.permute.xlu0 5
  %2399 = vperm.xlu0 %2398, %v62
  %v2400 = vpop.permute.xlu0 %2399
  %2401 = vset.pattern.permute.xlu0 5
  %2402 = vperm.xlu0 %2401, %v63
  %v2403 = vpop.permute.xlu0 %2402
  %2404 = vset.pattern.permute.xlu0 5
  %2405 = vperm.xlu0 %2404, %v64
  %v2406 = vpop.permute.xlu0 %2405
  %2407 = vset.pattern.permute.xlu0 5
  %2408 = vperm.xlu0 %2407, %v65
  %v2409 = vpop.permute.xlu0 %2408
  %2410 = vset.pattern.permute.xlu0 5
  %2411 = vperm.xlu0 %2410, %v66
  %v2412 = vpop.permute.xlu0 %2411
  %2413 = vset.pattern.permute.xlu0 5
  %2414 = vperm.xlu0 %2413, %v67
  %v2415 = vpop.permute.xlu0 %2414
  %2416 = vset.pattern.permute.xlu0 5
  %2417 = vperm.xlu0 %2416, %v68
  %v2418 = vpop.permute.xlu0 %2417
  %2419 = vset.pattern.permute.xlu0 5
  %2420 = vperm.xlu0 %2419, %v69
  %v2421 = vpop.permute.xlu0 %2420
  %2422 = vset.pattern.permute.xlu0 5
  %2423 = vperm.xlu0 %2422, %v70
  %v2424 = vpop.permute.xlu0 %2423
  %2425 = vset.pattern.permute.xlu0 5
  %2426 = vperm.xlu0 %2425, %v71
  %v2427 = vpop.permute.xlu0 %2426
  %2428 = vset.pattern.permute.xlu0 5
  %2429 = vperm.xlu0 %2428, %v72
  %v2430 = vpop.permute.xlu0 %2429
  %2431 = vset.pattern.permute.xlu0 5
  %2432 = vperm.xlu0 %2431, %v73
  %v2433 = vpop.permute.xlu0 %2432
  %2434 = vset.pattern.permute.xlu0 5
  %2435 = vperm.xlu0 %2434, %v74
  %v2436 = vpop.permute.xlu0 %2435
  %2437 = vset.pattern.permute.xlu0 5
  %2438 = vperm.xlu0 %2437, %v75
  %v2439 = vpop.permute.xlu0 %2438
  %2440 = vset.pattern.permute.xlu0 5
  %2441 = vperm.xlu0 %2440, %v76
  %v2442 = vpop.permute.xlu0 %2441
  %2443 = vset.pattern.permute.xlu0 5
  %2444 = vperm.xlu0 %2443, %v77
  %v2445 = vpop.permute.xlu0 %2444
  %2446 = vset.pattern.permute.xlu0 5
  %2447 = vperm.xlu0 %2446, %v78
  %v2448 = vpop.permute.xlu0 %2447
  %vm2449 = vcmp.eq.s32.totalorder %v2259, %v80
  %vm2450 = vcmp.eq.s32.totalorder %v2262, %v80
  %vm2451 = vcmp.eq.s32.totalorder %v2265, %v80
  %vm2452 = vcmp.eq.s32.totalorder %v2268, %v80
  %vm2453 = vcmp.eq.s32.totalorder %v2271, %v80
  %vm2454 = vcmp.eq.s32.totalorder %v2274, %v80
  %vm2455 = vcmp.eq.s32.totalorder %v2277, %v80
  %vm2456 = vcmp.eq.s32.totalorder %v2280, %v80
  %vm2457 = vcmp.eq.s32.totalorder %v2283, %v80
  %vm2458 = vcmp.eq.s32.totalorder %v2286, %v80
  %vm2459 = vcmp.eq.s32.totalorder %v2289, %v80
  %vm2460 = vcmp.eq.s32.totalorder %v2292, %v80
  %vm2461 = vcmp.eq.s32.totalorder %v2295, %v80
  %vm2462 = vcmp.eq.s32.totalorder %v2298, %v80
  %vm2463 = vcmp.eq.s32.totalorder %v2301, %v80
  %vm2464 = vcmp.eq.s32.totalorder %v2304, %v80
  %vm2465 = vcmp.eq.s32.totalorder %v2307, %v80
  %vm2466 = vcmp.eq.s32.totalorder %v2310, %v80
  %vm2467 = vcmp.eq.s32.totalorder %v2313, %v80
  %vm2468 = vcmp.eq.s32.totalorder %v2316, %v80
  %vm2469 = vcmp.eq.s32.totalorder %v2319, %v80
  %vm2470 = vcmp.eq.s32.totalorder %v2322, %v80
  %vm2471 = vcmp.eq.s32.totalorder %v2325, %v80
  %vm2472 = vcmp.eq.s32.totalorder %v2328, %v80
  %vm2473 = vcmp.eq.s32.totalorder %v2331, %v80
  %vm2474 = vcmp.eq.s32.totalorder %v2334, %v80
  %vm2475 = vcmp.eq.s32.totalorder %v2337, %v80
  %vm2476 = vcmp.eq.s32.totalorder %v2340, %v80
  %vm2477 = vcmp.eq.s32.totalorder %v2343, %v80
  %vm2478 = vcmp.eq.s32.totalorder %v2346, %v80
  %vm2479 = vcmp.eq.s32.totalorder %v2349, %v80
  %vm2480 = vcmp.eq.s32.totalorder %v2352, %v80
  %vm2481 = vcmp.eq.s32.totalorder %v2355, %v80
  %vm2482 = vcmp.eq.s32.totalorder %v2358, %v80
  %vm2483 = vcmp.eq.s32.totalorder %v2361, %v80
  %vm2484 = vcmp.eq.s32.totalorder %v2364, %v80
  %vm2485 = vcmp.eq.s32.totalorder %v2367, %v80
  %vm2486 = vcmp.eq.s32.totalorder %v2370, %v80
  %vm2487 = vcmp.eq.s32.totalorder %v2373, %v80
  %vm2488 = vcmp.eq.s32.totalorder %v2376, %v80
  %vm2489 = vcmp.eq.s32.totalorder %v2379, %v80
  %vm2490 = vcmp.eq.s32.totalorder %v2382, %v80
  %vm2491 = vcmp.eq.s32.totalorder %v2385, %v80
  %vm2492 = vcmp.eq.s32.totalorder %v2388, %v80
  %vm2493 = vcmp.eq.s32.totalorder %v2391, %v80
  %vm2494 = vcmp.eq.s32.totalorder %v2394, %v80
  %vm2495 = vcmp.eq.s32.totalorder %v2397, %v80
  %vm2496 = vcmp.eq.s32.totalorder %v2400, %v80
  %vm2497 = vcmp.eq.s32.totalorder %v2403, %v80
  %vm2498 = vcmp.eq.s32.totalorder %v2406, %v80
  %vm2499 = vcmp.eq.s32.totalorder %v2409, %v80
  %vm2500 = vcmp.eq.s32.totalorder %v2412, %v80
  %vm2501 = vcmp.eq.s32.totalorder %v2415, %v80
  %vm2502 = vcmp.eq.s32.totalorder %v2418, %v80
  %vm2503 = vcmp.eq.s32.totalorder %v2421, %v80
  %vm2504 = vcmp.eq.s32.totalorder %v2424, %v80
  %vm2505 = vcmp.eq.s32.totalorder %v2427, %v80
  %vm2506 = vcmp.eq.s32.totalorder %v2430, %v80
  %vm2507 = vcmp.eq.s32.totalorder %v2433, %v80
  %vm2508 = vcmp.eq.s32.totalorder %v2436, %v80
  %vm2509 = vcmp.eq.s32.totalorder %v2439, %v80
  %vm2510 = vcmp.eq.s32.totalorder %v2442, %v80
  %vm2511 = vcmp.eq.s32.totalorder %v2445, %v80
  %vm2512 = vcmp.eq.s32.totalorder %v2448, %v80
  %v2513 = vsel %vm2449, 1, 0
  %v2514 = vsel %vm2450, 1, 0
  %v2515 = vsel %vm2451, 1, 0
  %v2516 = vsel %vm2452, 1, 0
  %v2517 = vsel %vm2453, 1, 0
  %v2518 = vsel %vm2454, 1, 0
  %v2519 = vsel %vm2455, 1, 0
  %v2520 = vsel %vm2456, 1, 0
  %v2521 = vsel %vm2457, 1, 0
  %v2522 = vsel %vm2458, 1, 0
  %v2523 = vsel %vm2459, 1, 0
  %v2524 = vsel %vm2460, 1, 0
  %v2525 = vsel %vm2461, 1, 0
  %v2526 = vsel %vm2462, 1, 0
  %v2527 = vsel %vm2463, 1, 0
  %v2528 = vsel %vm2464, 1, 0
  %v2529 = vsel %vm2465, 1, 0
  %v2530 = vsel %vm2466, 1, 0
  %v2531 = vsel %vm2467, 1, 0
  %v2532 = vsel %vm2468, 1, 0
  %v2533 = vsel %vm2469, 1, 0
  %v2534 = vsel %vm2470, 1, 0
  %v2535 = vsel %vm2471, 1, 0
  %v2536 = vsel %vm2472, 1, 0
  %v2537 = vsel %vm2473, 1, 0
  %v2538 = vsel %vm2474, 1, 0
  %v2539 = vsel %vm2475, 1, 0
  %v2540 = vsel %vm2476, 1, 0
  %v2541 = vsel %vm2477, 1, 0
  %v2542 = vsel %vm2478, 1, 0
  %v2543 = vsel %vm2479, 1, 0
  %v2544 = vsel %vm2480, 1, 0
  %v2545 = vsel %vm2481, 1, 0
  %v2546 = vsel %vm2482, 1, 0
  %v2547 = vsel %vm2483, 1, 0
  %v2548 = vsel %vm2484, 1, 0
  %v2549 = vsel %vm2485, 1, 0
  %v2550 = vsel %vm2486, 1, 0
  %v2551 = vsel %vm2487, 1, 0
  %v2552 = vsel %vm2488, 1, 0
  %v2553 = vsel %vm2489, 1, 0
  %v2554 = vsel %vm2490, 1, 0
  %v2555 = vsel %vm2491, 1, 0
  %v2556 = vsel %vm2492, 1, 0
  %v2557 = vsel %vm2493, 1, 0
  %v2558 = vsel %vm2494, 1, 0
  %v2559 = vsel %vm2495, 1, 0
  %v2560 = vsel %vm2496, 1, 0
  %v2561 = vsel %vm2497, 1, 0
  %v2562 = vsel %vm2498, 1, 0
  %v2563 = vsel %vm2499, 1, 0
  %v2564 = vsel %vm2500, 1, 0
  %v2565 = vsel %vm2501, 1, 0
  %v2566 = vsel %vm2502, 1, 0
  %v2567 = vsel %vm2503, 1, 0
  %v2568 = vsel %vm2504, 1, 0
  %v2569 = vsel %vm2505, 1, 0
  %v2570 = vsel %vm2506, 1, 0
  %v2571 = vsel %vm2507, 1, 0
  %v2572 = vsel %vm2508, 1, 0
  %v2573 = vsel %vm2509, 1, 0
  %v2574 = vsel %vm2510, 1, 0
  %v2575 = vsel %vm2511, 1, 0
  %v2576 = vsel %vm2512, 1, 0
  %v2577 = vcvt.s32.f32 %v2513
  %v2578 = vcvt.s32.f32 %v2514
  %v2579 = vcvt.s32.f32 %v2515
  %v2580 = vcvt.s32.f32 %v2516
  %v2581 = vcvt.s32.f32 %v2517
  %v2582 = vcvt.s32.f32 %v2518
  %v2583 = vcvt.s32.f32 %v2519
  %v2584 = vcvt.s32.f32 %v2520
  %v2585 = vcvt.s32.f32 %v2521
  %v2586 = vcvt.s32.f32 %v2522
  %v2587 = vcvt.s32.f32 %v2523
  %v2588 = vcvt.s32.f32 %v2524
  %v2589 = vcvt.s32.f32 %v2525
  %v2590 = vcvt.s32.f32 %v2526
  %v2591 = vcvt.s32.f32 %v2527
  %v2592 = vcvt.s32.f32 %v2528
  %v2593 = vcvt.s32.f32 %v2529
  %v2594 = vcvt.s32.f32 %v2530
  %v2595 = vcvt.s32.f32 %v2531
  %v2596 = vcvt.s32.f32 %v2532
  %v2597 = vcvt.s32.f32 %v2533
  %v2598 = vcvt.s32.f32 %v2534
  %v2599 = vcvt.s32.f32 %v2535
  %v2600 = vcvt.s32.f32 %v2536
  %v2601 = vcvt.s32.f32 %v2537
  %v2602 = vcvt.s32.f32 %v2538
  %v2603 = vcvt.s32.f32 %v2539
  %v2604 = vcvt.s32.f32 %v2540
  %v2605 = vcvt.s32.f32 %v2541
  %v2606 = vcvt.s32.f32 %v2542
  %v2607 = vcvt.s32.f32 %v2543
  %v2608 = vcvt.s32.f32 %v2544
  %v2609 = vcvt.s32.f32 %v2545
  %v2610 = vcvt.s32.f32 %v2546
  %v2611 = vcvt.s32.f32 %v2547
  %v2612 = vcvt.s32.f32 %v2548
  %v2613 = vcvt.s32.f32 %v2549
  %v2614 = vcvt.s32.f32 %v2550
  %v2615 = vcvt.s32.f32 %v2551
  %v2616 = vcvt.s32.f32 %v2552
  %v2617 = vcvt.s32.f32 %v2553
  %v2618 = vcvt.s32.f32 %v2554
  %v2619 = vcvt.s32.f32 %v2555
  %v2620 = vcvt.s32.f32 %v2556
  %v2621 = vcvt.s32.f32 %v2557
  %v2622 = vcvt.s32.f32 %v2558
  %v2623 = vcvt.s32.f32 %v2559
  %v2624 = vcvt.s32.f32 %v2560
  %v2625 = vcvt.s32.f32 %v2561
  %v2626 = vcvt.s32.f32 %v2562
  %v2627 = vcvt.s32.f32 %v2563
  %v2628 = vcvt.s32.f32 %v2564
  %v2629 = vcvt.s32.f32 %v2565
  %v2630 = vcvt.s32.f32 %v2566
  %v2631 = vcvt.s32.f32 %v2567
  %v2632 = vcvt.s32.f32 %v2568
  %v2633 = vcvt.s32.f32 %v2569
  %v2634 = vcvt.s32.f32 %v2570
  %v2635 = vcvt.s32.f32 %v2571
  %v2636 = vcvt.s32.f32 %v2572
  %v2637 = vcvt.s32.f32 %v2573
  %v2638 = vcvt.s32.f32 %v2574
  %v2639 = vcvt.s32.f32 %v2575
  %v2640 = vcvt.s32.f32 %v2576
  %v2641 = vadd.f32 %v2193, %v2577
  %v2642 = vadd.f32 %v2194, %v2578
  %v2643 = vadd.f32 %v2195, %v2579
  %v2644 = vadd.f32 %v2196, %v2580
  %v2645 = vadd.f32 %v2197, %v2581
  %v2646 = vadd.f32 %v2198, %v2582
  %v2647 = vadd.f32 %v2199, %v2583
  %v2648 = vadd.f32 %v2200, %v2584
  %v2649 = vadd.f32 %v2201, %v2585
  %v2650 = vadd.f32 %v2202, %v2586
  %v2651 = vadd.f32 %v2203, %v2587
  %v2652 = vadd.f32 %v2204, %v2588
  %v2653 = vadd.f32 %v2205, %v2589
  %v2654 = vadd.f32 %v2206, %v2590
  %v2655 = vadd.f32 %v2207, %v2591
  %v2656 = vadd.f32 %v2208, %v2592
  %v2657 = vadd.f32 %v2209, %v2593
  %v2658 = vadd.f32 %v2210, %v2594
  %v2659 = vadd.f32 %v2211, %v2595
  %v2660 = vadd.f32 %v2212, %v2596
  %v2661 = vadd.f32 %v2213, %v2597
  %v2662 = vadd.f32 %v2214, %v2598
  %v2663 = vadd.f32 %v2215, %v2599
  %v2664 = vadd.f32 %v2216, %v2600
  %v2665 = vadd.f32 %v2217, %v2601
  %v2666 = vadd.f32 %v2218, %v2602
  %v2667 = vadd.f32 %v2219, %v2603
  %v2668 = vadd.f32 %v2220, %v2604
  %v2669 = vadd.f32 %v2221, %v2605
  %v2670 = vadd.f32 %v2222, %v2606
  %v2671 = vadd.f32 %v2223, %v2607
  %v2672 = vadd.f32 %v2224, %v2608
  %v2673 = vadd.f32 %v2225, %v2609
  %v2674 = vadd.f32 %v2226, %v2610
  %v2675 = vadd.f32 %v2227, %v2611
  %v2676 = vadd.f32 %v2228, %v2612
  %v2677 = vadd.f32 %v2229, %v2613
  %v2678 = vadd.f32 %v2230, %v2614
  %v2679 = vadd.f32 %v2231, %v2615
  %v2680 = vadd.f32 %v2232, %v2616
  %v2681 = vadd.f32 %v2233, %v2617
  %v2682 = vadd.f32 %v2234, %v2618
  %v2683 = vadd.f32 %v2235, %v2619
  %v2684 = vadd.f32 %v2236, %v2620
  %v2685 = vadd.f32 %v2237, %v2621
  %v2686 = vadd.f32 %v2238, %v2622
  %v2687 = vadd.f32 %v2239, %v2623
  %v2688 = vadd.f32 %v2240, %v2624
  %v2689 = vadd.f32 %v2241, %v2625
  %v2690 = vadd.f32 %v2242, %v2626
  %v2691 = vadd.f32 %v2243, %v2627
  %v2692 = vadd.f32 %v2244, %v2628
  %v2693 = vadd.f32 %v2245, %v2629
  %v2694 = vadd.f32 %v2246, %v2630
  %v2695 = vadd.f32 %v2247, %v2631
  %v2696 = vadd.f32 %v2248, %v2632
  %v2697 = vadd.f32 %v2249, %v2633
  %v2698 = vadd.f32 %v2250, %v2634
  %v2699 = vadd.f32 %v2251, %v2635
  %v2700 = vadd.f32 %v2252, %v2636
  %v2701 = vadd.f32 %v2253, %v2637
  %v2702 = vadd.f32 %v2254, %v2638
  %v2703 = vadd.f32 %v2255, %v2639
  %v2704 = vadd.f32 %v2256, %v2640
  %2705 = vset.pattern.permute.xlu0 6
  %2706 = vperm.xlu0 %2705, %v15
  %v2707 = vpop.permute.xlu0 %2706
  %2708 = vset.pattern.permute.xlu0 6
  %2709 = vperm.xlu0 %2708, %v16
  %v2710 = vpop.permute.xlu0 %2709
  %2711 = vset.pattern.permute.xlu0 6
  %2712 = vperm.xlu0 %2711, %v17
  %v2713 = vpop.permute.xlu0 %2712
  %2714 = vset.pattern.permute.xlu0 6
  %2715 = vperm.xlu0 %2714, %v18
  %v2716 = vpop.permute.xlu0 %2715
  %2717 = vset.pattern.permute.xlu0 6
  %2718 = vperm.xlu0 %2717, %v19
  %v2719 = vpop.permute.xlu0 %2718
  %2720 = vset.pattern.permute.xlu0 6
  %2721 = vperm.xlu0 %2720, %v20
  %v2722 = vpop.permute.xlu0 %2721
  %2723 = vset.pattern.permute.xlu0 6
  %2724 = vperm.xlu0 %2723, %v21
  %v2725 = vpop.permute.xlu0 %2724
  %2726 = vset.pattern.permute.xlu0 6
  %2727 = vperm.xlu0 %2726, %v22
  %v2728 = vpop.permute.xlu0 %2727
  %2729 = vset.pattern.permute.xlu0 6
  %2730 = vperm.xlu0 %2729, %v23
  %v2731 = vpop.permute.xlu0 %2730
  %2732 = vset.pattern.permute.xlu0 6
  %2733 = vperm.xlu0 %2732, %v24
  %v2734 = vpop.permute.xlu0 %2733
  %2735 = vset.pattern.permute.xlu0 6
  %2736 = vperm.xlu0 %2735, %v25
  %v2737 = vpop.permute.xlu0 %2736
  %2738 = vset.pattern.permute.xlu0 6
  %2739 = vperm.xlu0 %2738, %v26
  %v2740 = vpop.permute.xlu0 %2739
  %2741 = vset.pattern.permute.xlu0 6
  %2742 = vperm.xlu0 %2741, %v27
  %v2743 = vpop.permute.xlu0 %2742
  %2744 = vset.pattern.permute.xlu0 6
  %2745 = vperm.xlu0 %2744, %v28
  %v2746 = vpop.permute.xlu0 %2745
  %2747 = vset.pattern.permute.xlu0 6
  %2748 = vperm.xlu0 %2747, %v29
  %v2749 = vpop.permute.xlu0 %2748
  %2750 = vset.pattern.permute.xlu0 6
  %2751 = vperm.xlu0 %2750, %v30
  %v2752 = vpop.permute.xlu0 %2751
  %2753 = vset.pattern.permute.xlu0 6
  %2754 = vperm.xlu0 %2753, %v31
  %v2755 = vpop.permute.xlu0 %2754
  %2756 = vset.pattern.permute.xlu0 6
  %2757 = vperm.xlu0 %2756, %v32
  %v2758 = vpop.permute.xlu0 %2757
  %2759 = vset.pattern.permute.xlu0 6
  %2760 = vperm.xlu0 %2759, %v33
  %v2761 = vpop.permute.xlu0 %2760
  %2762 = vset.pattern.permute.xlu0 6
  %2763 = vperm.xlu0 %2762, %v34
  %v2764 = vpop.permute.xlu0 %2763
  %2765 = vset.pattern.permute.xlu0 6
  %2766 = vperm.xlu0 %2765, %v35
  %v2767 = vpop.permute.xlu0 %2766
  %2768 = vset.pattern.permute.xlu0 6
  %2769 = vperm.xlu0 %2768, %v36
  %v2770 = vpop.permute.xlu0 %2769
  %2771 = vset.pattern.permute.xlu0 6
  %2772 = vperm.xlu0 %2771, %v37
  %v2773 = vpop.permute.xlu0 %2772
  %2774 = vset.pattern.permute.xlu0 6
  %2775 = vperm.xlu0 %2774, %v38
  %v2776 = vpop.permute.xlu0 %2775
  %2777 = vset.pattern.permute.xlu0 6
  %2778 = vperm.xlu0 %2777, %v39
  %v2779 = vpop.permute.xlu0 %2778
  %2780 = vset.pattern.permute.xlu0 6
  %2781 = vperm.xlu0 %2780, %v40
  %v2782 = vpop.permute.xlu0 %2781
  %2783 = vset.pattern.permute.xlu0 6
  %2784 = vperm.xlu0 %2783, %v41
  %v2785 = vpop.permute.xlu0 %2784
  %2786 = vset.pattern.permute.xlu0 6
  %2787 = vperm.xlu0 %2786, %v42
  %v2788 = vpop.permute.xlu0 %2787
  %2789 = vset.pattern.permute.xlu0 6
  %2790 = vperm.xlu0 %2789, %v43
  %v2791 = vpop.permute.xlu0 %2790
  %2792 = vset.pattern.permute.xlu0 6
  %2793 = vperm.xlu0 %2792, %v44
  %v2794 = vpop.permute.xlu0 %2793
  %2795 = vset.pattern.permute.xlu0 6
  %2796 = vperm.xlu0 %2795, %v45
  %v2797 = vpop.permute.xlu0 %2796
  %2798 = vset.pattern.permute.xlu0 6
  %2799 = vperm.xlu0 %2798, %v46
  %v2800 = vpop.permute.xlu0 %2799
  %2801 = vset.pattern.permute.xlu0 6
  %2802 = vperm.xlu0 %2801, %v47
  %v2803 = vpop.permute.xlu0 %2802
  %2804 = vset.pattern.permute.xlu0 6
  %2805 = vperm.xlu0 %2804, %v48
  %v2806 = vpop.permute.xlu0 %2805
  %2807 = vset.pattern.permute.xlu0 6
  %2808 = vperm.xlu0 %2807, %v49
  %v2809 = vpop.permute.xlu0 %2808
  %2810 = vset.pattern.permute.xlu0 6
  %2811 = vperm.xlu0 %2810, %v50
  %v2812 = vpop.permute.xlu0 %2811
  %2813 = vset.pattern.permute.xlu0 6
  %2814 = vperm.xlu0 %2813, %v51
  %v2815 = vpop.permute.xlu0 %2814
  %2816 = vset.pattern.permute.xlu0 6
  %2817 = vperm.xlu0 %2816, %v52
  %v2818 = vpop.permute.xlu0 %2817
  %2819 = vset.pattern.permute.xlu0 6
  %2820 = vperm.xlu0 %2819, %v53
  %v2821 = vpop.permute.xlu0 %2820
  %2822 = vset.pattern.permute.xlu0 6
  %2823 = vperm.xlu0 %2822, %v54
  %v2824 = vpop.permute.xlu0 %2823
  %2825 = vset.pattern.permute.xlu0 6
  %2826 = vperm.xlu0 %2825, %v55
  %v2827 = vpop.permute.xlu0 %2826
  %2828 = vset.pattern.permute.xlu0 6
  %2829 = vperm.xlu0 %2828, %v56
  %v2830 = vpop.permute.xlu0 %2829
  %2831 = vset.pattern.permute.xlu0 6
  %2832 = vperm.xlu0 %2831, %v57
  %v2833 = vpop.permute.xlu0 %2832
  %2834 = vset.pattern.permute.xlu0 6
  %2835 = vperm.xlu0 %2834, %v58
  %v2836 = vpop.permute.xlu0 %2835
  %2837 = vset.pattern.permute.xlu0 6
  %2838 = vperm.xlu0 %2837, %v59
  %v2839 = vpop.permute.xlu0 %2838
  %2840 = vset.pattern.permute.xlu0 6
  %2841 = vperm.xlu0 %2840, %v60
  %v2842 = vpop.permute.xlu0 %2841
  %2843 = vset.pattern.permute.xlu0 6
  %2844 = vperm.xlu0 %2843, %v61
  %v2845 = vpop.permute.xlu0 %2844
  %2846 = vset.pattern.permute.xlu0 6
  %2847 = vperm.xlu0 %2846, %v62
  %v2848 = vpop.permute.xlu0 %2847
  %2849 = vset.pattern.permute.xlu0 6
  %2850 = vperm.xlu0 %2849, %v63
  %v2851 = vpop.permute.xlu0 %2850
  %2852 = vset.pattern.permute.xlu0 6
  %2853 = vperm.xlu0 %2852, %v64
  %v2854 = vpop.permute.xlu0 %2853
  %2855 = vset.pattern.permute.xlu0 6
  %2856 = vperm.xlu0 %2855, %v65
  %v2857 = vpop.permute.xlu0 %2856
  %2858 = vset.pattern.permute.xlu0 6
  %2859 = vperm.xlu0 %2858, %v66
  %v2860 = vpop.permute.xlu0 %2859
  %2861 = vset.pattern.permute.xlu0 6
  %2862 = vperm.xlu0 %2861, %v67
  %v2863 = vpop.permute.xlu0 %2862
  %2864 = vset.pattern.permute.xlu0 6
  %2865 = vperm.xlu0 %2864, %v68
  %v2866 = vpop.permute.xlu0 %2865
  %2867 = vset.pattern.permute.xlu0 6
  %2868 = vperm.xlu0 %2867, %v69
  %v2869 = vpop.permute.xlu0 %2868
  %2870 = vset.pattern.permute.xlu0 6
  %2871 = vperm.xlu0 %2870, %v70
  %v2872 = vpop.permute.xlu0 %2871
  %2873 = vset.pattern.permute.xlu0 6
  %2874 = vperm.xlu0 %2873, %v71
  %v2875 = vpop.permute.xlu0 %2874
  %2876 = vset.pattern.permute.xlu0 6
  %2877 = vperm.xlu0 %2876, %v72
  %v2878 = vpop.permute.xlu0 %2877
  %2879 = vset.pattern.permute.xlu0 6
  %2880 = vperm.xlu0 %2879, %v73
  %v2881 = vpop.permute.xlu0 %2880
  %2882 = vset.pattern.permute.xlu0 6
  %2883 = vperm.xlu0 %2882, %v74
  %v2884 = vpop.permute.xlu0 %2883
  %2885 = vset.pattern.permute.xlu0 6
  %2886 = vperm.xlu0 %2885, %v75
  %v2887 = vpop.permute.xlu0 %2886
  %2888 = vset.pattern.permute.xlu0 6
  %2889 = vperm.xlu0 %2888, %v76
  %v2890 = vpop.permute.xlu0 %2889
  %2891 = vset.pattern.permute.xlu0 6
  %2892 = vperm.xlu0 %2891, %v77
  %v2893 = vpop.permute.xlu0 %2892
  %2894 = vset.pattern.permute.xlu0 6
  %2895 = vperm.xlu0 %2894, %v78
  %v2896 = vpop.permute.xlu0 %2895
  %vm2897 = vcmp.eq.s32.totalorder %v2707, %v80
  %vm2898 = vcmp.eq.s32.totalorder %v2710, %v80
  %vm2899 = vcmp.eq.s32.totalorder %v2713, %v80
  %vm2900 = vcmp.eq.s32.totalorder %v2716, %v80
  %vm2901 = vcmp.eq.s32.totalorder %v2719, %v80
  %vm2902 = vcmp.eq.s32.totalorder %v2722, %v80
  %vm2903 = vcmp.eq.s32.totalorder %v2725, %v80
  %vm2904 = vcmp.eq.s32.totalorder %v2728, %v80
  %vm2905 = vcmp.eq.s32.totalorder %v2731, %v80
  %vm2906 = vcmp.eq.s32.totalorder %v2734, %v80
  %vm2907 = vcmp.eq.s32.totalorder %v2737, %v80
  %vm2908 = vcmp.eq.s32.totalorder %v2740, %v80
  %vm2909 = vcmp.eq.s32.totalorder %v2743, %v80
  %vm2910 = vcmp.eq.s32.totalorder %v2746, %v80
  %vm2911 = vcmp.eq.s32.totalorder %v2749, %v80
  %vm2912 = vcmp.eq.s32.totalorder %v2752, %v80
  %vm2913 = vcmp.eq.s32.totalorder %v2755, %v80
  %vm2914 = vcmp.eq.s32.totalorder %v2758, %v80
  %vm2915 = vcmp.eq.s32.totalorder %v2761, %v80
  %vm2916 = vcmp.eq.s32.totalorder %v2764, %v80
  %vm2917 = vcmp.eq.s32.totalorder %v2767, %v80
  %vm2918 = vcmp.eq.s32.totalorder %v2770, %v80
  %vm2919 = vcmp.eq.s32.totalorder %v2773, %v80
  %vm2920 = vcmp.eq.s32.totalorder %v2776, %v80
  %vm2921 = vcmp.eq.s32.totalorder %v2779, %v80
  %vm2922 = vcmp.eq.s32.totalorder %v2782, %v80
  %vm2923 = vcmp.eq.s32.totalorder %v2785, %v80
  %vm2924 = vcmp.eq.s32.totalorder %v2788, %v80
  %vm2925 = vcmp.eq.s32.totalorder %v2791, %v80
  %vm2926 = vcmp.eq.s32.totalorder %v2794, %v80
  %vm2927 = vcmp.eq.s32.totalorder %v2797, %v80
  %vm2928 = vcmp.eq.s32.totalorder %v2800, %v80
  %vm2929 = vcmp.eq.s32.totalorder %v2803, %v80
  %vm2930 = vcmp.eq.s32.totalorder %v2806, %v80
  %vm2931 = vcmp.eq.s32.totalorder %v2809, %v80
  %vm2932 = vcmp.eq.s32.totalorder %v2812, %v80
  %vm2933 = vcmp.eq.s32.totalorder %v2815, %v80
  %vm2934 = vcmp.eq.s32.totalorder %v2818, %v80
  %vm2935 = vcmp.eq.s32.totalorder %v2821, %v80
  %vm2936 = vcmp.eq.s32.totalorder %v2824, %v80
  %vm2937 = vcmp.eq.s32.totalorder %v2827, %v80
  %vm2938 = vcmp.eq.s32.totalorder %v2830, %v80
  %vm2939 = vcmp.eq.s32.totalorder %v2833, %v80
  %vm2940 = vcmp.eq.s32.totalorder %v2836, %v80
  %vm2941 = vcmp.eq.s32.totalorder %v2839, %v80
  %vm2942 = vcmp.eq.s32.totalorder %v2842, %v80
  %vm2943 = vcmp.eq.s32.totalorder %v2845, %v80
  %vm2944 = vcmp.eq.s32.totalorder %v2848, %v80
  %vm2945 = vcmp.eq.s32.totalorder %v2851, %v80
  %vm2946 = vcmp.eq.s32.totalorder %v2854, %v80
  %vm2947 = vcmp.eq.s32.totalorder %v2857, %v80
  %vm2948 = vcmp.eq.s32.totalorder %v2860, %v80
  %vm2949 = vcmp.eq.s32.totalorder %v2863, %v80
  %vm2950 = vcmp.eq.s32.totalorder %v2866, %v80
  %vm2951 = vcmp.eq.s32.totalorder %v2869, %v80
  %vm2952 = vcmp.eq.s32.totalorder %v2872, %v80
  %vm2953 = vcmp.eq.s32.totalorder %v2875, %v80
  %vm2954 = vcmp.eq.s32.totalorder %v2878, %v80
  %vm2955 = vcmp.eq.s32.totalorder %v2881, %v80
  %vm2956 = vcmp.eq.s32.totalorder %v2884, %v80
  %vm2957 = vcmp.eq.s32.totalorder %v2887, %v80
  %vm2958 = vcmp.eq.s32.totalorder %v2890, %v80
  %vm2959 = vcmp.eq.s32.totalorder %v2893, %v80
  %vm2960 = vcmp.eq.s32.totalorder %v2896, %v80
  %v2961 = vsel %vm2897, 1, 0
  %v2962 = vsel %vm2898, 1, 0
  %v2963 = vsel %vm2899, 1, 0
  %v2964 = vsel %vm2900, 1, 0
  %v2965 = vsel %vm2901, 1, 0
  %v2966 = vsel %vm2902, 1, 0
  %v2967 = vsel %vm2903, 1, 0
  %v2968 = vsel %vm2904, 1, 0
  %v2969 = vsel %vm2905, 1, 0
  %v2970 = vsel %vm2906, 1, 0
  %v2971 = vsel %vm2907, 1, 0
  %v2972 = vsel %vm2908, 1, 0
  %v2973 = vsel %vm2909, 1, 0
  %v2974 = vsel %vm2910, 1, 0
  %v2975 = vsel %vm2911, 1, 0
  %v2976 = vsel %vm2912, 1, 0
  %v2977 = vsel %vm2913, 1, 0
  %v2978 = vsel %vm2914, 1, 0
  %v2979 = vsel %vm2915, 1, 0
  %v2980 = vsel %vm2916, 1, 0
  %v2981 = vsel %vm2917, 1, 0
  %v2982 = vsel %vm2918, 1, 0
  %v2983 = vsel %vm2919, 1, 0
  %v2984 = vsel %vm2920, 1, 0
  %v2985 = vsel %vm2921, 1, 0
  %v2986 = vsel %vm2922, 1, 0
  %v2987 = vsel %vm2923, 1, 0
  %v2988 = vsel %vm2924, 1, 0
  %v2989 = vsel %vm2925, 1, 0
  %v2990 = vsel %vm2926, 1, 0
  %v2991 = vsel %vm2927, 1, 0
  %v2992 = vsel %vm2928, 1, 0
  %v2993 = vsel %vm2929, 1, 0
  %v2994 = vsel %vm2930, 1, 0
  %v2995 = vsel %vm2931, 1, 0
  %v2996 = vsel %vm2932, 1, 0
  %v2997 = vsel %vm2933, 1, 0
  %v2998 = vsel %vm2934, 1, 0
  %v2999 = vsel %vm2935, 1, 0
  %v3000 = vsel %vm2936, 1, 0
  %v3001 = vsel %vm2937, 1, 0
  %v3002 = vsel %vm2938, 1, 0
  %v3003 = vsel %vm2939, 1, 0
  %v3004 = vsel %vm2940, 1, 0
  %v3005 = vsel %vm2941, 1, 0
  %v3006 = vsel %vm2942, 1, 0
  %v3007 = vsel %vm2943, 1, 0
  %v3008 = vsel %vm2944, 1, 0
  %v3009 = vsel %vm2945, 1, 0
  %v3010 = vsel %vm2946, 1, 0
  %v3011 = vsel %vm2947, 1, 0
  %v3012 = vsel %vm2948, 1, 0
  %v3013 = vsel %vm2949, 1, 0
  %v3014 = vsel %vm2950, 1, 0
  %v3015 = vsel %vm2951, 1, 0
  %v3016 = vsel %vm2952, 1, 0
  %v3017 = vsel %vm2953, 1, 0
  %v3018 = vsel %vm2954, 1, 0
  %v3019 = vsel %vm2955, 1, 0
  %v3020 = vsel %vm2956, 1, 0
  %v3021 = vsel %vm2957, 1, 0
  %v3022 = vsel %vm2958, 1, 0
  %v3023 = vsel %vm2959, 1, 0
  %v3024 = vsel %vm2960, 1, 0
  %v3025 = vcvt.s32.f32 %v2961
  %v3026 = vcvt.s32.f32 %v2962
  %v3027 = vcvt.s32.f32 %v2963
  %v3028 = vcvt.s32.f32 %v2964
  %v3029 = vcvt.s32.f32 %v2965
  %v3030 = vcvt.s32.f32 %v2966
  %v3031 = vcvt.s32.f32 %v2967
  %v3032 = vcvt.s32.f32 %v2968
  %v3033 = vcvt.s32.f32 %v2969
  %v3034 = vcvt.s32.f32 %v2970
  %v3035 = vcvt.s32.f32 %v2971
  %v3036 = vcvt.s32.f32 %v2972
  %v3037 = vcvt.s32.f32 %v2973
  %v3038 = vcvt.s32.f32 %v2974
  %v3039 = vcvt.s32.f32 %v2975
  %v3040 = vcvt.s32.f32 %v2976
  %v3041 = vcvt.s32.f32 %v2977
  %v3042 = vcvt.s32.f32 %v2978
  %v3043 = vcvt.s32.f32 %v2979
  %v3044 = vcvt.s32.f32 %v2980
  %v3045 = vcvt.s32.f32 %v2981
  %v3046 = vcvt.s32.f32 %v2982
  %v3047 = vcvt.s32.f32 %v2983
  %v3048 = vcvt.s32.f32 %v2984
  %v3049 = vcvt.s32.f32 %v2985
  %v3050 = vcvt.s32.f32 %v2986
  %v3051 = vcvt.s32.f32 %v2987
  %v3052 = vcvt.s32.f32 %v2988
  %v3053 = vcvt.s32.f32 %v2989
  %v3054 = vcvt.s32.f32 %v2990
  %v3055 = vcvt.s32.f32 %v2991
  %v3056 = vcvt.s32.f32 %v2992
  %v3057 = vcvt.s32.f32 %v2993
  %v3058 = vcvt.s32.f32 %v2994
  %v3059 = vcvt.s32.f32 %v2995
  %v3060 = vcvt.s32.f32 %v2996
  %v3061 = vcvt.s32.f32 %v2997
  %v3062 = vcvt.s32.f32 %v2998
  %v3063 = vcvt.s32.f32 %v2999
  %v3064 = vcvt.s32.f32 %v3000
  %v3065 = vcvt.s32.f32 %v3001
  %v3066 = vcvt.s32.f32 %v3002
  %v3067 = vcvt.s32.f32 %v3003
  %v3068 = vcvt.s32.f32 %v3004
  %v3069 = vcvt.s32.f32 %v3005
  %v3070 = vcvt.s32.f32 %v3006
  %v3071 = vcvt.s32.f32 %v3007
  %v3072 = vcvt.s32.f32 %v3008
  %v3073 = vcvt.s32.f32 %v3009
  %v3074 = vcvt.s32.f32 %v3010
  %v3075 = vcvt.s32.f32 %v3011
  %v3076 = vcvt.s32.f32 %v3012
  %v3077 = vcvt.s32.f32 %v3013
  %v3078 = vcvt.s32.f32 %v3014
  %v3079 = vcvt.s32.f32 %v3015
  %v3080 = vcvt.s32.f32 %v3016
  %v3081 = vcvt.s32.f32 %v3017
  %v3082 = vcvt.s32.f32 %v3018
  %v3083 = vcvt.s32.f32 %v3019
  %v3084 = vcvt.s32.f32 %v3020
  %v3085 = vcvt.s32.f32 %v3021
  %v3086 = vcvt.s32.f32 %v3022
  %v3087 = vcvt.s32.f32 %v3023
  %v3088 = vcvt.s32.f32 %v3024
  %v3089 = vadd.f32 %v2641, %v3025
  %v3090 = vadd.f32 %v2642, %v3026
  %v3091 = vadd.f32 %v2643, %v3027
  %v3092 = vadd.f32 %v2644, %v3028
  %v3093 = vadd.f32 %v2645, %v3029
  %v3094 = vadd.f32 %v2646, %v3030
  %v3095 = vadd.f32 %v2647, %v3031
  %v3096 = vadd.f32 %v2648, %v3032
  %v3097 = vadd.f32 %v2649, %v3033
  %v3098 = vadd.f32 %v2650, %v3034
  %v3099 = vadd.f32 %v2651, %v3035
  %v3100 = vadd.f32 %v2652, %v3036
  %v3101 = vadd.f32 %v2653, %v3037
  %v3102 = vadd.f32 %v2654, %v3038
  %v3103 = vadd.f32 %v2655, %v3039
  %v3104 = vadd.f32 %v2656, %v3040
  %v3105 = vadd.f32 %v2657, %v3041
  %v3106 = vadd.f32 %v2658, %v3042
  %v3107 = vadd.f32 %v2659, %v3043
  %v3108 = vadd.f32 %v2660, %v3044
  %v3109 = vadd.f32 %v2661, %v3045
  %v3110 = vadd.f32 %v2662, %v3046
  %v3111 = vadd.f32 %v2663, %v3047
  %v3112 = vadd.f32 %v2664, %v3048
  %v3113 = vadd.f32 %v2665, %v3049
  %v3114 = vadd.f32 %v2666, %v3050
  %v3115 = vadd.f32 %v2667, %v3051
  %v3116 = vadd.f32 %v2668, %v3052
  %v3117 = vadd.f32 %v2669, %v3053
  %v3118 = vadd.f32 %v2670, %v3054
  %v3119 = vadd.f32 %v2671, %v3055
  %v3120 = vadd.f32 %v2672, %v3056
  %v3121 = vadd.f32 %v2673, %v3057
  %v3122 = vadd.f32 %v2674, %v3058
  %v3123 = vadd.f32 %v2675, %v3059
  %v3124 = vadd.f32 %v2676, %v3060
  %v3125 = vadd.f32 %v2677, %v3061
  %v3126 = vadd.f32 %v2678, %v3062
  %v3127 = vadd.f32 %v2679, %v3063
  %v3128 = vadd.f32 %v2680, %v3064
  %v3129 = vadd.f32 %v2681, %v3065
  %v3130 = vadd.f32 %v2682, %v3066
  %v3131 = vadd.f32 %v2683, %v3067
  %v3132 = vadd.f32 %v2684, %v3068
  %v3133 = vadd.f32 %v2685, %v3069
  %v3134 = vadd.f32 %v2686, %v3070
  %v3135 = vadd.f32 %v2687, %v3071
  %v3136 = vadd.f32 %v2688, %v3072
  %v3137 = vadd.f32 %v2689, %v3073
  %v3138 = vadd.f32 %v2690, %v3074
  %v3139 = vadd.f32 %v2691, %v3075
  %v3140 = vadd.f32 %v2692, %v3076
  %v3141 = vadd.f32 %v2693, %v3077
  %v3142 = vadd.f32 %v2694, %v3078
  %v3143 = vadd.f32 %v2695, %v3079
  %v3144 = vadd.f32 %v2696, %v3080
  %v3145 = vadd.f32 %v2697, %v3081
  %v3146 = vadd.f32 %v2698, %v3082
  %v3147 = vadd.f32 %v2699, %v3083
  %v3148 = vadd.f32 %v2700, %v3084
  %v3149 = vadd.f32 %v2701, %v3085
  %v3150 = vadd.f32 %v2702, %v3086
  %v3151 = vadd.f32 %v2703, %v3087
  %v3152 = vadd.f32 %v2704, %v3088
  %3153 = vset.pattern.permute.xlu0 7
  %3154 = vperm.xlu0 %3153, %v15
  %v3155 = vpop.permute.xlu0 %3154
  %3156 = vset.pattern.permute.xlu0 7
  %3157 = vperm.xlu0 %3156, %v16
  %v3158 = vpop.permute.xlu0 %3157
  %3159 = vset.pattern.permute.xlu0 7
  %3160 = vperm.xlu0 %3159, %v17
  %v3161 = vpop.permute.xlu0 %3160
  %3162 = vset.pattern.permute.xlu0 7
  %3163 = vperm.xlu0 %3162, %v18
  %v3164 = vpop.permute.xlu0 %3163
  %3165 = vset.pattern.permute.xlu0 7
  %3166 = vperm.xlu0 %3165, %v19
  %v3167 = vpop.permute.xlu0 %3166
  %3168 = vset.pattern.permute.xlu0 7
  %3169 = vperm.xlu0 %3168, %v20
  %v3170 = vpop.permute.xlu0 %3169
  %3171 = vset.pattern.permute.xlu0 7
  %3172 = vperm.xlu0 %3171, %v21
  %v3173 = vpop.permute.xlu0 %3172
  %3174 = vset.pattern.permute.xlu0 7
  %3175 = vperm.xlu0 %3174, %v22
  %v3176 = vpop.permute.xlu0 %3175
  %3177 = vset.pattern.permute.xlu0 7
  %3178 = vperm.xlu0 %3177, %v23
  %v3179 = vpop.permute.xlu0 %3178
  %3180 = vset.pattern.permute.xlu0 7
  %3181 = vperm.xlu0 %3180, %v24
  %v3182 = vpop.permute.xlu0 %3181
  %3183 = vset.pattern.permute.xlu0 7
  %3184 = vperm.xlu0 %3183, %v25
  %v3185 = vpop.permute.xlu0 %3184
  %3186 = vset.pattern.permute.xlu0 7
  %3187 = vperm.xlu0 %3186, %v26
  %v3188 = vpop.permute.xlu0 %3187
  %3189 = vset.pattern.permute.xlu0 7
  %3190 = vperm.xlu0 %3189, %v27
  %v3191 = vpop.permute.xlu0 %3190
  %3192 = vset.pattern.permute.xlu0 7
  %3193 = vperm.xlu0 %3192, %v28
  %v3194 = vpop.permute.xlu0 %3193
  %3195 = vset.pattern.permute.xlu0 7
  %3196 = vperm.xlu0 %3195, %v29
  %v3197 = vpop.permute.xlu0 %3196
  %3198 = vset.pattern.permute.xlu0 7
  %3199 = vperm.xlu0 %3198, %v30
  %v3200 = vpop.permute.xlu0 %3199
  %3201 = vset.pattern.permute.xlu0 7
  %3202 = vperm.xlu0 %3201, %v31
  %v3203 = vpop.permute.xlu0 %3202
  %3204 = vset.pattern.permute.xlu0 7
  %3205 = vperm.xlu0 %3204, %v32
  %v3206 = vpop.permute.xlu0 %3205
  %3207 = vset.pattern.permute.xlu0 7
  %3208 = vperm.xlu0 %3207, %v33
  %v3209 = vpop.permute.xlu0 %3208
  %3210 = vset.pattern.permute.xlu0 7
  %3211 = vperm.xlu0 %3210, %v34
  %v3212 = vpop.permute.xlu0 %3211
  %3213 = vset.pattern.permute.xlu0 7
  %3214 = vperm.xlu0 %3213, %v35
  %v3215 = vpop.permute.xlu0 %3214
  %3216 = vset.pattern.permute.xlu0 7
  %3217 = vperm.xlu0 %3216, %v36
  %v3218 = vpop.permute.xlu0 %3217
  %3219 = vset.pattern.permute.xlu0 7
  %3220 = vperm.xlu0 %3219, %v37
  %v3221 = vpop.permute.xlu0 %3220
  %3222 = vset.pattern.permute.xlu0 7
  %3223 = vperm.xlu0 %3222, %v38
  %v3224 = vpop.permute.xlu0 %3223
  %3225 = vset.pattern.permute.xlu0 7
  %3226 = vperm.xlu0 %3225, %v39
  %v3227 = vpop.permute.xlu0 %3226
  %3228 = vset.pattern.permute.xlu0 7
  %3229 = vperm.xlu0 %3228, %v40
  %v3230 = vpop.permute.xlu0 %3229
  %3231 = vset.pattern.permute.xlu0 7
  %3232 = vperm.xlu0 %3231, %v41
  %v3233 = vpop.permute.xlu0 %3232
  %3234 = vset.pattern.permute.xlu0 7
  %3235 = vperm.xlu0 %3234, %v42
  %v3236 = vpop.permute.xlu0 %3235
  %3237 = vset.pattern.permute.xlu0 7
  %3238 = vperm.xlu0 %3237, %v43
  %v3239 = vpop.permute.xlu0 %3238
  %3240 = vset.pattern.permute.xlu0 7
  %3241 = vperm.xlu0 %3240, %v44
  %v3242 = vpop.permute.xlu0 %3241
  %3243 = vset.pattern.permute.xlu0 7
  %3244 = vperm.xlu0 %3243, %v45
  %v3245 = vpop.permute.xlu0 %3244
  %3246 = vset.pattern.permute.xlu0 7
  %3247 = vperm.xlu0 %3246, %v46
  %v3248 = vpop.permute.xlu0 %3247
  %3249 = vset.pattern.permute.xlu0 7
  %3250 = vperm.xlu0 %3249, %v47
  %v3251 = vpop.permute.xlu0 %3250
  %3252 = vset.pattern.permute.xlu0 7
  %3253 = vperm.xlu0 %3252, %v48
  %v3254 = vpop.permute.xlu0 %3253
  %3255 = vset.pattern.permute.xlu0 7
  %3256 = vperm.xlu0 %3255, %v49
  %v3257 = vpop.permute.xlu0 %3256
  %3258 = vset.pattern.permute.xlu0 7
  %3259 = vperm.xlu0 %3258, %v50
  %v3260 = vpop.permute.xlu0 %3259
  %3261 = vset.pattern.permute.xlu0 7
  %3262 = vperm.xlu0 %3261, %v51
  %v3263 = vpop.permute.xlu0 %3262
  %3264 = vset.pattern.permute.xlu0 7
  %3265 = vperm.xlu0 %3264, %v52
  %v3266 = vpop.permute.xlu0 %3265
  %3267 = vset.pattern.permute.xlu0 7
  %3268 = vperm.xlu0 %3267, %v53
  %v3269 = vpop.permute.xlu0 %3268
  %3270 = vset.pattern.permute.xlu0 7
  %3271 = vperm.xlu0 %3270, %v54
  %v3272 = vpop.permute.xlu0 %3271
  %3273 = vset.pattern.permute.xlu0 7
  %3274 = vperm.xlu0 %3273, %v55
  %v3275 = vpop.permute.xlu0 %3274
  %3276 = vset.pattern.permute.xlu0 7
  %3277 = vperm.xlu0 %3276, %v56
  %v3278 = vpop.permute.xlu0 %3277
  %3279 = vset.pattern.permute.xlu0 7
  %3280 = vperm.xlu0 %3279, %v57
  %v3281 = vpop.permute.xlu0 %3280
  %3282 = vset.pattern.permute.xlu0 7
  %3283 = vperm.xlu0 %3282, %v58
  %v3284 = vpop.permute.xlu0 %3283
  %3285 = vset.pattern.permute.xlu0 7
  %3286 = vperm.xlu0 %3285, %v59
  %v3287 = vpop.permute.xlu0 %3286
  %3288 = vset.pattern.permute.xlu0 7
  %3289 = vperm.xlu0 %3288, %v60
  %v3290 = vpop.permute.xlu0 %3289
  %3291 = vset.pattern.permute.xlu0 7
  %3292 = vperm.xlu0 %3291, %v61
  %v3293 = vpop.permute.xlu0 %3292
  %3294 = vset.pattern.permute.xlu0 7
  %3295 = vperm.xlu0 %3294, %v62
  %v3296 = vpop.permute.xlu0 %3295
  %3297 = vset.pattern.permute.xlu0 7
  %3298 = vperm.xlu0 %3297, %v63
  %v3299 = vpop.permute.xlu0 %3298
  %3300 = vset.pattern.permute.xlu0 7
  %3301 = vperm.xlu0 %3300, %v64
  %v3302 = vpop.permute.xlu0 %3301
  %3303 = vset.pattern.permute.xlu0 7
  %3304 = vperm.xlu0 %3303, %v65
  %v3305 = vpop.permute.xlu0 %3304
  %3306 = vset.pattern.permute.xlu0 7
  %3307 = vperm.xlu0 %3306, %v66
  %v3308 = vpop.permute.xlu0 %3307
  %3309 = vset.pattern.permute.xlu0 7
  %3310 = vperm.xlu0 %3309, %v67
  %v3311 = vpop.permute.xlu0 %3310
  %3312 = vset.pattern.permute.xlu0 7
  %3313 = vperm.xlu0 %3312, %v68
  %v3314 = vpop.permute.xlu0 %3313
  %3315 = vset.pattern.permute.xlu0 7
  %3316 = vperm.xlu0 %3315, %v69
  %v3317 = vpop.permute.xlu0 %3316
  %3318 = vset.pattern.permute.xlu0 7
  %3319 = vperm.xlu0 %3318, %v70
  %v3320 = vpop.permute.xlu0 %3319
  %3321 = vset.pattern.permute.xlu0 7
  %3322 = vperm.xlu0 %3321, %v71
  %v3323 = vpop.permute.xlu0 %3322
  %3324 = vset.pattern.permute.xlu0 7
  %3325 = vperm.xlu0 %3324, %v72
  %v3326 = vpop.permute.xlu0 %3325
  %3327 = vset.pattern.permute.xlu0 7
  %3328 = vperm.xlu0 %3327, %v73
  %v3329 = vpop.permute.xlu0 %3328
  %3330 = vset.pattern.permute.xlu0 7
  %3331 = vperm.xlu0 %3330, %v74
  %v3332 = vpop.permute.xlu0 %3331
  %3333 = vset.pattern.permute.xlu0 7
  %3334 = vperm.xlu0 %3333, %v75
  %v3335 = vpop.permute.xlu0 %3334
  %3336 = vset.pattern.permute.xlu0 7
  %3337 = vperm.xlu0 %3336, %v76
  %v3338 = vpop.permute.xlu0 %3337
  %3339 = vset.pattern.permute.xlu0 7
  %3340 = vperm.xlu0 %3339, %v77
  %v3341 = vpop.permute.xlu0 %3340
  %3342 = vset.pattern.permute.xlu0 7
  %3343 = vperm.xlu0 %3342, %v78
  %v3344 = vpop.permute.xlu0 %3343
  %vm3345 = vcmp.eq.s32.totalorder %v3155, %v80
  %vm3346 = vcmp.eq.s32.totalorder %v3158, %v80
  %vm3347 = vcmp.eq.s32.totalorder %v3161, %v80
  %vm3348 = vcmp.eq.s32.totalorder %v3164, %v80
  %vm3349 = vcmp.eq.s32.totalorder %v3167, %v80
  %vm3350 = vcmp.eq.s32.totalorder %v3170, %v80
  %vm3351 = vcmp.eq.s32.totalorder %v3173, %v80
  %vm3352 = vcmp.eq.s32.totalorder %v3176, %v80
  %vm3353 = vcmp.eq.s32.totalorder %v3179, %v80
  %vm3354 = vcmp.eq.s32.totalorder %v3182, %v80
  %vm3355 = vcmp.eq.s32.totalorder %v3185, %v80
  %vm3356 = vcmp.eq.s32.totalorder %v3188, %v80
  %vm3357 = vcmp.eq.s32.totalorder %v3191, %v80
  %vm3358 = vcmp.eq.s32.totalorder %v3194, %v80
  %vm3359 = vcmp.eq.s32.totalorder %v3197, %v80
  %vm3360 = vcmp.eq.s32.totalorder %v3200, %v80
  %vm3361 = vcmp.eq.s32.totalorder %v3203, %v80
  %vm3362 = vcmp.eq.s32.totalorder %v3206, %v80
  %vm3363 = vcmp.eq.s32.totalorder %v3209, %v80
  %vm3364 = vcmp.eq.s32.totalorder %v3212, %v80
  %vm3365 = vcmp.eq.s32.totalorder %v3215, %v80
  %vm3366 = vcmp.eq.s32.totalorder %v3218, %v80
  %vm3367 = vcmp.eq.s32.totalorder %v3221, %v80
  %vm3368 = vcmp.eq.s32.totalorder %v3224, %v80
  %vm3369 = vcmp.eq.s32.totalorder %v3227, %v80
  %vm3370 = vcmp.eq.s32.totalorder %v3230, %v80
  %vm3371 = vcmp.eq.s32.totalorder %v3233, %v80
  %vm3372 = vcmp.eq.s32.totalorder %v3236, %v80
  %vm3373 = vcmp.eq.s32.totalorder %v3239, %v80
  %vm3374 = vcmp.eq.s32.totalorder %v3242, %v80
  %vm3375 = vcmp.eq.s32.totalorder %v3245, %v80
  %vm3376 = vcmp.eq.s32.totalorder %v3248, %v80
  %vm3377 = vcmp.eq.s32.totalorder %v3251, %v80
  %vm3378 = vcmp.eq.s32.totalorder %v3254, %v80
  %vm3379 = vcmp.eq.s32.totalorder %v3257, %v80
  %vm3380 = vcmp.eq.s32.totalorder %v3260, %v80
  %vm3381 = vcmp.eq.s32.totalorder %v3263, %v80
  %vm3382 = vcmp.eq.s32.totalorder %v3266, %v80
  %vm3383 = vcmp.eq.s32.totalorder %v3269, %v80
  %vm3384 = vcmp.eq.s32.totalorder %v3272, %v80
  %vm3385 = vcmp.eq.s32.totalorder %v3275, %v80
  %vm3386 = vcmp.eq.s32.totalorder %v3278, %v80
  %vm3387 = vcmp.eq.s32.totalorder %v3281, %v80
  %vm3388 = vcmp.eq.s32.totalorder %v3284, %v80
  %vm3389 = vcmp.eq.s32.totalorder %v3287, %v80
  %vm3390 = vcmp.eq.s32.totalorder %v3290, %v80
  %vm3391 = vcmp.eq.s32.totalorder %v3293, %v80
  %vm3392 = vcmp.eq.s32.totalorder %v3296, %v80
  %vm3393 = vcmp.eq.s32.totalorder %v3299, %v80
  %vm3394 = vcmp.eq.s32.totalorder %v3302, %v80
  %vm3395 = vcmp.eq.s32.totalorder %v3305, %v80
  %vm3396 = vcmp.eq.s32.totalorder %v3308, %v80
  %vm3397 = vcmp.eq.s32.totalorder %v3311, %v80
  %vm3398 = vcmp.eq.s32.totalorder %v3314, %v80
  %vm3399 = vcmp.eq.s32.totalorder %v3317, %v80
  %vm3400 = vcmp.eq.s32.totalorder %v3320, %v80
  %vm3401 = vcmp.eq.s32.totalorder %v3323, %v80
  %vm3402 = vcmp.eq.s32.totalorder %v3326, %v80
  %vm3403 = vcmp.eq.s32.totalorder %v3329, %v80
  %vm3404 = vcmp.eq.s32.totalorder %v3332, %v80
  %vm3405 = vcmp.eq.s32.totalorder %v3335, %v80
  %vm3406 = vcmp.eq.s32.totalorder %v3338, %v80
  %vm3407 = vcmp.eq.s32.totalorder %v3341, %v80
  %vm3408 = vcmp.eq.s32.totalorder %v3344, %v80
  %v3409 = vsel %vm3345, 1, 0
  %v3410 = vsel %vm3346, 1, 0
  %v3411 = vsel %vm3347, 1, 0
  %v3412 = vsel %vm3348, 1, 0
  %v3413 = vsel %vm3349, 1, 0
  %v3414 = vsel %vm3350, 1, 0
  %v3415 = vsel %vm3351, 1, 0
  %v3416 = vsel %vm3352, 1, 0
  %v3417 = vsel %vm3353, 1, 0
  %v3418 = vsel %vm3354, 1, 0
  %v3419 = vsel %vm3355, 1, 0
  %v3420 = vsel %vm3356, 1, 0
  %v3421 = vsel %vm3357, 1, 0
  %v3422 = vsel %vm3358, 1, 0
  %v3423 = vsel %vm3359, 1, 0
  %v3424 = vsel %vm3360, 1, 0
  %v3425 = vsel %vm3361, 1, 0
  %v3426 = vsel %vm3362, 1, 0
  %v3427 = vsel %vm3363, 1, 0
  %v3428 = vsel %vm3364, 1, 0
  %v3429 = vsel %vm3365, 1, 0
  %v3430 = vsel %vm3366, 1, 0
  %v3431 = vsel %vm3367, 1, 0
  %v3432 = vsel %vm3368, 1, 0
  %v3433 = vsel %vm3369, 1, 0
  %v3434 = vsel %vm3370, 1, 0
  %v3435 = vsel %vm3371, 1, 0
  %v3436 = vsel %vm3372, 1, 0
  %v3437 = vsel %vm3373, 1, 0
  %v3438 = vsel %vm3374, 1, 0
  %v3439 = vsel %vm3375, 1, 0
  %v3440 = vsel %vm3376, 1, 0
  %v3441 = vsel %vm3377, 1, 0
  %v3442 = vsel %vm3378, 1, 0
  %v3443 = vsel %vm3379, 1, 0
  %v3444 = vsel %vm3380, 1, 0
  %v3445 = vsel %vm3381, 1, 0
  %v3446 = vsel %vm3382, 1, 0
  %v3447 = vsel %vm3383, 1, 0
  %v3448 = vsel %vm3384, 1, 0
  %v3449 = vsel %vm3385, 1, 0
  %v3450 = vsel %vm3386, 1, 0
  %v3451 = vsel %vm3387, 1, 0
  %v3452 = vsel %vm3388, 1, 0
  %v3453 = vsel %vm3389, 1, 0
  %v3454 = vsel %vm3390, 1, 0
  %v3455 = vsel %vm3391, 1, 0
  %v3456 = vsel %vm3392, 1, 0
  %v3457 = vsel %vm3393, 1, 0
  %v3458 = vsel %vm3394, 1, 0
  %v3459 = vsel %vm3395, 1, 0
  %v3460 = vsel %vm3396, 1, 0
  %v3461 = vsel %vm3397, 1, 0
  %v3462 = vsel %vm3398, 1, 0
  %v3463 = vsel %vm3399, 1, 0
  %v3464 = vsel %vm3400, 1, 0
  %v3465 = vsel %vm3401, 1, 0
  %v3466 = vsel %vm3402, 1, 0
  %v3467 = vsel %vm3403, 1, 0
  %v3468 = vsel %vm3404, 1, 0
  %v3469 = vsel %vm3405, 1, 0
  %v3470 = vsel %vm3406, 1, 0
  %v3471 = vsel %vm3407, 1, 0
  %v3472 = vsel %vm3408, 1, 0
  %v3473 = vcvt.s32.f32 %v3409
  %v3474 = vcvt.s32.f32 %v3410
  %v3475 = vcvt.s32.f32 %v3411
  %v3476 = vcvt.s32.f32 %v3412
  %v3477 = vcvt.s32.f32 %v3413
  %v3478 = vcvt.s32.f32 %v3414
  %v3479 = vcvt.s32.f32 %v3415
  %v3480 = vcvt.s32.f32 %v3416
  %v3481 = vcvt.s32.f32 %v3417
  %v3482 = vcvt.s32.f32 %v3418
  %v3483 = vcvt.s32.f32 %v3419
  %v3484 = vcvt.s32.f32 %v3420
  %v3485 = vcvt.s32.f32 %v3421
  %v3486 = vcvt.s32.f32 %v3422
  %v3487 = vcvt.s32.f32 %v3423
  %v3488 = vcvt.s32.f32 %v3424
  %v3489 = vcvt.s32.f32 %v3425
  %v3490 = vcvt.s32.f32 %v3426
  %v3491 = vcvt.s32.f32 %v3427
  %v3492 = vcvt.s32.f32 %v3428
  %v3493 = vcvt.s32.f32 %v3429
  %v3494 = vcvt.s32.f32 %v3430
  %v3495 = vcvt.s32.f32 %v3431
  %v3496 = vcvt.s32.f32 %v3432
  %v3497 = vcvt.s32.f32 %v3433
  %v3498 = vcvt.s32.f32 %v3434
  %v3499 = vcvt.s32.f32 %v3435
  %v3500 = vcvt.s32.f32 %v3436
  %v3501 = vcvt.s32.f32 %v3437
  %v3502 = vcvt.s32.f32 %v3438
  %v3503 = vcvt.s32.f32 %v3439
  %v3504 = vcvt.s32.f32 %v3440
  %v3505 = vcvt.s32.f32 %v3441
  %v3506 = vcvt.s32.f32 %v3442
  %v3507 = vcvt.s32.f32 %v3443
  %v3508 = vcvt.s32.f32 %v3444
  %v3509 = vcvt.s32.f32 %v3445
  %v3510 = vcvt.s32.f32 %v3446
  %v3511 = vcvt.s32.f32 %v3447
  %v3512 = vcvt.s32.f32 %v3448
  %v3513 = vcvt.s32.f32 %v3449
  %v3514 = vcvt.s32.f32 %v3450
  %v3515 = vcvt.s32.f32 %v3451
  %v3516 = vcvt.s32.f32 %v3452
  %v3517 = vcvt.s32.f32 %v3453
  %v3518 = vcvt.s32.f32 %v3454
  %v3519 = vcvt.s32.f32 %v3455
  %v3520 = vcvt.s32.f32 %v3456
  %v3521 = vcvt.s32.f32 %v3457
  %v3522 = vcvt.s32.f32 %v3458
  %v3523 = vcvt.s32.f32 %v3459
  %v3524 = vcvt.s32.f32 %v3460
  %v3525 = vcvt.s32.f32 %v3461
  %v3526 = vcvt.s32.f32 %v3462
  %v3527 = vcvt.s32.f32 %v3463
  %v3528 = vcvt.s32.f32 %v3464
  %v3529 = vcvt.s32.f32 %v3465
  %v3530 = vcvt.s32.f32 %v3466
  %v3531 = vcvt.s32.f32 %v3467
  %v3532 = vcvt.s32.f32 %v3468
  %v3533 = vcvt.s32.f32 %v3469
  %v3534 = vcvt.s32.f32 %v3470
  %v3535 = vcvt.s32.f32 %v3471
  %v3536 = vcvt.s32.f32 %v3472
  %v3537 = vadd.f32 %v3089, %v3473
  %v3538 = vadd.f32 %v3090, %v3474
  %v3539 = vadd.f32 %v3091, %v3475
  %v3540 = vadd.f32 %v3092, %v3476
  %v3541 = vadd.f32 %v3093, %v3477
  %v3542 = vadd.f32 %v3094, %v3478
  %v3543 = vadd.f32 %v3095, %v3479
  %v3544 = vadd.f32 %v3096, %v3480
  %v3545 = vadd.f32 %v3097, %v3481
  %v3546 = vadd.f32 %v3098, %v3482
  %v3547 = vadd.f32 %v3099, %v3483
  %v3548 = vadd.f32 %v3100, %v3484
  %v3549 = vadd.f32 %v3101, %v3485
  %v3550 = vadd.f32 %v3102, %v3486
  %v3551 = vadd.f32 %v3103, %v3487
  %v3552 = vadd.f32 %v3104, %v3488
  %v3553 = vadd.f32 %v3105, %v3489
  %v3554 = vadd.f32 %v3106, %v3490
  %v3555 = vadd.f32 %v3107, %v3491
  %v3556 = vadd.f32 %v3108, %v3492
  %v3557 = vadd.f32 %v3109, %v3493
  %v3558 = vadd.f32 %v3110, %v3494
  %v3559 = vadd.f32 %v3111, %v3495
  %v3560 = vadd.f32 %v3112, %v3496
  %v3561 = vadd.f32 %v3113, %v3497
  %v3562 = vadd.f32 %v3114, %v3498
  %v3563 = vadd.f32 %v3115, %v3499
  %v3564 = vadd.f32 %v3116, %v3500
  %v3565 = vadd.f32 %v3117, %v3501
  %v3566 = vadd.f32 %v3118, %v3502
  %v3567 = vadd.f32 %v3119, %v3503
  %v3568 = vadd.f32 %v3120, %v3504
  %v3569 = vadd.f32 %v3121, %v3505
  %v3570 = vadd.f32 %v3122, %v3506
  %v3571 = vadd.f32 %v3123, %v3507
  %v3572 = vadd.f32 %v3124, %v3508
  %v3573 = vadd.f32 %v3125, %v3509
  %v3574 = vadd.f32 %v3126, %v3510
  %v3575 = vadd.f32 %v3127, %v3511
  %v3576 = vadd.f32 %v3128, %v3512
  %v3577 = vadd.f32 %v3129, %v3513
  %v3578 = vadd.f32 %v3130, %v3514
  %v3579 = vadd.f32 %v3131, %v3515
  %v3580 = vadd.f32 %v3132, %v3516
  %v3581 = vadd.f32 %v3133, %v3517
  %v3582 = vadd.f32 %v3134, %v3518
  %v3583 = vadd.f32 %v3135, %v3519
  %v3584 = vadd.f32 %v3136, %v3520
  %v3585 = vadd.f32 %v3137, %v3521
  %v3586 = vadd.f32 %v3138, %v3522
  %v3587 = vadd.f32 %v3139, %v3523
  %v3588 = vadd.f32 %v3140, %v3524
  %v3589 = vadd.f32 %v3141, %v3525
  %v3590 = vadd.f32 %v3142, %v3526
  %v3591 = vadd.f32 %v3143, %v3527
  %v3592 = vadd.f32 %v3144, %v3528
  %v3593 = vadd.f32 %v3145, %v3529
  %v3594 = vadd.f32 %v3146, %v3530
  %v3595 = vadd.f32 %v3147, %v3531
  %v3596 = vadd.f32 %v3148, %v3532
  %v3597 = vadd.f32 %v3149, %v3533
  %v3598 = vadd.f32 %v3150, %v3534
  %v3599 = vadd.f32 %v3151, %v3535
  %v3600 = vadd.f32 %v3152, %v3536
  %v3601 = vld [vmem:[%s2] sm:$0xf]
  %v3602 = vld [vmem:[%s2 + $0x4] sm:$0xf]
  %v3603 = vld [vmem:[%s2 + $0x8] sm:$0xf]
  %v3604 = vld [vmem:[%s2 + $0xc] sm:$0xf]
  %v3605 = vld [vmem:[%s2 + $0x10] sm:$0xf]
  %v3606 = vld [vmem:[%s2 + $0x14] sm:$0xf]
  %v3607 = vld [vmem:[%s2 + $0x18] sm:$0xf]
  %v3608 = vld [vmem:[%s2 + $0x1c] sm:$0xf]
  %v3609 = vld [vmem:[%s2 + $0x20] sm:$0xf]
  %v3610 = vld [vmem:[%s2 + $0x24] sm:$0xf]
  %v3611 = vld [vmem:[%s2 + $0x28] sm:$0xf]
  %v3612 = vld [vmem:[%s2 + $0x2c] sm:$0xf]
  %v3613 = vld [vmem:[%s2 + $0x30] sm:$0xf]
  %v3614 = vld [vmem:[%s2 + $0x34] sm:$0xf]
  %v3615 = vld [vmem:[%s2 + $0x38] sm:$0xf]
  %v3616 = vld [vmem:[%s2 + $0x3c] sm:$0xf]
  %v3617 = vpack.c.bf16 %v3538, %v3537
  %v3618 = vpack.c.bf16 %v3540, %v3539
  %v3619 = vpack.c.bf16 %v3542, %v3541
  %v3620 = vpack.c.bf16 %v3544, %v3543
  %v3621 = vpack.c.bf16 %v3546, %v3545
  %v3622 = vpack.c.bf16 %v3548, %v3547
  %v3623 = vpack.c.bf16 %v3550, %v3549
  %v3624 = vpack.c.bf16 %v3552, %v3551
  %v3625 = vpack.c.bf16 %v3554, %v3553
  %v3626 = vpack.c.bf16 %v3556, %v3555
  %v3627 = vpack.c.bf16 %v3558, %v3557
  %v3628 = vpack.c.bf16 %v3560, %v3559
  %v3629 = vpack.c.bf16 %v3562, %v3561
  %v3630 = vpack.c.bf16 %v3564, %v3563
  %v3631 = vpack.c.bf16 %v3566, %v3565
  %v3632 = vpack.c.bf16 %v3568, %v3567
  %v3633 = vpack.c.bf16 %v3570, %v3569
  %v3634 = vpack.c.bf16 %v3572, %v3571
  %v3635 = vpack.c.bf16 %v3574, %v3573
  %v3636 = vpack.c.bf16 %v3576, %v3575
  %v3637 = vpack.c.bf16 %v3578, %v3577
  %v3638 = vpack.c.bf16 %v3580, %v3579
  %v3639 = vpack.c.bf16 %v3582, %v3581
  %v3640 = vpack.c.bf16 %v3584, %v3583
  %v3641 = vpack.c.bf16 %v3586, %v3585
  %v3642 = vpack.c.bf16 %v3588, %v3587
  %v3643 = vpack.c.bf16 %v3590, %v3589
  %v3644 = vpack.c.bf16 %v3592, %v3591
  %v3645 = vpack.c.bf16 %v3594, %v3593
  %v3646 = vpack.c.bf16 %v3596, %v3595
  %v3647 = vpack.c.bf16 %v3598, %v3597
  %v3648 = vpack.c.bf16 %v3600, %v3599
  %v3665 = vunpack.c.l.b16 %v3601
  %v3666 = vunpack.c.l.b16 %v3602
  %v3667 = vunpack.c.l.b16 %v3603
  %v3668 = vunpack.c.l.b16 %v3604
  %v3669 = vunpack.c.l.b16 %v3605
  %v3670 = vunpack.c.l.b16 %v3606
  %v3671 = vunpack.c.l.b16 %v3607
  %v3672 = vunpack.c.l.b16 %v3608
  %v3673 = vunpack.c.l.b16 %v3609
  %v3674 = vunpack.c.l.b16 %v3610
  %v3675 = vunpack.c.l.b16 %v3611
  %v3676 = vunpack.c.l.b16 %v3612
  %v3677 = vunpack.c.l.b16 %v3613
  %v3678 = vunpack.c.l.b16 %v3614
  %v3679 = vunpack.c.l.b16 %v3615
  %v3680 = vunpack.c.l.b16 %v3616
  %v3681 = vpack.c.b16 %v3666, %v3665
  %v3682 = vpack.c.b16 %v3668, %v3667
  %v3683 = vpack.c.b16 %v3670, %v3669
  %v3684 = vpack.c.b16 %v3672, %v3671
  %v3685 = vpack.c.b16 %v3674, %v3673
  %v3686 = vpack.c.b16 %v3676, %v3675
  %v3687 = vpack.c.b16 %v3678, %v3677
  %v3688 = vpack.c.b16 %v3680, %v3679
  %3697 = vmatprep.subr.bf16.mxu0 0
  %3698 = vmatpush1.bf16.msra.mxu0 %v3681
  %3699 = vmatprep.subr.bf16.mxu0 0
  %3700 = vmatpush1.bf16.msra.mxu0 %v3682
  %3701 = vmatprep.subr.bf16.mxu0 0
  %3702 = vmatpush1.bf16.msra.mxu0 %v3683
  %3703 = vmatprep.subr.bf16.mxu0 0
  %3704 = vmatpush1.bf16.msra.mxu0 %v3684
  %3705 = vmatprep.subr.bf16.mxu0 0
  %3706 = vmatpush1.bf16.msra.mxu0 %v3685
  %3707 = vmatprep.subr.bf16.mxu0 0
  %3708 = vmatpush1.bf16.msra.mxu0 %v3686
  %3709 = vmatprep.subr.bf16.mxu0 0
  %3710 = vmatpush1.bf16.msra.mxu0 %v3687
  %3711 = vmatprep.subr.bf16.mxu0 0
  %3712 = vmatpush1.bf16.msra.mxu0 %v3688
  %3713 = vmatprep.subr.bf16.mxu0 0
  %3714 = vmatpush1.bf16.msra.mxu0 0
  %3715 = vmatprep.subr.bf16.mxu0 0
  %3716 = vmatpush1.bf16.msra.mxu0 0
  %3717 = vmatprep.subr.bf16.mxu0 0
  %3718 = vmatpush1.bf16.msra.mxu0 0
  %3719 = vmatprep.subr.bf16.mxu0 0
  %3720 = vmatpush1.bf16.msra.mxu0 0
  %3721 = vmatprep.subr.bf16.mxu0 0
  %3722 = vmatpush1.bf16.msra.mxu0 0
  %3723 = vmatprep.subr.bf16.mxu0 0
  %3724 = vmatpush1.bf16.msra.mxu0 0
  %3725 = vmatprep.subr.bf16.mxu0 0
  %3726 = vmatpush1.bf16.msra.mxu0 0
  %3727 = vmatprep.subr.bf16.mxu0 0
  %3728 = vmatpush1.bf16.msra.mxu0 0
  %3729 = vmatprep.mubr.bf16.mxu0 0
  %3730 = vmatmul.mubr.bf16.gmra.mrb[0].mxu0 %v3617
  %v3731 = vpop.f32.mrb[0].mxu0
  %v3732 = vadd.f32 0.0, %v3731
  %v3733 = vpop.f32.mrb[0].mxu0
  %v3734 = vpop.f32.mrb[0].mxu0
  %v3735 = vadd.f32 0.0, %v3734
  %v3736 = vpop.f32.mrb[0].mxu0
  %3737 = vmatprep.mubr.bf16.mxu0 0
  %3738 = vmatmul.mubr.bf16.gmra.mrb[0].mxu0 %v3618
  %v3739 = vpop.f32.mrb[0].mxu0
  %v3740 = vadd.f32 0.0, %v3739
  %v3741 = vpop.f32.mrb[0].mxu0
  %v3742 = vpop.f32.mrb[0].mxu0
  %v3743 = vadd.f32 0.0, %v3742
  %v3744 = vpop.f32.mrb[0].mxu0
  %3745 = vmatprep.mubr.bf16.mxu0 0
  %3746 = vmatmul.mubr.bf16.gmra.mrb[0].mxu0 %v3619
  %v3747 = vpop.f32.mrb[0].mxu0
  %v3748 = vadd.f32 0.0, %v3747
  %v3749 = vpop.f32.mrb[0].mxu0
  %v3750 = vpop.f32.mrb[0].mxu0
  %v3751 = vadd.f32 0.0, %v3750
  %v3752 = vpop.f32.mrb[0].mxu0
  %3753 = vmatprep.mubr.bf16.mxu0 0
  %3754 = vmatmul.mubr.bf16.gmra.mrb[0].mxu0 %v3620
  %v3755 = vpop.f32.mrb[0].mxu0
  %v3756 = vadd.f32 0.0, %v3755
  %v3757 = vpop.f32.mrb[0].mxu0
  %v3758 = vpop.f32.mrb[0].mxu0
  %v3759 = vadd.f32 0.0, %v3758
  %v3760 = vpop.f32.mrb[0].mxu0
  %3761 = vmatprep.mubr.bf16.mxu0 0
  %3762 = vmatmul.mubr.bf16.gmra.mrb[0].mxu0 %v3621
  %v3763 = vpop.f32.mrb[0].mxu0
  %v3764 = vadd.f32 0.0, %v3763
  %v3765 = vpop.f32.mrb[0].mxu0
  %v3766 = vpop.f32.mrb[0].mxu0
  %v3767 = vadd.f32 0.0, %v3766
  %v3768 = vpop.f32.mrb[0].mxu0
  %3769 = vmatprep.mubr.bf16.mxu0 0
  %3770 = vmatmul.mubr.bf16.gmra.mrb[0].mxu0 %v3622
  %v3771 = vpop.f32.mrb[0].mxu0
  %v3772 = vadd.f32 0.0, %v3771
  %v3773 = vpop.f32.mrb[0].mxu0
  %v3774 = vpop.f32.mrb[0].mxu0
  %v3775 = vadd.f32 0.0, %v3774
  %v3776 = vpop.f32.mrb[0].mxu0
  %3777 = vmatprep.mubr.bf16.mxu0 0
  %3778 = vmatmul.mubr.bf16.gmra.mrb[0].mxu0 %v3623
  %v3779 = vpop.f32.mrb[0].mxu0
  %v3780 = vadd.f32 0.0, %v3779
  %v3781 = vpop.f32.mrb[0].mxu0
  %v3782 = vpop.f32.mrb[0].mxu0
  %v3783 = vadd.f32 0.0, %v3782
  %v3784 = vpop.f32.mrb[0].mxu0
  %3785 = vmatprep.mubr.bf16.mxu0 0
  %3786 = vmatmul.mubr.bf16.gmra.mrb[0].mxu0 %v3624
  %v3787 = vpop.f32.mrb[0].mxu0
  %v3788 = vadd.f32 0.0, %v3787
  %v3789 = vpop.f32.mrb[0].mxu0
  %v3790 = vpop.f32.mrb[0].mxu0
  %v3791 = vadd.f32 0.0, %v3790
  %v3792 = vpop.f32.mrb[0].mxu0
  %3793 = vmatprep.mubr.bf16.mxu0 0
  %3794 = vmatmul.mubr.bf16.gmra.mrb[0].mxu0 %v3625
  %v3795 = vpop.f32.mrb[0].mxu0
  %v3796 = vadd.f32 0.0, %v3795
  %v3797 = vpop.f32.mrb[0].mxu0
  %v3798 = vpop.f32.mrb[0].mxu0
  %v3799 = vadd.f32 0.0, %v3798
  %v3800 = vpop.f32.mrb[0].mxu0
  %3801 = vmatprep.mubr.bf16.mxu0 0
  %3802 = vmatmul.mubr.bf16.gmra.mrb[0].mxu0 %v3626
  %v3803 = vpop.f32.mrb[0].mxu0
  %v3804 = vadd.f32 0.0, %v3803
  %v3805 = vpop.f32.mrb[0].mxu0
  %v3806 = vpop.f32.mrb[0].mxu0
  %v3807 = vadd.f32 0.0, %v3806
  %v3808 = vpop.f32.mrb[0].mxu0
  %3809 = vmatprep.mubr.bf16.mxu0 0
  %3810 = vmatmul.mubr.bf16.gmra.mrb[0].mxu0 %v3627
  %v3811 = vpop.f32.mrb[0].mxu0
  %v3812 = vadd.f32 0.0, %v3811
  %v3813 = vpop.f32.mrb[0].mxu0
  %v3814 = vpop.f32.mrb[0].mxu0
  %v3815 = vadd.f32 0.0, %v3814
  %v3816 = vpop.f32.mrb[0].mxu0
  %3817 = vmatprep.mubr.bf16.mxu0 0
  %3818 = vmatmul.mubr.bf16.gmra.mrb[0].mxu0 %v3628
  %v3819 = vpop.f32.mrb[0].mxu0
  %v3820 = vadd.f32 0.0, %v3819
  %v3821 = vpop.f32.mrb[0].mxu0
  %v3822 = vpop.f32.mrb[0].mxu0
  %v3823 = vadd.f32 0.0, %v3822
  %v3824 = vpop.f32.mrb[0].mxu0
  %3825 = vmatprep.mubr.bf16.mxu0 0
  %3826 = vmatmul.mubr.bf16.gmra.mrb[0].mxu0 %v3629
  %v3827 = vpop.f32.mrb[0].mxu0
  %v3828 = vadd.f32 0.0, %v3827
  %v3829 = vpop.f32.mrb[0].mxu0
  %v3830 = vpop.f32.mrb[0].mxu0
  %v3831 = vadd.f32 0.0, %v3830
  %v3832 = vpop.f32.mrb[0].mxu0
  %3833 = vmatprep.mubr.bf16.mxu0 0
  %3834 = vmatmul.mubr.bf16.gmra.mrb[0].mxu0 %v3630
  %v3835 = vpop.f32.mrb[0].mxu0
  %v3836 = vadd.f32 0.0, %v3835
  %v3837 = vpop.f32.mrb[0].mxu0
  %v3838 = vpop.f32.mrb[0].mxu0
  %v3839 = vadd.f32 0.0, %v3838
  %v3840 = vpop.f32.mrb[0].mxu0
  %3841 = vmatprep.mubr.bf16.mxu0 0
  %3842 = vmatmul.mubr.bf16.gmra.mrb[0].mxu0 %v3631
  %v3843 = vpop.f32.mrb[0].mxu0
  %v3844 = vadd.f32 0.0, %v3843
  %v3845 = vpop.f32.mrb[0].mxu0
  %v3846 = vpop.f32.mrb[0].mxu0
  %v3847 = vadd.f32 0.0, %v3846
  %v3848 = vpop.f32.mrb[0].mxu0
  %3849 = vmatprep.mubr.bf16.mxu0 0
  %3850 = vmatmul.mubr.bf16.gmra.mrb[0].mxu0 %v3632
  %v3851 = vpop.f32.mrb[0].mxu0
  %v3852 = vadd.f32 0.0, %v3851
  %v3853 = vpop.f32.mrb[0].mxu0
  %v3854 = vpop.f32.mrb[0].mxu0
  %v3855 = vadd.f32 0.0, %v3854
  %v3856 = vpop.f32.mrb[0].mxu0
  %3857 = vmatprep.mubr.bf16.mxu0 0
  %3858 = vmatmul.mubr.bf16.gmra.mrb[0].mxu0 %v3633
  %v3859 = vpop.f32.mrb[0].mxu0
  %v3860 = vadd.f32 0.0, %v3859
  %v3861 = vpop.f32.mrb[0].mxu0
  %v3862 = vpop.f32.mrb[0].mxu0
  %v3863 = vadd.f32 0.0, %v3862
  %v3864 = vpop.f32.mrb[0].mxu0
  %3865 = vmatprep.mubr.bf16.mxu0 0
  %3866 = vmatmul.mubr.bf16.gmra.mrb[0].mxu0 %v3634
  %v3867 = vpop.f32.mrb[0].mxu0
  %v3868 = vadd.f32 0.0, %v3867
  %v3869 = vpop.f32.mrb[0].mxu0
  %v3870 = vpop.f32.mrb[0].mxu0
  %v3871 = vadd.f32 0.0, %v3870
  %v3872 = vpop.f32.mrb[0].mxu0
  %3873 = vmatprep.mubr.bf16.mxu0 0
  %3874 = vmatmul.mubr.bf16.gmra.mrb[0].mxu0 %v3635
  %v3875 = vpop.f32.mrb[0].mxu0
  %v3876 = vadd.f32 0.0, %v3875
  %v3877 = vpop.f32.mrb[0].mxu0
  %v3878 = vpop.f32.mrb[0].mxu0
  %v3879 = vadd.f32 0.0, %v3878
  %v3880 = vpop.f32.mrb[0].mxu0
  %3881 = vmatprep.mubr.bf16.mxu0 0
  %3882 = vmatmul.mubr.bf16.gmra.mrb[0].mxu0 %v3636
  %v3883 = vpop.f32.mrb[0].mxu0
  %v3884 = vadd.f32 0.0, %v3883
  %v3885 = vpop.f32.mrb[0].mxu0
  %v3886 = vpop.f32.mrb[0].mxu0
  %v3887 = vadd.f32 0.0, %v3886
  %v3888 = vpop.f32.mrb[0].mxu0
  %3889 = vmatprep.mubr.bf16.mxu0 0
  %3890 = vmatmul.mubr.bf16.gmra.mrb[0].mxu0 %v3637
  %v3891 = vpop.f32.mrb[0].mxu0
  %v3892 = vadd.f32 0.0, %v3891
  %v3893 = vpop.f32.mrb[0].mxu0
  %v3894 = vpop.f32.mrb[0].mxu0
  %v3895 = vadd.f32 0.0, %v3894
  %v3896 = vpop.f32.mrb[0].mxu0
  %3897 = vmatprep.mubr.bf16.mxu0 0
  %3898 = vmatmul.mubr.bf16.gmra.mrb[0].mxu0 %v3638
  %v3899 = vpop.f32.mrb[0].mxu0
  %v3900 = vadd.f32 0.0, %v3899
  %v3901 = vpop.f32.mrb[0].mxu0
  %v3902 = vpop.f32.mrb[0].mxu0
  %v3903 = vadd.f32 0.0, %v3902
  %v3904 = vpop.f32.mrb[0].mxu0
  %3905 = vmatprep.mubr.bf16.mxu0 0
  %3906 = vmatmul.mubr.bf16.gmra.mrb[0].mxu0 %v3639
  %v3907 = vpop.f32.mrb[0].mxu0
  %v3908 = vadd.f32 0.0, %v3907
  %v3909 = vpop.f32.mrb[0].mxu0
  %v3910 = vpop.f32.mrb[0].mxu0
  %v3911 = vadd.f32 0.0, %v3910
  %v3912 = vpop.f32.mrb[0].mxu0
  %3913 = vmatprep.mubr.bf16.mxu0 0
  %3914 = vmatmul.mubr.bf16.gmra.mrb[0].mxu0 %v3640
  %v3915 = vpop.f32.mrb[0].mxu0
  %v3916 = vadd.f32 0.0, %v3915
  %v3917 = vpop.f32.mrb[0].mxu0
  %v3918 = vpop.f32.mrb[0].mxu0
  %v3919 = vadd.f32 0.0, %v3918
  %v3920 = vpop.f32.mrb[0].mxu0
  %3921 = vmatprep.mubr.bf16.mxu0 0
  %3922 = vmatmul.mubr.bf16.gmra.mrb[0].mxu0 %v3641
  %v3923 = vpop.f32.mrb[0].mxu0
  %v3924 = vadd.f32 0.0, %v3923
  %v3925 = vpop.f32.mrb[0].mxu0
  %v3926 = vpop.f32.mrb[0].mxu0
  %v3927 = vadd.f32 0.0, %v3926
  %v3928 = vpop.f32.mrb[0].mxu0
  %3929 = vmatprep.mubr.bf16.mxu0 0
  %3930 = vmatmul.mubr.bf16.gmra.mrb[0].mxu0 %v3642
  %v3931 = vpop.f32.mrb[0].mxu0
  %v3932 = vadd.f32 0.0, %v3931
  %v3933 = vpop.f32.mrb[0].mxu0
  %v3934 = vpop.f32.mrb[0].mxu0
  %v3935 = vadd.f32 0.0, %v3934
  %v3936 = vpop.f32.mrb[0].mxu0
  %3937 = vmatprep.mubr.bf16.mxu0 0
  %3938 = vmatmul.mubr.bf16.gmra.mrb[0].mxu0 %v3643
  %v3939 = vpop.f32.mrb[0].mxu0
  %v3940 = vadd.f32 0.0, %v3939
  %v3941 = vpop.f32.mrb[0].mxu0
  %v3942 = vpop.f32.mrb[0].mxu0
  %v3943 = vadd.f32 0.0, %v3942
  %v3944 = vpop.f32.mrb[0].mxu0
  %3945 = vmatprep.mubr.bf16.mxu0 0
  %3946 = vmatmul.mubr.bf16.gmra.mrb[0].mxu0 %v3644
  %v3947 = vpop.f32.mrb[0].mxu0
  %v3948 = vadd.f32 0.0, %v3947
  %v3949 = vpop.f32.mrb[0].mxu0
  %v3950 = vpop.f32.mrb[0].mxu0
  %v3951 = vadd.f32 0.0, %v3950
  %v3952 = vpop.f32.mrb[0].mxu0
  %3953 = vmatprep.mubr.bf16.mxu0 0
  %3954 = vmatmul.mubr.bf16.gmra.mrb[0].mxu0 %v3645
  %v3955 = vpop.f32.mrb[0].mxu0
  %v3956 = vadd.f32 0.0, %v3955
  %v3957 = vpop.f32.mrb[0].mxu0
  %v3958 = vpop.f32.mrb[0].mxu0
  %v3959 = vadd.f32 0.0, %v3958
  %v3960 = vpop.f32.mrb[0].mxu0
  %3961 = vmatprep.mubr.bf16.mxu0 0
  %3962 = vmatmul.mubr.bf16.gmra.mrb[0].mxu0 %v3646
  %v3963 = vpop.f32.mrb[0].mxu0
  %v3964 = vadd.f32 0.0, %v3963
  %v3965 = vpop.f32.mrb[0].mxu0
  %v3966 = vpop.f32.mrb[0].mxu0
  %v3967 = vadd.f32 0.0, %v3966
  %v3968 = vpop.f32.mrb[0].mxu0
  %3969 = vmatprep.mubr.bf16.mxu0 0
  %3970 = vmatmul.mubr.bf16.gmra.mrb[0].mxu0 %v3647
  %v3971 = vpop.f32.mrb[0].mxu0
  %v3972 = vadd.f32 0.0, %v3971
  %v3973 = vpop.f32.mrb[0].mxu0
  %v3974 = vpop.f32.mrb[0].mxu0
  %v3975 = vadd.f32 0.0, %v3974
  %v3976 = vpop.f32.mrb[0].mxu0
  %3977 = vmatprep.mubr.bf16.mxu0 0
  %3978 = vmatmul.mubr.bf16.gmra.mrb[0].mxu0 %v3648
  %v3979 = vpop.f32.mrb[0].mxu0
  %v3980 = vadd.f32 0.0, %v3979
  %v3981 = vpop.f32.mrb[0].mxu0
  %v3982 = vpop.f32.mrb[0].mxu0
  %v3983 = vadd.f32 0.0, %v3982
  %v3984 = vpop.f32.mrb[0].mxu0
  %3985 = vdwg.mxu0
  %v3986 = vld [vmem:[%s1] sm:$0xff]
  %v3987 = vld [vmem:[%s1 + $0x8] sm:$0xff]
  %v3988 = vld [vmem:[%s1 + $0x10] sm:$0xff]
  %v3989 = vld [vmem:[%s1 + $0x18] sm:$0xff]
  %v3990 = vld [vmem:[%s1 + $0x20] sm:$0xff]
  %v3991 = vld [vmem:[%s1 + $0x28] sm:$0xff]
  %v3992 = vld [vmem:[%s1 + $0x30] sm:$0xff]
  %v3993 = vld [vmem:[%s1 + $0x38] sm:$0xff]
  %v3994 = vld [vmem:[%s1 + $0x40] sm:$0xff]
  %v3995 = vld [vmem:[%s1 + $0x48] sm:$0xff]
  %v3996 = vld [vmem:[%s1 + $0x50] sm:$0xff]
  %v3997 = vld [vmem:[%s1 + $0x58] sm:$0xff]
  %v3998 = vld [vmem:[%s1 + $0x60] sm:$0xff]
  %v3999 = vld [vmem:[%s1 + $0x68] sm:$0xff]
  %v4000 = vld [vmem:[%s1 + $0x70] sm:$0xff]
  %v4001 = vld [vmem:[%s1 + $0x78] sm:$0xff]
  %v4002 = vld [vmem:[%s1 + $0x80] sm:$0xff]
  %v4003 = vld [vmem:[%s1 + $0x88] sm:$0xff]
  %v4004 = vld [vmem:[%s1 + $0x90] sm:$0xff]
  %v4005 = vld [vmem:[%s1 + $0x98] sm:$0xff]
  %v4006 = vld [vmem:[%s1 + $0xa0] sm:$0xff]
  %v4007 = vld [vmem:[%s1 + $0xa8] sm:$0xff]
  %v4008 = vld [vmem:[%s1 + $0xb0] sm:$0xff]
  %v4009 = vld [vmem:[%s1 + $0xb8] sm:$0xff]
  %v4010 = vld [vmem:[%s1 + $0xc0] sm:$0xff]
  %v4011 = vld [vmem:[%s1 + $0xc8] sm:$0xff]
  %v4012 = vld [vmem:[%s1 + $0xd0] sm:$0xff]
  %v4013 = vld [vmem:[%s1 + $0xd8] sm:$0xff]
  %v4014 = vld [vmem:[%s1 + $0xe0] sm:$0xff]
  %v4015 = vld [vmem:[%s1 + $0xe8] sm:$0xff]
  %v4016 = vld [vmem:[%s1 + $0xf0] sm:$0xff]
  %v4017 = vld [vmem:[%s1 + $0xf8] sm:$0xff]
  %v4018 = vld [vmem:[%s1 + $0x100] sm:$0xff]
  %v4019 = vld [vmem:[%s1 + $0x108] sm:$0xff]
  %v4020 = vld [vmem:[%s1 + $0x110] sm:$0xff]
  %v4021 = vld [vmem:[%s1 + $0x118] sm:$0xff]
  %v4022 = vld [vmem:[%s1 + $0x120] sm:$0xff]
  %v4023 = vld [vmem:[%s1 + $0x128] sm:$0xff]
  %v4024 = vld [vmem:[%s1 + $0x130] sm:$0xff]
  %v4025 = vld [vmem:[%s1 + $0x138] sm:$0xff]
  %v4026 = vld [vmem:[%s1 + $0x140] sm:$0xff]
  %v4027 = vld [vmem:[%s1 + $0x148] sm:$0xff]
  %v4028 = vld [vmem:[%s1 + $0x150] sm:$0xff]
  %v4029 = vld [vmem:[%s1 + $0x158] sm:$0xff]
  %v4030 = vld [vmem:[%s1 + $0x160] sm:$0xff]
  %v4031 = vld [vmem:[%s1 + $0x168] sm:$0xff]
  %v4032 = vld [vmem:[%s1 + $0x170] sm:$0xff]
  %v4033 = vld [vmem:[%s1 + $0x178] sm:$0xff]
  %v4034 = vld [vmem:[%s1 + $0x180] sm:$0xff]
  %v4035 = vld [vmem:[%s1 + $0x188] sm:$0xff]
  %v4036 = vld [vmem:[%s1 + $0x190] sm:$0xff]
  %v4037 = vld [vmem:[%s1 + $0x198] sm:$0xff]
  %v4038 = vld [vmem:[%s1 + $0x1a0] sm:$0xff]
  %v4039 = vld [vmem:[%s1 + $0x1a8] sm:$0xff]
  %v4040 = vld [vmem:[%s1 + $0x1b0] sm:$0xff]
  %v4041 = vld [vmem:[%s1 + $0x1b8] sm:$0xff]
  %v4042 = vld [vmem:[%s1 + $0x1c0] sm:$0xff]
  %v4043 = vld [vmem:[%s1 + $0x1c8] sm:$0xff]
  %v4044 = vld [vmem:[%s1 + $0x1d0] sm:$0xff]
  %v4045 = vld [vmem:[%s1 + $0x1d8] sm:$0xff]
  %v4046 = vld [vmem:[%s1 + $0x1e0] sm:$0xff]
  %v4047 = vld [vmem:[%s1 + $0x1e8] sm:$0xff]
  %v4048 = vld [vmem:[%s1 + $0x1f0] sm:$0xff]
  %v4049 = vld [vmem:[%s1 + $0x1f8] sm:$0xff]
  %4051 = vset.pattern.permute.xlu0 0
  %4052 = vperm.xlu0 %4051, %v3986
  %v4053 = vpop.permute.xlu0 %4052
  %4056 = vset.pattern.permute.xlu0 0
  %4057 = vperm.xlu0 %4056, %v3987
  %v4058 = vpop.permute.xlu0 %4057
  %4061 = vset.pattern.permute.xlu0 0
  %4062 = vperm.xlu0 %4061, %v3988
  %v4063 = vpop.permute.xlu0 %4062
  %4066 = vset.pattern.permute.xlu0 0
  %4067 = vperm.xlu0 %4066, %v3989
  %v4068 = vpop.permute.xlu0 %4067
  %4071 = vset.pattern.permute.xlu0 0
  %4072 = vperm.xlu0 %4071, %v3990
  %v4073 = vpop.permute.xlu0 %4072
  %4076 = vset.pattern.permute.xlu0 0
  %4077 = vperm.xlu0 %4076, %v3991
  %v4078 = vpop.permute.xlu0 %4077
  %4081 = vset.pattern.permute.xlu0 0
  %4082 = vperm.xlu0 %4081, %v3992
  %v4083 = vpop.permute.xlu0 %4082
  %4086 = vset.pattern.permute.xlu0 0
  %4087 = vperm.xlu0 %4086, %v3993
  %v4088 = vpop.permute.xlu0 %4087
  %4091 = vset.pattern.permute.xlu0 0
  %4092 = vperm.xlu0 %4091, %v3994
  %v4093 = vpop.permute.xlu0 %4092
  %4096 = vset.pattern.permute.xlu0 0
  %4097 = vperm.xlu0 %4096, %v3995
  %v4098 = vpop.permute.xlu0 %4097
  %4101 = vset.pattern.permute.xlu0 0
  %4102 = vperm.xlu0 %4101, %v3996
  %v4103 = vpop.permute.xlu0 %4102
  %4106 = vset.pattern.permute.xlu0 0
  %4107 = vperm.xlu0 %4106, %v3997
  %v4108 = vpop.permute.xlu0 %4107
  %4111 = vset.pattern.permute.xlu0 0
  %4112 = vperm.xlu0 %4111, %v3998
  %v4113 = vpop.permute.xlu0 %4112
  %4116 = vset.pattern.permute.xlu0 0
  %4117 = vperm.xlu0 %4116, %v3999
  %v4118 = vpop.permute.xlu0 %4117
  %4121 = vset.pattern.permute.xlu0 0
  %4122 = vperm.xlu0 %4121, %v4000
  %v4123 = vpop.permute.xlu0 %4122
  %4126 = vset.pattern.permute.xlu0 0
  %4127 = vperm.xlu0 %4126, %v4001
  %v4128 = vpop.permute.xlu0 %4127
  %4131 = vset.pattern.permute.xlu0 0
  %4132 = vperm.xlu0 %4131, %v4002
  %v4133 = vpop.permute.xlu0 %4132
  %4136 = vset.pattern.permute.xlu0 0
  %4137 = vperm.xlu0 %4136, %v4003
  %v4138 = vpop.permute.xlu0 %4137
  %4141 = vset.pattern.permute.xlu0 0
  %4142 = vperm.xlu0 %4141, %v4004
  %v4143 = vpop.permute.xlu0 %4142
  %4146 = vset.pattern.permute.xlu0 0
  %4147 = vperm.xlu0 %4146, %v4005
  %v4148 = vpop.permute.xlu0 %4147
  %4151 = vset.pattern.permute.xlu0 0
  %4152 = vperm.xlu0 %4151, %v4006
  %v4153 = vpop.permute.xlu0 %4152
  %4156 = vset.pattern.permute.xlu0 0
  %4157 = vperm.xlu0 %4156, %v4007
  %v4158 = vpop.permute.xlu0 %4157
  %4161 = vset.pattern.permute.xlu0 0
  %4162 = vperm.xlu0 %4161, %v4008
  %v4163 = vpop.permute.xlu0 %4162
  %4166 = vset.pattern.permute.xlu0 0
  %4167 = vperm.xlu0 %4166, %v4009
  %v4168 = vpop.permute.xlu0 %4167
  %4171 = vset.pattern.permute.xlu0 0
  %4172 = vperm.xlu0 %4171, %v4010
  %v4173 = vpop.permute.xlu0 %4172
  %4176 = vset.pattern.permute.xlu0 0
  %4177 = vperm.xlu0 %4176, %v4011
  %v4178 = vpop.permute.xlu0 %4177
  %4181 = vset.pattern.permute.xlu0 0
  %4182 = vperm.xlu0 %4181, %v4012
  %v4183 = vpop.permute.xlu0 %4182
  %4186 = vset.pattern.permute.xlu0 0
  %4187 = vperm.xlu0 %4186, %v4013
  %v4188 = vpop.permute.xlu0 %4187
  %4191 = vset.pattern.permute.xlu0 0
  %4192 = vperm.xlu0 %4191, %v4014
  %v4193 = vpop.permute.xlu0 %4192
  %4196 = vset.pattern.permute.xlu0 0
  %4197 = vperm.xlu0 %4196, %v4015
  %v4198 = vpop.permute.xlu0 %4197
  %4201 = vset.pattern.permute.xlu0 0
  %4202 = vperm.xlu0 %4201, %v4016
  %v4203 = vpop.permute.xlu0 %4202
  %4206 = vset.pattern.permute.xlu0 0
  %4207 = vperm.xlu0 %4206, %v4017
  %v4208 = vpop.permute.xlu0 %4207
  %4211 = vset.pattern.permute.xlu0 0
  %4212 = vperm.xlu0 %4211, %v4018
  %v4213 = vpop.permute.xlu0 %4212
  %4216 = vset.pattern.permute.xlu0 0
  %4217 = vperm.xlu0 %4216, %v4019
  %v4218 = vpop.permute.xlu0 %4217
  %4221 = vset.pattern.permute.xlu0 0
  %4222 = vperm.xlu0 %4221, %v4020
  %v4223 = vpop.permute.xlu0 %4222
  %4226 = vset.pattern.permute.xlu0 0
  %4227 = vperm.xlu0 %4226, %v4021
  %v4228 = vpop.permute.xlu0 %4227
  %4231 = vset.pattern.permute.xlu0 0
  %4232 = vperm.xlu0 %4231, %v4022
  %v4233 = vpop.permute.xlu0 %4232
  %4236 = vset.pattern.permute.xlu0 0
  %4237 = vperm.xlu0 %4236, %v4023
  %v4238 = vpop.permute.xlu0 %4237
  %4241 = vset.pattern.permute.xlu0 0
  %4242 = vperm.xlu0 %4241, %v4024
  %v4243 = vpop.permute.xlu0 %4242
  %4246 = vset.pattern.permute.xlu0 0
  %4247 = vperm.xlu0 %4246, %v4025
  %v4248 = vpop.permute.xlu0 %4247
  %4251 = vset.pattern.permute.xlu0 0
  %4252 = vperm.xlu0 %4251, %v4026
  %v4253 = vpop.permute.xlu0 %4252
  %4256 = vset.pattern.permute.xlu0 0
  %4257 = vperm.xlu0 %4256, %v4027
  %v4258 = vpop.permute.xlu0 %4257
  %4261 = vset.pattern.permute.xlu0 0
  %4262 = vperm.xlu0 %4261, %v4028
  %v4263 = vpop.permute.xlu0 %4262
  %4266 = vset.pattern.permute.xlu0 0
  %4267 = vperm.xlu0 %4266, %v4029
  %v4268 = vpop.permute.xlu0 %4267
  %4271 = vset.pattern.permute.xlu0 0
  %4272 = vperm.xlu0 %4271, %v4030
  %v4273 = vpop.permute.xlu0 %4272
  %4276 = vset.pattern.permute.xlu0 0
  %4277 = vperm.xlu0 %4276, %v4031
  %v4278 = vpop.permute.xlu0 %4277
  %4281 = vset.pattern.permute.xlu0 0
  %4282 = vperm.xlu0 %4281, %v4032
  %v4283 = vpop.permute.xlu0 %4282
  %4286 = vset.pattern.permute.xlu0 0
  %4287 = vperm.xlu0 %4286, %v4033
  %v4288 = vpop.permute.xlu0 %4287
  %4291 = vset.pattern.permute.xlu0 0
  %4292 = vperm.xlu0 %4291, %v4034
  %v4293 = vpop.permute.xlu0 %4292
  %4296 = vset.pattern.permute.xlu0 0
  %4297 = vperm.xlu0 %4296, %v4035
  %v4298 = vpop.permute.xlu0 %4297
  %4301 = vset.pattern.permute.xlu0 0
  %4302 = vperm.xlu0 %4301, %v4036
  %v4303 = vpop.permute.xlu0 %4302
  %4306 = vset.pattern.permute.xlu0 0
  %4307 = vperm.xlu0 %4306, %v4037
  %v4308 = vpop.permute.xlu0 %4307
  %4311 = vset.pattern.permute.xlu0 0
  %4312 = vperm.xlu0 %4311, %v4038
  %v4313 = vpop.permute.xlu0 %4312
  %4316 = vset.pattern.permute.xlu0 0
  %4317 = vperm.xlu0 %4316, %v4039
  %v4318 = vpop.permute.xlu0 %4317
  %4321 = vset.pattern.permute.xlu0 0
  %4322 = vperm.xlu0 %4321, %v4040
  %v4323 = vpop.permute.xlu0 %4322
  %4326 = vset.pattern.permute.xlu0 0
  %4327 = vperm.xlu0 %4326, %v4041
  %v4328 = vpop.permute.xlu0 %4327
  %4331 = vset.pattern.permute.xlu0 0
  %4332 = vperm.xlu0 %4331, %v4042
  %v4333 = vpop.permute.xlu0 %4332
  %4336 = vset.pattern.permute.xlu0 0
  %4337 = vperm.xlu0 %4336, %v4043
  %v4338 = vpop.permute.xlu0 %4337
  %4341 = vset.pattern.permute.xlu0 0
  %4342 = vperm.xlu0 %4341, %v4044
  %v4343 = vpop.permute.xlu0 %4342
  %4346 = vset.pattern.permute.xlu0 0
  %4347 = vperm.xlu0 %4346, %v4045
  %v4348 = vpop.permute.xlu0 %4347
  %4351 = vset.pattern.permute.xlu0 0
  %4352 = vperm.xlu0 %4351, %v4046
  %v4353 = vpop.permute.xlu0 %4352
  %4356 = vset.pattern.permute.xlu0 0
  %4357 = vperm.xlu0 %4356, %v4047
  %v4358 = vpop.permute.xlu0 %4357
  %4361 = vset.pattern.permute.xlu0 0
  %4362 = vperm.xlu0 %4361, %v4048
  %v4363 = vpop.permute.xlu0 %4362
  %4366 = vset.pattern.permute.xlu0 0
  %4367 = vperm.xlu0 %4366, %v4049
  %v4368 = vpop.permute.xlu0 %4367
  %v4370 = vmul.f32 %v3732, %v4053
  %v4371 = vmul.f32 %v3735, %v4058
  %v4372 = vmul.f32 %v3740, %v4063
  %v4373 = vmul.f32 %v3743, %v4068
  %v4374 = vmul.f32 %v3748, %v4073
  %v4375 = vmul.f32 %v3751, %v4078
  %v4376 = vmul.f32 %v3756, %v4083
  %v4377 = vmul.f32 %v3759, %v4088
  %v4378 = vmul.f32 %v3764, %v4093
  %v4379 = vmul.f32 %v3767, %v4098
  %v4380 = vmul.f32 %v3772, %v4103
  %v4381 = vmul.f32 %v3775, %v4108
  %v4382 = vmul.f32 %v3780, %v4113
  %v4383 = vmul.f32 %v3783, %v4118
  %v4384 = vmul.f32 %v3788, %v4123
  %v4385 = vmul.f32 %v3791, %v4128
  %v4386 = vmul.f32 %v3796, %v4133
  %v4387 = vmul.f32 %v3799, %v4138
  %v4388 = vmul.f32 %v3804, %v4143
  %v4389 = vmul.f32 %v3807, %v4148
  %v4390 = vmul.f32 %v3812, %v4153
  %v4391 = vmul.f32 %v3815, %v4158
  %v4392 = vmul.f32 %v3820, %v4163
  %v4393 = vmul.f32 %v3823, %v4168
  %v4394 = vmul.f32 %v3828, %v4173
  %v4395 = vmul.f32 %v3831, %v4178
  %v4396 = vmul.f32 %v3836, %v4183
  %v4397 = vmul.f32 %v3839, %v4188
  %v4398 = vmul.f32 %v3844, %v4193
  %v4399 = vmul.f32 %v3847, %v4198
  %v4400 = vmul.f32 %v3852, %v4203
  %v4401 = vmul.f32 %v3855, %v4208
  %v4402 = vmul.f32 %v3860, %v4213
  %v4403 = vmul.f32 %v3863, %v4218
  %v4404 = vmul.f32 %v3868, %v4223
  %v4405 = vmul.f32 %v3871, %v4228
  %v4406 = vmul.f32 %v3876, %v4233
  %v4407 = vmul.f32 %v3879, %v4238
  %v4408 = vmul.f32 %v3884, %v4243
  %v4409 = vmul.f32 %v3887, %v4248
  %v4410 = vmul.f32 %v3892, %v4253
  %v4411 = vmul.f32 %v3895, %v4258
  %v4412 = vmul.f32 %v3900, %v4263
  %v4413 = vmul.f32 %v3903, %v4268
  %v4414 = vmul.f32 %v3908, %v4273
  %v4415 = vmul.f32 %v3911, %v4278
  %v4416 = vmul.f32 %v3916, %v4283
  %v4417 = vmul.f32 %v3919, %v4288
  %v4418 = vmul.f32 %v3924, %v4293
  %v4419 = vmul.f32 %v3927, %v4298
  %v4420 = vmul.f32 %v3932, %v4303
  %v4421 = vmul.f32 %v3935, %v4308
  %v4422 = vmul.f32 %v3940, %v4313
  %v4423 = vmul.f32 %v3943, %v4318
  %v4424 = vmul.f32 %v3948, %v4323
  %v4425 = vmul.f32 %v3951, %v4328
  %v4426 = vmul.f32 %v3956, %v4333
  %v4427 = vmul.f32 %v3959, %v4338
  %v4428 = vmul.f32 %v3964, %v4343
  %v4429 = vmul.f32 %v3967, %v4348
  %v4430 = vmul.f32 %v3972, %v4353
  %v4431 = vmul.f32 %v3975, %v4358
  %v4432 = vmul.f32 %v3980, %v4363
  %v4433 = vmul.f32 %v3983, %v4368
  %v4434 = vpack.c.bf16 %v4371, %v4370
  %v4435 = vpack.c.bf16 %v4373, %v4372
  %v4436 = vpack.c.bf16 %v4375, %v4374
  %v4437 = vpack.c.bf16 %v4377, %v4376
  %v4438 = vpack.c.bf16 %v4379, %v4378
  %v4439 = vpack.c.bf16 %v4381, %v4380
  %v4440 = vpack.c.bf16 %v4383, %v4382
  %v4441 = vpack.c.bf16 %v4385, %v4384
  %v4442 = vpack.c.bf16 %v4387, %v4386
  %v4443 = vpack.c.bf16 %v4389, %v4388
  %v4444 = vpack.c.bf16 %v4391, %v4390
  %v4445 = vpack.c.bf16 %v4393, %v4392
  %v4446 = vpack.c.bf16 %v4395, %v4394
  %v4447 = vpack.c.bf16 %v4397, %v4396
  %v4448 = vpack.c.bf16 %v4399, %v4398
  %v4449 = vpack.c.bf16 %v4401, %v4400
  %v4450 = vpack.c.bf16 %v4403, %v4402
  %v4451 = vpack.c.bf16 %v4405, %v4404
  %v4452 = vpack.c.bf16 %v4407, %v4406
  %v4453 = vpack.c.bf16 %v4409, %v4408
  %v4454 = vpack.c.bf16 %v4411, %v4410
  %v4455 = vpack.c.bf16 %v4413, %v4412
  %v4456 = vpack.c.bf16 %v4415, %v4414
  %v4457 = vpack.c.bf16 %v4417, %v4416
  %v4458 = vpack.c.bf16 %v4419, %v4418
  %v4459 = vpack.c.bf16 %v4421, %v4420
  %v4460 = vpack.c.bf16 %v4423, %v4422
  %v4461 = vpack.c.bf16 %v4425, %v4424
  %v4462 = vpack.c.bf16 %v4427, %v4426
  %v4463 = vpack.c.bf16 %v4429, %v4428
  %v4464 = vpack.c.bf16 %v4431, %v4430
  %v4465 = vpack.c.bf16 %v4433, %v4432
  %v4498 = vunpack.c.l.b16 %v4434
  %v4499 = vunpack.c.h.b16 %v4434
  %v4500 = vunpack.c.l.b16 %v4435
  %v4501 = vunpack.c.h.b16 %v4435
  %v4502 = vunpack.c.l.b16 %v4436
  %v4503 = vunpack.c.h.b16 %v4436
  %v4504 = vunpack.c.l.b16 %v4437
  %v4505 = vunpack.c.h.b16 %v4437
  %v4506 = vunpack.c.l.b16 %v4438
  %v4507 = vunpack.c.h.b16 %v4438
  %v4508 = vunpack.c.l.b16 %v4439
  %v4509 = vunpack.c.h.b16 %v4439
  %v4510 = vunpack.c.l.b16 %v4440
  %v4511 = vunpack.c.h.b16 %v4440
  %v4512 = vunpack.c.l.b16 %v4441
  %v4513 = vunpack.c.h.b16 %v4441
  %v4514 = vunpack.c.l.b16 %v4442
  %v4515 = vunpack.c.h.b16 %v4442
  %v4516 = vunpack.c.l.b16 %v4443
  %v4517 = vunpack.c.h.b16 %v4443
  %v4518 = vunpack.c.l.b16 %v4444
  %v4519 = vunpack.c.h.b16 %v4444
  %v4520 = vunpack.c.l.b16 %v4445
  %v4521 = vunpack.c.h.b16 %v4445
  %v4522 = vunpack.c.l.b16 %v4446
  %v4523 = vunpack.c.h.b16 %v4446
  %v4524 = vunpack.c.l.b16 %v4447
  %v4525 = vunpack.c.h.b16 %v4447
  %v4526 = vunpack.c.l.b16 %v4448
  %v4527 = vunpack.c.h.b16 %v4448
  %v4528 = vunpack.c.l.b16 %v4449
  %v4529 = vunpack.c.h.b16 %v4449
  %v4530 = vunpack.c.l.b16 %v4450
  %v4531 = vunpack.c.h.b16 %v4450
  %v4532 = vunpack.c.l.b16 %v4451
  %v4533 = vunpack.c.h.b16 %v4451
  %v4534 = vunpack.c.l.b16 %v4452
  %v4535 = vunpack.c.h.b16 %v4452
  %v4536 = vunpack.c.l.b16 %v4453
  %v4537 = vunpack.c.h.b16 %v4453
  %v4538 = vunpack.c.l.b16 %v4454
  %v4539 = vunpack.c.h.b16 %v4454
  %v4540 = vunpack.c.l.b16 %v4455
  %v4541 = vunpack.c.h.b16 %v4455
  %v4542 = vunpack.c.l.b16 %v4456
  %v4543 = vunpack.c.h.b16 %v4456
  %v4544 = vunpack.c.l.b16 %v4457
  %v4545 = vunpack.c.h.b16 %v4457
  %v4546 = vunpack.c.l.b16 %v4458
  %v4547 = vunpack.c.h.b16 %v4458
  %v4548 = vunpack.c.l.b16 %v4459
  %v4549 = vunpack.c.h.b16 %v4459
  %v4550 = vunpack.c.l.b16 %v4460
  %v4551 = vunpack.c.h.b16 %v4460
  %v4552 = vunpack.c.l.b16 %v4461
  %v4553 = vunpack.c.h.b16 %v4461
  %v4554 = vunpack.c.l.b16 %v4462
  %v4555 = vunpack.c.h.b16 %v4462
  %v4556 = vunpack.c.l.b16 %v4463
  %v4557 = vunpack.c.h.b16 %v4463
  %v4558 = vunpack.c.l.b16 %v4464
  %v4559 = vunpack.c.h.b16 %v4464
  %v4560 = vunpack.c.l.b16 %v4465
  %v4561 = vunpack.c.h.b16 %v4465
  %v4562 = vpack.c.b16 %v4498, %v4498
  %v4563 = vpack.c.b16 %v4499, %v4499
  %v4564 = vpack.c.b16 %v4500, %v4500
  %v4565 = vpack.c.b16 %v4501, %v4501
  %v4566 = vpack.c.b16 %v4502, %v4502
  %v4567 = vpack.c.b16 %v4503, %v4503
  %v4568 = vpack.c.b16 %v4504, %v4504
  %v4569 = vpack.c.b16 %v4505, %v4505
  %v4570 = vpack.c.b16 %v4506, %v4506
  %v4571 = vpack.c.b16 %v4507, %v4507
  %v4572 = vpack.c.b16 %v4508, %v4508
  %v4573 = vpack.c.b16 %v4509, %v4509
  %v4574 = vpack.c.b16 %v4510, %v4510
  %v4575 = vpack.c.b16 %v4511, %v4511
  %v4576 = vpack.c.b16 %v4512, %v4512
  %v4577 = vpack.c.b16 %v4513, %v4513
  %v4578 = vpack.c.b16 %v4514, %v4514
  %v4579 = vpack.c.b16 %v4515, %v4515
  %v4580 = vpack.c.b16 %v4516, %v4516
  %v4581 = vpack.c.b16 %v4517, %v4517
  %v4582 = vpack.c.b16 %v4518, %v4518
  %v4583 = vpack.c.b16 %v4519, %v4519
  %v4584 = vpack.c.b16 %v4520, %v4520
  %v4585 = vpack.c.b16 %v4521, %v4521
  %v4586 = vpack.c.b16 %v4522, %v4522
  %v4587 = vpack.c.b16 %v4523, %v4523
  %v4588 = vpack.c.b16 %v4524, %v4524
  %v4589 = vpack.c.b16 %v4525, %v4525
  %v4590 = vpack.c.b16 %v4526, %v4526
  %v4591 = vpack.c.b16 %v4527, %v4527
  %v4592 = vpack.c.b16 %v4528, %v4528
  %v4593 = vpack.c.b16 %v4529, %v4529
  %v4594 = vpack.c.b16 %v4530, %v4530
  %v4595 = vpack.c.b16 %v4531, %v4531
  %v4596 = vpack.c.b16 %v4532, %v4532
  %v4597 = vpack.c.b16 %v4533, %v4533
  %v4598 = vpack.c.b16 %v4534, %v4534
  %v4599 = vpack.c.b16 %v4535, %v4535
  %v4600 = vpack.c.b16 %v4536, %v4536
  %v4601 = vpack.c.b16 %v4537, %v4537
  %v4602 = vpack.c.b16 %v4538, %v4538
  %v4603 = vpack.c.b16 %v4539, %v4539
  %v4604 = vpack.c.b16 %v4540, %v4540
  %v4605 = vpack.c.b16 %v4541, %v4541
  %v4606 = vpack.c.b16 %v4542, %v4542
  %v4607 = vpack.c.b16 %v4543, %v4543
  %v4608 = vpack.c.b16 %v4544, %v4544
  %v4609 = vpack.c.b16 %v4545, %v4545
  %v4610 = vpack.c.b16 %v4546, %v4546
  %v4611 = vpack.c.b16 %v4547, %v4547
  %v4612 = vpack.c.b16 %v4548, %v4548
  %v4613 = vpack.c.b16 %v4549, %v4549
  %v4614 = vpack.c.b16 %v4550, %v4550
  %v4615 = vpack.c.b16 %v4551, %v4551
  %v4616 = vpack.c.b16 %v4552, %v4552
  %v4617 = vpack.c.b16 %v4553, %v4553
  %v4618 = vpack.c.b16 %v4554, %v4554
  %v4619 = vpack.c.b16 %v4555, %v4555
  %v4620 = vpack.c.b16 %v4556, %v4556
  %v4621 = vpack.c.b16 %v4557, %v4557
  %v4622 = vpack.c.b16 %v4558, %v4558
  %v4623 = vpack.c.b16 %v4559, %v4559
  %v4624 = vpack.c.b16 %v4560, %v4560
  %v4625 = vpack.c.b16 %v4561, %v4561
  %4690 = vst [vmem:[%s3] sm:$0xf] %v4562
  %4691 = vst [vmem:[%s3 + $0x4] sm:$0xf] %v4563
  %4692 = vst [vmem:[%s3 + $0x8] sm:$0xf] %v4564
  %4693 = vst [vmem:[%s3 + $0xc] sm:$0xf] %v4565
  %4694 = vst [vmem:[%s3 + $0x10] sm:$0xf] %v4566
  %4695 = vst [vmem:[%s3 + $0x14] sm:$0xf] %v4567
  %4696 = vst [vmem:[%s3 + $0x18] sm:$0xf] %v4568
  %4697 = vst [vmem:[%s3 + $0x1c] sm:$0xf] %v4569
  %4698 = vst [vmem:[%s3 + $0x20] sm:$0xf] %v4570
  %4699 = vst [vmem:[%s3 + $0x24] sm:$0xf] %v4571
  %4700 = vst [vmem:[%s3 + $0x28] sm:$0xf] %v4572
  %4701 = vst [vmem:[%s3 + $0x2c] sm:$0xf] %v4573
  %4702 = vst [vmem:[%s3 + $0x30] sm:$0xf] %v4574
  %4703 = vst [vmem:[%s3 + $0x34] sm:$0xf] %v4575
  %4704 = vst [vmem:[%s3 + $0x38] sm:$0xf] %v4576
  %4705 = vst [vmem:[%s3 + $0x3c] sm:$0xf] %v4577
  %4706 = vst [vmem:[%s3 + $0x40] sm:$0xf] %v4578
  %4707 = vst [vmem:[%s3 + $0x44] sm:$0xf] %v4579
  %4708 = vst [vmem:[%s3 + $0x48] sm:$0xf] %v4580
  %4709 = vst [vmem:[%s3 + $0x4c] sm:$0xf] %v4581
  %4710 = vst [vmem:[%s3 + $0x50] sm:$0xf] %v4582
  %4711 = vst [vmem:[%s3 + $0x54] sm:$0xf] %v4583
  %4712 = vst [vmem:[%s3 + $0x58] sm:$0xf] %v4584
  %4713 = vst [vmem:[%s3 + $0x5c] sm:$0xf] %v4585
  %4714 = vst [vmem:[%s3 + $0x60] sm:$0xf] %v4586
  %4715 = vst [vmem:[%s3 + $0x64] sm:$0xf] %v4587
  %4716 = vst [vmem:[%s3 + $0x68] sm:$0xf] %v4588
  %4717 = vst [vmem:[%s3 + $0x6c] sm:$0xf] %v4589
  %4718 = vst [vmem:[%s3 + $0x70] sm:$0xf] %v4590
  %4719 = vst [vmem:[%s3 + $0x74] sm:$0xf] %v4591
  %4720 = vst [vmem:[%s3 + $0x78] sm:$0xf] %v4592
  %4721 = vst [vmem:[%s3 + $0x7c] sm:$0xf] %v4593
  %4722 = vst [vmem:[%s3 + $0x80] sm:$0xf] %v4594
  %4723 = vst [vmem:[%s3 + $0x84] sm:$0xf] %v4595
  %4724 = vst [vmem:[%s3 + $0x88] sm:$0xf] %v4596
  %4725 = vst [vmem:[%s3 + $0x8c] sm:$0xf] %v4597
  %4726 = vst [vmem:[%s3 + $0x90] sm:$0xf] %v4598
  %4727 = vst [vmem:[%s3 + $0x94] sm:$0xf] %v4599
  %4728 = vst [vmem:[%s3 + $0x98] sm:$0xf] %v4600
  %4729 = vst [vmem:[%s3 + $0x9c] sm:$0xf] %v4601
  %4730 = vst [vmem:[%s3 + $0xa0] sm:$0xf] %v4602
  %4731 = vst [vmem:[%s3 + $0xa4] sm:$0xf] %v4603
  %4732 = vst [vmem:[%s3 + $0xa8] sm:$0xf] %v4604
  %4733 = vst [vmem:[%s3 + $0xac] sm:$0xf] %v4605
  %4734 = vst [vmem:[%s3 + $0xb0] sm:$0xf] %v4606
  %4735 = vst [vmem:[%s3 + $0xb4] sm:$0xf] %v4607
  %4736 = vst [vmem:[%s3 + $0xb8] sm:$0xf] %v4608
  %4737 = vst [vmem:[%s3 + $0xbc] sm:$0xf] %v4609
  %4738 = vst [vmem:[%s3 + $0xc0] sm:$0xf] %v4610
  %4739 = vst [vmem:[%s3 + $0xc4] sm:$0xf] %v4611
  %4740 = vst [vmem:[%s3 + $0xc8] sm:$0xf] %v4612
  %4741 = vst [vmem:[%s3 + $0xcc] sm:$0xf] %v4613
  %4742 = vst [vmem:[%s3 + $0xd0] sm:$0xf] %v4614
  %4743 = vst [vmem:[%s3 + $0xd4] sm:$0xf] %v4615
  %4744 = vst [vmem:[%s3 + $0xd8] sm:$0xf] %v4616
  %4745 = vst [vmem:[%s3 + $0xdc] sm:$0xf] %v4617
  %4746 = vst [vmem:[%s3 + $0xe0] sm:$0xf] %v4618
  %4747 = vst [vmem:[%s3 + $0xe4] sm:$0xf] %v4619
  %4748 = vst [vmem:[%s3 + $0xe8] sm:$0xf] %v4620
  %4749 = vst [vmem:[%s3 + $0xec] sm:$0xf] %v4621
  %4750 = vst [vmem:[%s3 + $0xf0] sm:$0xf] %v4622
  %4751 = vst [vmem:[%s3 + $0xf4] sm:$0xf] %v4623
  %4752 = vst [vmem:[%s3 + $0xf8] sm:$0xf] %v4624
  %4753 = vst [vmem:[%s3 + $0xfc] sm:$0xf] %v4625
  // Predicated region
  $region14: #{pretrained_embedding_forward.1} parent=0 // pred_check
    _
  $region15: #{pretrained_embedding_forward.1} parent=0 // pred_check_branch
    %4755 = sbr.rel (0) target = $region17
  $region16: #{pretrained_embedding_forward.1} parent=0 // pred_region
    _
  $region17: #{pretrained_embedding_forward.1} parent=0 // pred_fallthru
    _
  // Predicated region
  $region18: #{pretrained_embedding_forward.1} parent=0 // pred_check
    _
  $region19: #{pretrained_embedding_forward.1} parent=0 // pred_check_branch
    %4757 = sbr.rel (0) target = $region21
  $region20: #{pretrained_embedding_forward.1} parent=0 // pred_region
    _
  $region21: #{pretrained_embedding_forward.1} parent=0 // pred_fallthru
    _

</llo_original>
